<compile_context>
chip_gen: v7x
topology: tpu7x:2x2x1
jax: 0.10.0
libtpu: 0.0.40
codegen_flags: <defaults>
</compile_context>

<pallas_src>
import functools

import jax
import jax.numpy as jnp
from jax import lax
from jax.experimental import pallas as pl
from jax.experimental.pallas import tpu as pltpu


def _round_up(x, m):
    return ((x + m - 1) // m) * m


# ---------------------------------------------------------------------------
# Fused kernel: per block of TM windows
#   refs = (windows (TM,K,C), windows_T (TM,C,K), w0, b0, w1, b1, ..., out (TM,K,D))
# ---------------------------------------------------------------------------
def _mini_embedding_kernel(*refs, relu_flags, S):
    win_ref, win_t_ref = refs[0], refs[1]
    out_ref = refs[-1]
    wb_refs = refs[2:-1]
    n_layers = len(wb_refs) // 2

    w = win_ref[...].astype(jnp.float32)       # (TM, K, C): points in sublanes, coords in lanes
    wt = win_t_ref[...].astype(jnp.float32)    # (TM, C, K): coords in sublanes, points in lanes
    TM, K, C = w.shape
    P = TM * K

    # ---- pairwise squared distances, batched over the TM windows (pure VPU) ----
    sq_col = jnp.sum(w * w, axis=-1, keepdims=True)     # (TM, K, 1)  ||p_i||^2
    sq_row = jnp.sum(wt * wt, axis=1, keepdims=True)    # (TM, 1, K)  ||p_j||^2
    gram = w[:, :, 0:1] * wt[:, 0:1, :]                 # (TM, K, K)  <p_i, p_j>
    for c in range(1, C):
        gram = gram + w[:, :, c:c + 1] * wt[:, c:c + 1, :]
    d = sq_col + sq_row - 2.0 * gram                    # (TM, K, K)

    # ---- in-kernel kNN: S masked-argmin passes + masked-sum gather ----
    jidx = lax.broadcasted_iota(jnp.int32, (TM, K, K), 2)
    BIG = jnp.float32(1e30)
    rel = []                                            # S tensors of (P, C) relative coords
    for _ in range(S):
        dmin = jnp.min(d, axis=-1, keepdims=True)       # (TM, K, 1)
        # lowest index among the minima (matches lax.top_k tie-breaking)
        jmin = jnp.min(jnp.where(d <= dmin, jidx, K), axis=-1, keepdims=True)
        onehot = (jidx == jmin).astype(jnp.float32)     # (TM, K, K)
        # gather the selected neighbour, one coordinate at a time (lane reduction)
        g = [jnp.sum(onehot * wt[:, c:c + 1, :], axis=-1, keepdims=True) for c in range(C)]
        g = jnp.concatenate(g, axis=-1)                 # (TM, K, C)
        rel.append((g - w).reshape(P, C))               # relative coords, leading-collapse only
        d = jnp.where(onehot > 0.0, BIG, d)             # mask selected column for next pass

    # ---- n_scale_batch: scale each (point, S-neighbourhood) group by its max L2 norm ----
    # TODO(synk): op.n_scale_batch semantics assumed: per-group max-L2-norm scaling (eps 1e-8).
    max_sq = functools.reduce(
        jnp.maximum, [jnp.sum(r * r, axis=-1, keepdims=True) for r in rel])   # (P, 1)
    inv = lax.rsqrt(jnp.maximum(max_sq, jnp.float32(1e-16)))  # one rsqrt per group (EUP slot)

    # ---- GraphConv: per-point MLP (Linear [+ReLU]) then max over the S neighbours ----
    feats = None
    for r in rel:
        h = r * inv                                     # (P, C)
        for li in range(n_layers):
            wgt = wb_refs[2 * li][...]                  # (Cin, Cout)
            b = wb_refs[2 * li + 1][...]                # (1,  Cout)
            h = jnp.dot(h, wgt, preferred_element_type=jnp.float32) + b
            if relu_flags[li]:
                h = jnp.maximum(h, 0.0)
        feats = h if feats is None else jnp.maximum(feats, h)   # (P, D)

    out_ref[...] = feats.reshape(TM, K, feats.shape[-1]).astype(out_ref.dtype)


# ---------------------------------------------------------------------------
# Wrapper
# ---------------------------------------------------------------------------
def mini_embedding_forward(windows, params, relu_flags, local_emb_size, *, block_m=256):
    """windows: (M, K, 3) -> features (M, K, D)."""
    M, K, C = windows.shape
    S = int(local_emb_size)
    if S > K:
        raise ValueError("local_emb_size must be <= number of points per window")
    D = params[-1][0].shape[-1]

    # Blocks of windows; pad M to a multiple of the (8-aligned) block size.
    tm = min(block_m, _round_up(M, 8))
    Mp = _round_up(M, tm)
    w_in = windows.astype(jnp.float32)
    if Mp != M:
        w_in = jnp.pad(w_in, ((0, Mp - M), (0, 0), (0, 0)))
    # Coordinate-major copy so the kernel never needs sublane<->lane relayouts.
    w_t = jnp.swapaxes(w_in, 1, 2)                      # (Mp, C, K)

    flat_wb = []
    in_specs = [
        pl.BlockSpec((tm, K, C), lambda m: (m, 0, 0)),
        pl.BlockSpec((tm, C, K), lambda m: (m, 0, 0)),
    ]
    for (wgt, b) in params:
        flat_wb += [wgt, b]
        # Constant block index -> the pipeline keeps these tiny weights resident
        # across grid steps instead of re-DMAing them.
        in_specs.append(pl.BlockSpec(wgt.shape, lambda m: (0, 0)))
        in_specs.append(pl.BlockSpec(b.shape, lambda m: (0, 0)))

    kernel = functools.partial(
        _mini_embedding_kernel,
        relu_flags=tuple(bool(r) for r in relu_flags),
        S=S,
    )
    out = pl.pallas_call(
        kernel,
        out_shape=jax.ShapeDtypeStruct((Mp, K, D), jnp.float32),
        grid=(Mp // tm,),
        in_specs=in_specs,
        out_specs=pl.BlockSpec((tm, K, D), lambda m: (m, 0, 0)),
        compiler_params=pltpu.CompilerParams(
            dimension_semantics=("parallel",),          # shards windows across v7x's 2 TCs
            vmem_limit_bytes=32 * 1024 * 1024,          # explicit; safe on v5e/v6e/v7x
        ),
    )(w_in, w_t, *flat_wb)
    return out[:M]


# ---------------------------------------------------------------------------
# Pure-JAX reference (same assumed n_scale_batch semantics) for validation
# ---------------------------------------------------------------------------
def mini_embedding_reference(windows, params, relu_flags, local_emb_size):
    M, K, C = windows.shape
    S = int(local_emb_size)
    diff = windows[:, :, None, :] - windows[:, None, :, :]
    d = jnp.sum(diff * diff, axis=-1)                   # (M, K, K)
    _, idx = lax.top_k(-d, S)                           # (M, K, S) nearest-first
    grouped = jax.vmap(lambda pts, ii: pts[ii])(windows, idx)   # (M, K, S, 3)
    rel = grouped - windows[:, :, None, :]
    x = rel.reshape(M * K, S, C)
    scale = jnp.max(jnp.sqrt(jnp.sum(x * x, axis=-1, keepdims=True)), axis=1, keepdims=True)
    x = x / jnp.maximum(scale, 1e-8)
    h = x
    for (wgt, b), r in zip(params, relu_flags):
        h = jnp.dot(h, wgt) + b
        if r:
            h = jnp.maximum(h, 0.0)
    feats = jnp.max(h, axis=1)                          # (M*K, D)
    return feats.reshape(M, K, -1)


# ---------------------------------------------------------------------------
if __name__ == "__main__":
    key = jax.random.PRNGKey(0)

    # MiniEmbedding config: in_channel=3, local_emb_size=4, mlps=[16, 32], relu=[True, False]
    M, K, C = 4, 8, 3
    local_emb_size = 4
    mlps = [16, 32]
    relu = [True, False]

    # GraphConv.__init__ does mlps.insert(0, in_channel) -> layer dims [3, 16, 32]
    dims = [C] + mlps
    params = []
    for i in range(len(dims) - 1):
        key, kw, kb = jax.random.split(key, 3)
        bound = 1.0 / float(dims[i]) ** 0.5
        # stored as (in, out) == torch Linear weight transposed; y = x @ W + b
        wgt = jax.random.uniform(kw, (dims[i], dims[i + 1]), jnp.float32, -bound, bound)
        b = jax.random.uniform(kb, (1, dims[i + 1]), jnp.float32, -bound, bound)
        params.append((wgt, b))

    key, kx = jax.random.split(key)
    windows = jax.random.normal(kx, (M, K, C), jnp.float32)

    out = mini_embedding_forward(windows, params, tuple(relu), local_emb_size)
    out = jax.block_until_ready(out)

    assert out.shape == (M, K, mlps[-1]), out.shape
    assert bool(jnp.all(jnp.isfinite(out)))

    ref = mini_embedding_reference(windows, params, tuple(relu), local_emb_size)
    assert jnp.allclose(out, ref, atol=2e-3, rtol=2e-3), float(jnp.max(jnp.abs(out - ref)))

    print("KERNEL_OK")
</pallas_src>

<mosaic_0001>
module attributes {stable_mosaic.version = 11 : i64} {
  func.func @_mini_embedding_kernel(%arg0: i32, %arg1: memref<8x8x3xf32, #tpu.memory_space<vmem>>, %arg2: memref<8x3x8xf32, #tpu.memory_space<vmem>>, %arg3: memref<3x16xf32, #tpu.memory_space<vmem>>, %arg4: memref<1x16xf32, #tpu.memory_space<vmem>>, %arg5: memref<16x32xf32, #tpu.memory_space<vmem>>, %arg6: memref<1x32xf32, #tpu.memory_space<vmem>>, %arg7: memref<8x8x32xf32, #tpu.memory_space<vmem>>) attributes {dimension_semantics = [#tpu.dimension_semantics<parallel>], iteration_bounds = array<i64: 1>, scalar_prefetch = 0 : i64, scratch_operands = 0 : i64, tpu.core_type = #tpu.core_type<tc>, window_params = [{transform_indices = @transform_0, window_bounds = array<i64: 8, 8, 3>}, {transform_indices = @transform_1, window_bounds = array<i64: 8, 3, 8>}, {pipeline_mode = #tpu.pipeline_mode<synchronous>, transform_indices = @transform_2, window_bounds = array<i64: 3, 16>}, {pipeline_mode = #tpu.pipeline_mode<synchronous>, transform_indices = @transform_3, window_bounds = array<i64: 1, 16>}, {pipeline_mode = #tpu.pipeline_mode<synchronous>, transform_indices = @transform_4, window_bounds = array<i64: 16, 32>}, {pipeline_mode = #tpu.pipeline_mode<synchronous>, transform_indices = @transform_5, window_bounds = array<i64: 1, 32>}, {transform_indices = @transform_6, window_bounds = array<i64: 8, 8, 32>}]} {
    %c0 = arith.constant 0 : index
    %c0_0 = arith.constant 0 : index
    %c0_1 = arith.constant 0 : index
    %0 = vector.load %arg1[%c0, %c0_0, %c0_1] : memref<8x8x3xf32, #tpu.memory_space<vmem>>, vector<8x8x3xf32>
    %c0_2 = arith.constant 0 : index
    %c0_3 = arith.constant 0 : index
    %c0_4 = arith.constant 0 : index
    %1 = vector.load %arg2[%c0_2, %c0_3, %c0_4] : memref<8x3x8xf32, #tpu.memory_space<vmem>>, vector<8x3x8xf32>
    %2 = arith.mulf %0, %0 : vector<8x8x3xf32>
    %cst = arith.constant dense<0.000000e+00> : vector<8x8xf32>
    %3 = vector.multi_reduction <add>, %2, %cst [2] : vector<8x8x3xf32> to vector<8x8xf32>
    %4 = vector.shape_cast %3 : vector<8x8xf32> to vector<8x8x1xf32>
    %5 = arith.mulf %1, %1 : vector<8x3x8xf32>
    %cst_5 = arith.constant dense<0.000000e+00> : vector<8x8xf32>
    %6 = vector.multi_reduction <add>, %5, %cst_5 [1] : vector<8x3x8xf32> to vector<8x8xf32>
    %7 = vector.shape_cast %6 : vector<8x8xf32> to vector<8x1x8xf32>
    %8 = vector.extract_strided_slice %0 {offsets = [0, 0, 0], sizes = [8, 8, 1], strides = [1, 1, 1]} : vector<8x8x3xf32> to vector<8x8x1xf32>
    %9 = vector.extract_strided_slice %1 {offsets = [0, 0, 0], sizes = [8, 1, 8], strides = [1, 1, 1]} : vector<8x3x8xf32> to vector<8x1x8xf32>
    %10 = vector.broadcast %8 : vector<8x8x1xf32> to vector<8x8x8xf32>
    %11 = vector.broadcast %9 : vector<8x1x8xf32> to vector<8x8x8xf32>
    %12 = arith.mulf %10, %11 : vector<8x8x8xf32>
    %13 = vector.extract_strided_slice %0 {offsets = [0, 0, 1], sizes = [8, 8, 1], strides = [1, 1, 1]} : vector<8x8x3xf32> to vector<8x8x1xf32>
    %14 = vector.extract_strided_slice %1 {offsets = [0, 1, 0], sizes = [8, 1, 8], strides = [1, 1, 1]} : vector<8x3x8xf32> to vector<8x1x8xf32>
    %15 = vector.broadcast %13 : vector<8x8x1xf32> to vector<8x8x8xf32>
    %16 = vector.broadcast %14 : vector<8x1x8xf32> to vector<8x8x8xf32>
    %17 = arith.mulf %15, %16 : vector<8x8x8xf32>
    %18 = arith.addf %12, %17 : vector<8x8x8xf32>
    %19 = vector.extract_strided_slice %0 {offsets = [0, 0, 2], sizes = [8, 8, 1], strides = [1, 1, 1]} : vector<8x8x3xf32> to vector<8x8x1xf32>
    %20 = vector.extract_strided_slice %1 {offsets = [0, 2, 0], sizes = [8, 1, 8], strides = [1, 1, 1]} : vector<8x3x8xf32> to vector<8x1x8xf32>
    %21 = vector.broadcast %19 : vector<8x8x1xf32> to vector<8x8x8xf32>
    %22 = vector.broadcast %20 : vector<8x1x8xf32> to vector<8x8x8xf32>
    %23 = arith.mulf %21, %22 : vector<8x8x8xf32>
    %24 = arith.addf %18, %23 : vector<8x8x8xf32>
    %25 = vector.broadcast %4 : vector<8x8x1xf32> to vector<8x8x8xf32>
    %26 = vector.broadcast %7 : vector<8x1x8xf32> to vector<8x8x8xf32>
    %27 = arith.addf %25, %26 : vector<8x8x8xf32>
    %cst_6 = arith.constant 2.000000e+00 : f32
    %28 = vector.broadcast %cst_6 : f32 to vector<8x8x8xf32>
    %29 = arith.mulf %28, %24 : vector<8x8x8xf32>
    %30 = arith.subf %27, %29 : vector<8x8x8xf32>
    %31 = tpu.iota {dimensions = array<i32: 2>} : vector<8x8x8xi32>
    %cst_7 = arith.constant dense<0x7F800000> : vector<8x8xf32>
    %32 = vector.multi_reduction <minimumf>, %30, %cst_7 [2] : vector<8x8x8xf32> to vector<8x8xf32>
    %33 = vector.shape_cast %32 : vector<8x8xf32> to vector<8x8x1xf32>
    %34 = vector.broadcast %33 : vector<8x8x1xf32> to vector<8x8x8xf32>
    %35 = arith.cmpf ole, %30, %34 : vector<8x8x8xf32>
    %c8_i32 = arith.constant 8 : i32
    %36 = vector.broadcast %c8_i32 : i32 to vector<8x8x8xi32>
    %37 = arith.select %35, %31, %36 : vector<8x8x8xi1>, vector<8x8x8xi32>
    %cst_8 = arith.constant dense<2147483647> : vector<8x8xi32>
    %38 = vector.multi_reduction <minsi>, %37, %cst_8 [2] : vector<8x8x8xi32> to vector<8x8xi32>
    %39 = vector.shape_cast %38 : vector<8x8xi32> to vector<8x8x1xi32>
    %40 = vector.broadcast %39 : vector<8x8x1xi32> to vector<8x8x8xi32>
    %41 = arith.cmpi eq, %31, %40 : vector<8x8x8xi32>
    %42 = arith.extui %41 : vector<8x8x8xi1> to vector<8x8x8xi32>
    %43 = arith.sitofp %42 : vector<8x8x8xi32> to vector<8x8x8xf32>
    %44 = vector.extract_strided_slice %1 {offsets = [0, 0, 0], sizes = [8, 1, 8], strides = [1, 1, 1]} : vector<8x3x8xf32> to vector<8x1x8xf32>
    %45 = vector.broadcast %44 : vector<8x1x8xf32> to vector<8x8x8xf32>
    %46 = arith.mulf %43, %45 : vector<8x8x8xf32>
    %cst_9 = arith.constant dense<0.000000e+00> : vector<8x8xf32>
    %47 = vector.multi_reduction <add>, %46, %cst_9 [2] : vector<8x8x8xf32> to vector<8x8xf32>
    %48 = vector.shape_cast %47 : vector<8x8xf32> to vector<8x8x1xf32>
    %49 = vector.extract_strided_slice %1 {offsets = [0, 1, 0], sizes = [8, 1, 8], strides = [1, 1, 1]} : vector<8x3x8xf32> to vector<8x1x8xf32>
    %50 = vector.broadcast %49 : vector<8x1x8xf32> to vector<8x8x8xf32>
    %51 = arith.mulf %43, %50 : vector<8x8x8xf32>
    %cst_10 = arith.constant dense<0.000000e+00> : vector<8x8xf32>
    %52 = vector.multi_reduction <add>, %51, %cst_10 [2] : vector<8x8x8xf32> to vector<8x8xf32>
    %53 = vector.shape_cast %52 : vector<8x8xf32> to vector<8x8x1xf32>
    %54 = vector.extract_strided_slice %1 {offsets = [0, 2, 0], sizes = [8, 1, 8], strides = [1, 1, 1]} : vector<8x3x8xf32> to vector<8x1x8xf32>
    %55 = vector.broadcast %54 : vector<8x1x8xf32> to vector<8x8x8xf32>
    %56 = arith.mulf %43, %55 : vector<8x8x8xf32>
    %cst_11 = arith.constant dense<0.000000e+00> : vector<8x8xf32>
    %57 = vector.multi_reduction <add>, %56, %cst_11 [2] : vector<8x8x8xf32> to vector<8x8xf32>
    %58 = vector.shape_cast %57 : vector<8x8xf32> to vector<8x8x1xf32>
    %59 = tpu.concatenate %48, %53, %58 in 2 : vector<8x8x1xf32>, vector<8x8x1xf32>, vector<8x8x1xf32> -> vector<8x8x3xf32>
    %60 = arith.subf %59, %0 : vector<8x8x3xf32>
    %61 = vector.shape_cast %60 : vector<8x8x3xf32> to vector<64x3xf32>
    %cst_12 = arith.constant 0.000000e+00 : f32
    %62 = vector.broadcast %cst_12 : f32 to vector<8x8x8xf32>
    %63 = arith.cmpf ogt, %43, %62 : vector<8x8x8xf32>
    %cst_13 = arith.constant 1.000000e+30 : f32
    %64 = vector.broadcast %cst_13 : f32 to vector<8x8x8xf32>
    %65 = arith.select %63, %64, %30 : vector<8x8x8xi1>, vector<8x8x8xf32>
    %cst_14 = arith.constant dense<0x7F800000> : vector<8x8xf32>
    %66 = vector.multi_reduction <minimumf>, %65, %cst_14 [2] : vector<8x8x8xf32> to vector<8x8xf32>
    %67 = vector.shape_cast %66 : vector<8x8xf32> to vector<8x8x1xf32>
    %68 = vector.broadcast %67 : vector<8x8x1xf32> to vector<8x8x8xf32>
    %69 = arith.cmpf ole, %65, %68 : vector<8x8x8xf32>
    %c8_i32_15 = arith.constant 8 : i32
    %70 = vector.broadcast %c8_i32_15 : i32 to vector<8x8x8xi32>
    %71 = arith.select %69, %31, %70 : vector<8x8x8xi1>, vector<8x8x8xi32>
    %cst_16 = arith.constant dense<2147483647> : vector<8x8xi32>
    %72 = vector.multi_reduction <minsi>, %71, %cst_16 [2] : vector<8x8x8xi32> to vector<8x8xi32>
    %73 = vector.shape_cast %72 : vector<8x8xi32> to vector<8x8x1xi32>
    %74 = vector.broadcast %73 : vector<8x8x1xi32> to vector<8x8x8xi32>
    %75 = arith.cmpi eq, %31, %74 : vector<8x8x8xi32>
    %76 = arith.extui %75 : vector<8x8x8xi1> to vector<8x8x8xi32>
    %77 = arith.sitofp %76 : vector<8x8x8xi32> to vector<8x8x8xf32>
    %78 = vector.extract_strided_slice %1 {offsets = [0, 0, 0], sizes = [8, 1, 8], strides = [1, 1, 1]} : vector<8x3x8xf32> to vector<8x1x8xf32>
    %79 = vector.broadcast %78 : vector<8x1x8xf32> to vector<8x8x8xf32>
    %80 = arith.mulf %77, %79 : vector<8x8x8xf32>
    %cst_17 = arith.constant dense<0.000000e+00> : vector<8x8xf32>
    %81 = vector.multi_reduction <add>, %80, %cst_17 [2] : vector<8x8x8xf32> to vector<8x8xf32>
    %82 = vector.shape_cast %81 : vector<8x8xf32> to vector<8x8x1xf32>
    %83 = vector.extract_strided_slice %1 {offsets = [0, 1, 0], sizes = [8, 1, 8], strides = [1, 1, 1]} : vector<8x3x8xf32> to vector<8x1x8xf32>
    %84 = vector.broadcast %83 : vector<8x1x8xf32> to vector<8x8x8xf32>
    %85 = arith.mulf %77, %84 : vector<8x8x8xf32>
    %cst_18 = arith.constant dense<0.000000e+00> : vector<8x8xf32>
    %86 = vector.multi_reduction <add>, %85, %cst_18 [2] : vector<8x8x8xf32> to vector<8x8xf32>
    %87 = vector.shape_cast %86 : vector<8x8xf32> to vector<8x8x1xf32>
    %88 = vector.extract_strided_slice %1 {offsets = [0, 2, 0], sizes = [8, 1, 8], strides = [1, 1, 1]} : vector<8x3x8xf32> to vector<8x1x8xf32>
    %89 = vector.broadcast %88 : vector<8x1x8xf32> to vector<8x8x8xf32>
    %90 = arith.mulf %77, %89 : vector<8x8x8xf32>
    %cst_19 = arith.constant dense<0.000000e+00> : vector<8x8xf32>
    %91 = vector.multi_reduction <add>, %90, %cst_19 [2] : vector<8x8x8xf32> to vector<8x8xf32>
    %92 = vector.shape_cast %91 : vector<8x8xf32> to vector<8x8x1xf32>
    %93 = tpu.concatenate %82, %87, %92 in 2 : vector<8x8x1xf32>, vector<8x8x1xf32>, vector<8x8x1xf32> -> vector<8x8x3xf32>
    %94 = arith.subf %93, %0 : vector<8x8x3xf32>
    %95 = vector.shape_cast %94 : vector<8x8x3xf32> to vector<64x3xf32>
    %cst_20 = arith.constant 0.000000e+00 : f32
    %96 = vector.broadcast %cst_20 : f32 to vector<8x8x8xf32>
    %97 = arith.cmpf ogt, %77, %96 : vector<8x8x8xf32>
    %cst_21 = arith.constant 1.000000e+30 : f32
    %98 = vector.broadcast %cst_21 : f32 to vector<8x8x8xf32>
    %99 = arith.select %97, %98, %65 : vector<8x8x8xi1>, vector<8x8x8xf32>
    %cst_22 = arith.constant dense<0x7F800000> : vector<8x8xf32>
    %100 = vector.multi_reduction <minimumf>, %99, %cst_22 [2] : vector<8x8x8xf32> to vector<8x8xf32>
    %101 = vector.shape_cast %100 : vector<8x8xf32> to vector<8x8x1xf32>
    %102 = vector.broadcast %101 : vector<8x8x1xf32> to vector<8x8x8xf32>
    %103 = arith.cmpf ole, %99, %102 : vector<8x8x8xf32>
    %c8_i32_23 = arith.constant 8 : i32
    %104 = vector.broadcast %c8_i32_23 : i32 to vector<8x8x8xi32>
    %105 = arith.select %103, %31, %104 : vector<8x8x8xi1>, vector<8x8x8xi32>
    %cst_24 = arith.constant dense<2147483647> : vector<8x8xi32>
    %106 = vector.multi_reduction <minsi>, %105, %cst_24 [2] : vector<8x8x8xi32> to vector<8x8xi32>
    %107 = vector.shape_cast %106 : vector<8x8xi32> to vector<8x8x1xi32>
    %108 = vector.broadcast %107 : vector<8x8x1xi32> to vector<8x8x8xi32>
    %109 = arith.cmpi eq, %31, %108 : vector<8x8x8xi32>
    %110 = arith.extui %109 : vector<8x8x8xi1> to vector<8x8x8xi32>
    %111 = arith.sitofp %110 : vector<8x8x8xi32> to vector<8x8x8xf32>
    %112 = vector.extract_strided_slice %1 {offsets = [0, 0, 0], sizes = [8, 1, 8], strides = [1, 1, 1]} : vector<8x3x8xf32> to vector<8x1x8xf32>
    %113 = vector.broadcast %112 : vector<8x1x8xf32> to vector<8x8x8xf32>
    %114 = arith.mulf %111, %113 : vector<8x8x8xf32>
    %cst_25 = arith.constant dense<0.000000e+00> : vector<8x8xf32>
    %115 = vector.multi_reduction <add>, %114, %cst_25 [2] : vector<8x8x8xf32> to vector<8x8xf32>
    %116 = vector.shape_cast %115 : vector<8x8xf32> to vector<8x8x1xf32>
    %117 = vector.extract_strided_slice %1 {offsets = [0, 1, 0], sizes = [8, 1, 8], strides = [1, 1, 1]} : vector<8x3x8xf32> to vector<8x1x8xf32>
    %118 = vector.broadcast %117 : vector<8x1x8xf32> to vector<8x8x8xf32>
    %119 = arith.mulf %111, %118 : vector<8x8x8xf32>
    %cst_26 = arith.constant dense<0.000000e+00> : vector<8x8xf32>
    %120 = vector.multi_reduction <add>, %119, %cst_26 [2] : vector<8x8x8xf32> to vector<8x8xf32>
    %121 = vector.shape_cast %120 : vector<8x8xf32> to vector<8x8x1xf32>
    %122 = vector.extract_strided_slice %1 {offsets = [0, 2, 0], sizes = [8, 1, 8], strides = [1, 1, 1]} : vector<8x3x8xf32> to vector<8x1x8xf32>
    %123 = vector.broadcast %122 : vector<8x1x8xf32> to vector<8x8x8xf32>
    %124 = arith.mulf %111, %123 : vector<8x8x8xf32>
    %cst_27 = arith.constant dense<0.000000e+00> : vector<8x8xf32>
    %125 = vector.multi_reduction <add>, %124, %cst_27 [2] : vector<8x8x8xf32> to vector<8x8xf32>
    %126 = vector.shape_cast %125 : vector<8x8xf32> to vector<8x8x1xf32>
    %127 = tpu.concatenate %116, %121, %126 in 2 : vector<8x8x1xf32>, vector<8x8x1xf32>, vector<8x8x1xf32> -> vector<8x8x3xf32>
    %128 = arith.subf %127, %0 : vector<8x8x3xf32>
    %129 = vector.shape_cast %128 : vector<8x8x3xf32> to vector<64x3xf32>
    %cst_28 = arith.constant 0.000000e+00 : f32
    %130 = vector.broadcast %cst_28 : f32 to vector<8x8x8xf32>
    %131 = arith.cmpf ogt, %111, %130 : vector<8x8x8xf32>
    %cst_29 = arith.constant 1.000000e+30 : f32
    %132 = vector.broadcast %cst_29 : f32 to vector<8x8x8xf32>
    %133 = arith.select %131, %132, %99 : vector<8x8x8xi1>, vector<8x8x8xf32>
    %cst_30 = arith.constant dense<0x7F800000> : vector<8x8xf32>
    %134 = vector.multi_reduction <minimumf>, %133, %cst_30 [2] : vector<8x8x8xf32> to vector<8x8xf32>
    %135 = vector.shape_cast %134 : vector<8x8xf32> to vector<8x8x1xf32>
    %136 = vector.broadcast %135 : vector<8x8x1xf32> to vector<8x8x8xf32>
    %137 = arith.cmpf ole, %133, %136 : vector<8x8x8xf32>
    %c8_i32_31 = arith.constant 8 : i32
    %138 = vector.broadcast %c8_i32_31 : i32 to vector<8x8x8xi32>
    %139 = arith.select %137, %31, %138 : vector<8x8x8xi1>, vector<8x8x8xi32>
    %cst_32 = arith.constant dense<2147483647> : vector<8x8xi32>
    %140 = vector.multi_reduction <minsi>, %139, %cst_32 [2] : vector<8x8x8xi32> to vector<8x8xi32>
    %141 = vector.shape_cast %140 : vector<8x8xi32> to vector<8x8x1xi32>
    %142 = vector.broadcast %141 : vector<8x8x1xi32> to vector<8x8x8xi32>
    %143 = arith.cmpi eq, %31, %142 : vector<8x8x8xi32>
    %144 = arith.extui %143 : vector<8x8x8xi1> to vector<8x8x8xi32>
    %145 = arith.sitofp %144 : vector<8x8x8xi32> to vector<8x8x8xf32>
    %146 = vector.extract_strided_slice %1 {offsets = [0, 0, 0], sizes = [8, 1, 8], strides = [1, 1, 1]} : vector<8x3x8xf32> to vector<8x1x8xf32>
    %147 = vector.broadcast %146 : vector<8x1x8xf32> to vector<8x8x8xf32>
    %148 = arith.mulf %145, %147 : vector<8x8x8xf32>
    %cst_33 = arith.constant dense<0.000000e+00> : vector<8x8xf32>
    %149 = vector.multi_reduction <add>, %148, %cst_33 [2] : vector<8x8x8xf32> to vector<8x8xf32>
    %150 = vector.shape_cast %149 : vector<8x8xf32> to vector<8x8x1xf32>
    %151 = vector.extract_strided_slice %1 {offsets = [0, 1, 0], sizes = [8, 1, 8], strides = [1, 1, 1]} : vector<8x3x8xf32> to vector<8x1x8xf32>
    %152 = vector.broadcast %151 : vector<8x1x8xf32> to vector<8x8x8xf32>
    %153 = arith.mulf %145, %152 : vector<8x8x8xf32>
    %cst_34 = arith.constant dense<0.000000e+00> : vector<8x8xf32>
    %154 = vector.multi_reduction <add>, %153, %cst_34 [2] : vector<8x8x8xf32> to vector<8x8xf32>
    %155 = vector.shape_cast %154 : vector<8x8xf32> to vector<8x8x1xf32>
    %156 = vector.extract_strided_slice %1 {offsets = [0, 2, 0], sizes = [8, 1, 8], strides = [1, 1, 1]} : vector<8x3x8xf32> to vector<8x1x8xf32>
    %157 = vector.broadcast %156 : vector<8x1x8xf32> to vector<8x8x8xf32>
    %158 = arith.mulf %145, %157 : vector<8x8x8xf32>
    %cst_35 = arith.constant dense<0.000000e+00> : vector<8x8xf32>
    %159 = vector.multi_reduction <add>, %158, %cst_35 [2] : vector<8x8x8xf32> to vector<8x8xf32>
    %160 = vector.shape_cast %159 : vector<8x8xf32> to vector<8x8x1xf32>
    %161 = tpu.concatenate %150, %155, %160 in 2 : vector<8x8x1xf32>, vector<8x8x1xf32>, vector<8x8x1xf32> -> vector<8x8x3xf32>
    %162 = arith.subf %161, %0 : vector<8x8x3xf32>
    %163 = vector.shape_cast %162 : vector<8x8x3xf32> to vector<64x3xf32>
    %164 = arith.mulf %61, %61 : vector<64x3xf32>
    %cst_36 = arith.constant dense<0.000000e+00> : vector<64xf32>
    %165 = vector.multi_reduction <add>, %164, %cst_36 [1] : vector<64x3xf32> to vector<64xf32>
    %166 = vector.shape_cast %165 : vector<64xf32> to vector<64x1xf32>
    %167 = arith.mulf %95, %95 : vector<64x3xf32>
    %cst_37 = arith.constant dense<0.000000e+00> : vector<64xf32>
    %168 = vector.multi_reduction <add>, %167, %cst_37 [1] : vector<64x3xf32> to vector<64xf32>
    %169 = vector.shape_cast %168 : vector<64xf32> to vector<64x1xf32>
    %170 = arith.mulf %129, %129 : vector<64x3xf32>
    %cst_38 = arith.constant dense<0.000000e+00> : vector<64xf32>
    %171 = vector.multi_reduction <add>, %170, %cst_38 [1] : vector<64x3xf32> to vector<64xf32>
    %172 = vector.shape_cast %171 : vector<64xf32> to vector<64x1xf32>
    %173 = arith.mulf %163, %163 : vector<64x3xf32>
    %cst_39 = arith.constant dense<0.000000e+00> : vector<64xf32>
    %174 = vector.multi_reduction <add>, %173, %cst_39 [1] : vector<64x3xf32> to vector<64xf32>
    %175 = vector.shape_cast %174 : vector<64xf32> to vector<64x1xf32>
    %176 = arith.maximumf %166, %169 : vector<64x1xf32>
    %177 = arith.maximumf %176, %172 : vector<64x1xf32>
    %178 = arith.maximumf %177, %175 : vector<64x1xf32>
    %cst_40 = arith.constant 1.000000e-16 : f32
    %179 = vector.broadcast %cst_40 : f32 to vector<64x1xf32>
    %180 = arith.maximumf %178, %179 : vector<64x1xf32>
    %181 = math.rsqrt %180 : vector<64x1xf32>
    %182 = vector.broadcast %181 : vector<64x1xf32> to vector<64x3xf32>
    %183 = arith.mulf %61, %182 : vector<64x3xf32>
    %c0_41 = arith.constant 0 : index
    %c0_42 = arith.constant 0 : index
    %184 = vector.load %arg3[%c0_41, %c0_42] : memref<3x16xf32, #tpu.memory_space<vmem>>, vector<3x16xf32>
    %c0_43 = arith.constant 0 : index
    %c0_44 = arith.constant 0 : index
    %185 = vector.load %arg4[%c0_43, %c0_44] : memref<1x16xf32, #tpu.memory_space<vmem>>, vector<1x16xf32>
    %cst_45 = arith.constant dense<0.000000e+00> : vector<64x16xf32>
    %186 = tpu.matmul %183, %184, %cst_45 {dimension_numbers = #tpu.dot_dimension_numbers<[1], [0], [0], [1], [0, 0, 1, 1], [], []>} : vector<64x3xf32>, vector<3x16xf32>, vector<64x16xf32> -> vector<64x16xf32>
    %187 = vector.broadcast %185 : vector<1x16xf32> to vector<64x16xf32>
    %188 = arith.addf %186, %187 : vector<64x16xf32>
    %cst_46 = arith.constant 0.000000e+00 : f32
    %189 = vector.broadcast %cst_46 : f32 to vector<64x16xf32>
    %190 = arith.maximumf %188, %189 : vector<64x16xf32>
    %c0_47 = arith.constant 0 : index
    %c0_48 = arith.constant 0 : index
    %191 = vector.load %arg5[%c0_47, %c0_48] : memref<16x32xf32, #tpu.memory_space<vmem>>, vector<16x32xf32>
    %c0_49 = arith.constant 0 : index
    %c0_50 = arith.constant 0 : index
    %192 = vector.load %arg6[%c0_49, %c0_50] : memref<1x32xf32, #tpu.memory_space<vmem>>, vector<1x32xf32>
    %cst_51 = arith.constant dense<0.000000e+00> : vector<64x32xf32>
    %193 = tpu.matmul %190, %191, %cst_51 {dimension_numbers = #tpu.dot_dimension_numbers<[1], [0], [0], [1], [0, 0, 1, 1], [], []>} : vector<64x16xf32>, vector<16x32xf32>, vector<64x32xf32> -> vector<64x32xf32>
    %194 = vector.broadcast %192 : vector<1x32xf32> to vector<64x32xf32>
    %195 = arith.addf %193, %194 : vector<64x32xf32>
    %196 = vector.broadcast %181 : vector<64x1xf32> to vector<64x3xf32>
    %197 = arith.mulf %95, %196 : vector<64x3xf32>
    %c0_52 = arith.constant 0 : index
    %c0_53 = arith.constant 0 : index
    %198 = vector.load %arg3[%c0_52, %c0_53] : memref<3x16xf32, #tpu.memory_space<vmem>>, vector<3x16xf32>
    %c0_54 = arith.constant 0 : index
    %c0_55 = arith.constant 0 : index
    %199 = vector.load %arg4[%c0_54, %c0_55] : memref<1x16xf32, #tpu.memory_space<vmem>>, vector<1x16xf32>
    %cst_56 = arith.constant dense<0.000000e+00> : vector<64x16xf32>
    %200 = tpu.matmul %197, %198, %cst_56 {dimension_numbers = #tpu.dot_dimension_numbers<[1], [0], [0], [1], [0, 0, 1, 1], [], []>} : vector<64x3xf32>, vector<3x16xf32>, vector<64x16xf32> -> vector<64x16xf32>
    %201 = vector.broadcast %199 : vector<1x16xf32> to vector<64x16xf32>
    %202 = arith.addf %200, %201 : vector<64x16xf32>
    %cst_57 = arith.constant 0.000000e+00 : f32
    %203 = vector.broadcast %cst_57 : f32 to vector<64x16xf32>
    %204 = arith.maximumf %202, %203 : vector<64x16xf32>
    %c0_58 = arith.constant 0 : index
    %c0_59 = arith.constant 0 : index
    %205 = vector.load %arg5[%c0_58, %c0_59] : memref<16x32xf32, #tpu.memory_space<vmem>>, vector<16x32xf32>
    %c0_60 = arith.constant 0 : index
    %c0_61 = arith.constant 0 : index
    %206 = vector.load %arg6[%c0_60, %c0_61] : memref<1x32xf32, #tpu.memory_space<vmem>>, vector<1x32xf32>
    %cst_62 = arith.constant dense<0.000000e+00> : vector<64x32xf32>
    %207 = tpu.matmul %204, %205, %cst_62 {dimension_numbers = #tpu.dot_dimension_numbers<[1], [0], [0], [1], [0, 0, 1, 1], [], []>} : vector<64x16xf32>, vector<16x32xf32>, vector<64x32xf32> -> vector<64x32xf32>
    %208 = vector.broadcast %206 : vector<1x32xf32> to vector<64x32xf32>
    %209 = arith.addf %207, %208 : vector<64x32xf32>
    %210 = arith.maximumf %195, %209 : vector<64x32xf32>
    %211 = vector.broadcast %181 : vector<64x1xf32> to vector<64x3xf32>
    %212 = arith.mulf %129, %211 : vector<64x3xf32>
    %c0_63 = arith.constant 0 : index
    %c0_64 = arith.constant 0 : index
    %213 = vector.load %arg3[%c0_63, %c0_64] : memref<3x16xf32, #tpu.memory_space<vmem>>, vector<3x16xf32>
    %c0_65 = arith.constant 0 : index
    %c0_66 = arith.constant 0 : index
    %214 = vector.load %arg4[%c0_65, %c0_66] : memref<1x16xf32, #tpu.memory_space<vmem>>, vector<1x16xf32>
    %cst_67 = arith.constant dense<0.000000e+00> : vector<64x16xf32>
    %215 = tpu.matmul %212, %213, %cst_67 {dimension_numbers = #tpu.dot_dimension_numbers<[1], [0], [0], [1], [0, 0, 1, 1], [], []>} : vector<64x3xf32>, vector<3x16xf32>, vector<64x16xf32> -> vector<64x16xf32>
    %216 = vector.broadcast %214 : vector<1x16xf32> to vector<64x16xf32>
    %217 = arith.addf %215, %216 : vector<64x16xf32>
    %cst_68 = arith.constant 0.000000e+00 : f32
    %218 = vector.broadcast %cst_68 : f32 to vector<64x16xf32>
    %219 = arith.maximumf %217, %218 : vector<64x16xf32>
    %c0_69 = arith.constant 0 : index
    %c0_70 = arith.constant 0 : index
    %220 = vector.load %arg5[%c0_69, %c0_70] : memref<16x32xf32, #tpu.memory_space<vmem>>, vector<16x32xf32>
    %c0_71 = arith.constant 0 : index
    %c0_72 = arith.constant 0 : index
    %221 = vector.load %arg6[%c0_71, %c0_72] : memref<1x32xf32, #tpu.memory_space<vmem>>, vector<1x32xf32>
    %cst_73 = arith.constant dense<0.000000e+00> : vector<64x32xf32>
    %222 = tpu.matmul %219, %220, %cst_73 {dimension_numbers = #tpu.dot_dimension_numbers<[1], [0], [0], [1], [0, 0, 1, 1], [], []>} : vector<64x16xf32>, vector<16x32xf32>, vector<64x32xf32> -> vector<64x32xf32>
    %223 = vector.broadcast %221 : vector<1x32xf32> to vector<64x32xf32>
    %224 = arith.addf %222, %223 : vector<64x32xf32>
    %225 = arith.maximumf %210, %224 : vector<64x32xf32>
    %226 = vector.broadcast %181 : vector<64x1xf32> to vector<64x3xf32>
    %227 = arith.mulf %163, %226 : vector<64x3xf32>
    %c0_74 = arith.constant 0 : index
    %c0_75 = arith.constant 0 : index
    %228 = vector.load %arg3[%c0_74, %c0_75] : memref<3x16xf32, #tpu.memory_space<vmem>>, vector<3x16xf32>
    %c0_76 = arith.constant 0 : index
    %c0_77 = arith.constant 0 : index
    %229 = vector.load %arg4[%c0_76, %c0_77] : memref<1x16xf32, #tpu.memory_space<vmem>>, vector<1x16xf32>
    %cst_78 = arith.constant dense<0.000000e+00> : vector<64x16xf32>
    %230 = tpu.matmul %227, %228, %cst_78 {dimension_numbers = #tpu.dot_dimension_numbers<[1], [0], [0], [1], [0, 0, 1, 1], [], []>} : vector<64x3xf32>, vector<3x16xf32>, vector<64x16xf32> -> vector<64x16xf32>
    %231 = vector.broadcast %229 : vector<1x16xf32> to vector<64x16xf32>
    %232 = arith.addf %230, %231 : vector<64x16xf32>
    %cst_79 = arith.constant 0.000000e+00 : f32
    %233 = vector.broadcast %cst_79 : f32 to vector<64x16xf32>
    %234 = arith.maximumf %232, %233 : vector<64x16xf32>
    %c0_80 = arith.constant 0 : index
    %c0_81 = arith.constant 0 : index
    %235 = vector.load %arg5[%c0_80, %c0_81] : memref<16x32xf32, #tpu.memory_space<vmem>>, vector<16x32xf32>
    %c0_82 = arith.constant 0 : index
    %c0_83 = arith.constant 0 : index
    %236 = vector.load %arg6[%c0_82, %c0_83] : memref<1x32xf32, #tpu.memory_space<vmem>>, vector<1x32xf32>
    %cst_84 = arith.constant dense<0.000000e+00> : vector<64x32xf32>
    %237 = tpu.matmul %234, %235, %cst_84 {dimension_numbers = #tpu.dot_dimension_numbers<[1], [0], [0], [1], [0, 0, 1, 1], [], []>} : vector<64x16xf32>, vector<16x32xf32>, vector<64x32xf32> -> vector<64x32xf32>
    %238 = vector.broadcast %236 : vector<1x32xf32> to vector<64x32xf32>
    %239 = arith.addf %237, %238 : vector<64x32xf32>
    %240 = arith.maximumf %225, %239 : vector<64x32xf32>
    %241 = vector.shape_cast %240 : vector<64x32xf32> to vector<8x8x32xf32>
    %c0_85 = arith.constant 0 : index
    %c0_86 = arith.constant 0 : index
    %c0_87 = arith.constant 0 : index
    %242 = vector.load %arg7[%c0_85, %c0_86, %c0_87] : memref<8x8x32xf32, #tpu.memory_space<vmem>>, vector<8x8x32xf32>
    tpu.vector_store %arg7[%c0_85, %c0_86, %c0_87], %241 {strides = array<i32>} : memref<8x8x32xf32, #tpu.memory_space<vmem>>, vector<8x8x32xf32>,
    return
  }
  func.func @transform_0(%arg0: i32) -> (i32, i32, i32) {
    %c0_i32 = arith.constant 0 : i32
    %c0_i32_0 = arith.constant 0 : i32
    %c0_i32_1 = arith.constant 0 : i32
    return %arg0, %c0_i32, %c0_i32_0 : i32, i32, i32
  }
  func.func @transform_1(%arg0: i32) -> (i32, i32, i32) {
    %c0_i32 = arith.constant 0 : i32
    %c0_i32_0 = arith.constant 0 : i32
    %c0_i32_1 = arith.constant 0 : i32
    return %arg0, %c0_i32, %c0_i32_0 : i32, i32, i32
  }
  func.func @transform_2(%arg0: i32) -> (i32, i32) {
    %c0_i32 = arith.constant 0 : i32
    %c0_i32_0 = arith.constant 0 : i32
    %c0_i32_1 = arith.constant 0 : i32
    return %c0_i32, %c0_i32_0 : i32, i32
  }
  func.func @transform_3(%arg0: i32) -> (i32, i32) {
    %c0_i32 = arith.constant 0 : i32
    %c0_i32_0 = arith.constant 0 : i32
    %c0_i32_1 = arith.constant 0 : i32
    return %c0_i32, %c0_i32_0 : i32, i32
  }
  func.func @transform_4(%arg0: i32) -> (i32, i32) {
    %c0_i32 = arith.constant 0 : i32
    %c0_i32_0 = arith.constant 0 : i32
    %c0_i32_1 = arith.constant 0 : i32
    return %c0_i32, %c0_i32_0 : i32, i32
  }
  func.func @transform_5(%arg0: i32) -> (i32, i32) {
    %c0_i32 = arith.constant 0 : i32
    %c0_i32_0 = arith.constant 0 : i32
    %c0_i32_1 = arith.constant 0 : i32
    return %c0_i32, %c0_i32_0 : i32, i32
  }
  func.func @transform_6(%arg0: i32) -> (i32, i32, i32) {
    %c0_i32 = arith.constant 0 : i32
    %c0_i32_0 = arith.constant 0 : i32
    %c0_i32_1 = arith.constant 0 : i32
    return %arg0, %c0_i32, %c0_i32_0 : i32, i32, i32
  }
}

</mosaic_0001>

<llo_original>
// kernel: tpu_custom_call.1
$region0: #{tpu_custom_call.1}
  #allocation0 [shape = 'u32[]', space=smem, size = 0x4, offset = 0x4, fixed_abs, tag = 'smem constant byte address 0x4 - core index']
  #allocation1 [shape = 'u32[144,128]{1,0:T(1,128)}', space=vmem, size = 0x12000, scoped, tag = 'internal scratch']
  %s0 = inlined_call_operand.vmem [shape: f32[8,8,3], index: 0, kind: input, shape index: {}]
  %s1 = inlined_call_operand.vmem [shape: f32[8,3,8], index: 1, kind: input, shape index: {}]
  %s2 = inlined_call_operand.vmem [shape: f32[3,16], index: 2, kind: input, shape index: {}]
  %s3 = inlined_call_operand.vmem [shape: f32[1,16], index: 3, kind: input, shape index: {}]
  %s4 = inlined_call_operand.vmem [shape: f32[16,32], index: 4, kind: input, shape index: {}]
  %s5 = inlined_call_operand.vmem [shape: f32[1,32], index: 5, kind: input, shape index: {}]
  %s6 = inlined_call_operand.hbm [shape: f32[8,8,32], index: 6, kind: output, shape index: {}]
  %s7 = sld [smem:[#allocation0]]
  $region34: #{tpu_custom_call.1} parent=0
    _
  %s9 = ssub.s32 1, %s7
  %s10 = scalar_select 0, %s9, %s7
  $region1: #{tpu_custom_call.1} parent=0
    #allocation2 [shape = 'u8[32768]{0}', space=vmem, size = 0x8000, scoped, tag = 'output window, operand 0, single buffered']
    #allocation3 [shape = 's32[1]{0}', space=sflag, size = 0x4, scoped, tag = 'scoped memory for tpu_custom_call.1']
    %11 = vsyncpa [#allocation3], 0
    // Predicated region
    $region2: #{tpu_custom_call.1} parent=1 // pred_check
      _
    $region3: #{tpu_custom_call.1} parent=1 // pred_check_branch
      %13 = sbr.rel (0) target = $region5
    $region4: #{tpu_custom_call.1} parent=1 // pred_region
      _
    $region5: #{tpu_custom_call.1} parent=1 // pred_fallthru
      _
    // Predicated region
    $region6: #{tpu_custom_call.1} parent=1 // pred_check
      _
    $region7: #{tpu_custom_call.1} parent=1 // pred_check_branch
      %15 = sbr.rel (0) target = $region9
    $region8: #{tpu_custom_call.1} parent=1 // pred_region
      _
    $region9: #{tpu_custom_call.1} parent=1 // pred_fallthru
      _
    // Predicated region
    $region10: #{tpu_custom_call.1} parent=1 // pred_check
      _
    $region11: #{tpu_custom_call.1} parent=1 // pred_check_branch
      %17 = sbr.rel (0) target = $region13
    $region12: #{tpu_custom_call.1} parent=1 // pred_region
      _
    $region13: #{tpu_custom_call.1} parent=1 // pred_fallthru
      _
    // Predicated region
    $region14: #{tpu_custom_call.1} parent=1 // pred_check
      _
    $region15: #{tpu_custom_call.1} parent=1 // pred_check_branch
      %19 = sbr.rel (0) target = $region17
    $region16: #{tpu_custom_call.1} parent=1 // pred_region
      _
    $region17: #{tpu_custom_call.1} parent=1 // pred_fallthru
      _
    // Predicated region
    $region18: #{tpu_custom_call.1} parent=1 // pred_check
      _
    $region19: #{tpu_custom_call.1} parent=1 // pred_check_branch
      %21 = sbr.rel (0) target = $region21
    $region20: #{tpu_custom_call.1} parent=1 // pred_region
      _
    $region21: #{tpu_custom_call.1} parent=1 // pred_fallthru
      _
    // Predicated region
    $region22: #{tpu_custom_call.1} parent=1 // pred_check
      _
    $region23: #{tpu_custom_call.1} parent=1 // pred_check_branch
      %23 = sbr.rel (0) target = $region25
    $region24: #{tpu_custom_call.1} parent=1 // pred_region
      _
    $region25: #{tpu_custom_call.1} parent=1 // pred_fallthru
      _
    %v24 = vld [vmem:[%s0] sm:$0xff]
    %v25 = vld [vmem:[%s0 + $0x8] sm:$0xff]
    %v26 = vld [vmem:[%s0 + $0x10] sm:$0xff]
    %v27 = vld [vmem:[%s0 + $0x18] sm:$0xff]
    %v28 = vld [vmem:[%s0 + $0x20] sm:$0xff]
    %v29 = vld [vmem:[%s0 + $0x28] sm:$0xff]
    %v30 = vld [vmem:[%s0 + $0x30] sm:$0xff]
    %v31 = vld [vmem:[%s0 + $0x38] sm:$0xff]
    %v32 = vld [vmem:[%s1] sm:$0x7]
    %v33 = vld [vmem:[%s1 + $0x4] sm:$0x7]
    %v34 = vld [vmem:[%s1 + $0x8] sm:$0x7]
    %v35 = vld [vmem:[%s1 + $0xc] sm:$0x7]
    %v36 = vld [vmem:[%s1 + $0x10] sm:$0x7]
    %v37 = vld [vmem:[%s1 + $0x14] sm:$0x7]
    %v38 = vld [vmem:[%s1 + $0x18] sm:$0x7]
    %v39 = vld [vmem:[%s1 + $0x1c] sm:$0x7]
    %v40 = vmul.f32 %v24, %v24
    %v41 = vmul.f32 %v25, %v25
    %v42 = vmul.f32 %v26, %v26
    %v43 = vmul.f32 %v27, %v27
    %v44 = vmul.f32 %v28, %v28
    %v45 = vmul.f32 %v29, %v29
    %v46 = vmul.f32 %v30, %v30
    %v47 = vmul.f32 %v31, %v31
    %vm48 = vcmask 23552
    %v49 = vsel %vm48, %v40, 0.0
    %50 = vadd.xlane.f32.xlu0 %v49
    %v51 = vpop.xlane.xlu0 %50
    %v52 = vsel %vm48, %v41, 0.0
    %53 = vadd.xlane.f32.xlu0 %v52
    %v54 = vpop.xlane.xlu0 %53
    %v55 = vsel %vm48, %v42, 0.0
    %56 = vadd.xlane.f32.xlu0 %v55
    %v57 = vpop.xlane.xlu0 %56
    %v58 = vsel %vm48, %v43, 0.0
    %59 = vadd.xlane.f32.xlu0 %v58
    %v60 = vpop.xlane.xlu0 %59
    %v61 = vsel %vm48, %v44, 0.0
    %62 = vadd.xlane.f32.xlu0 %v61
    %v63 = vpop.xlane.xlu0 %62
    %v64 = vsel %vm48, %v45, 0.0
    %65 = vadd.xlane.f32.xlu0 %v64
    %v66 = vpop.xlane.xlu0 %65
    %v67 = vsel %vm48, %v46, 0.0
    %68 = vadd.xlane.f32.xlu0 %v67
    %v69 = vpop.xlane.xlu0 %68
    %v70 = vsel %vm48, %v47, 0.0
    %71 = vadd.xlane.f32.xlu0 %v70
    %v72 = vpop.xlane.xlu0 %71
    %v73 = vmul.f32 %v32, %v32
    %v74 = vmul.f32 %v33, %v33
    %v75 = vmul.f32 %v34, %v34
    %v76 = vmul.f32 %v35, %v35
    %v77 = vmul.f32 %v36, %v36
    %v78 = vmul.f32 %v37, %v37
    %v79 = vmul.f32 %v38, %v38
    %v80 = vmul.f32 %v39, %v39
    %vm81 = vcmask 59392
    %v82 = vsel %vm81, %v73, 0.0
    %v83 = vrot.slane %v82, 4
    %v84 = vadd.f32 %v82, %v83
    %v85 = vrot.slane %v84, 2
    %v86 = vadd.f32 %v84, %v85
    %v87 = vrot.slane %v86, 1
    %v88 = vadd.f32 %v86, %v87
    %v89 = vsel %vm81, %v74, 0.0
    %v90 = vrot.slane %v89, 4
    %v91 = vadd.f32 %v89, %v90
    %v92 = vrot.slane %v91, 2
    %v93 = vadd.f32 %v91, %v92
    %v94 = vrot.slane %v93, 1
    %v95 = vadd.f32 %v93, %v94
    %v96 = vsel %vm81, %v75, 0.0
    %v97 = vrot.slane %v96, 4
    %v98 = vadd.f32 %v96, %v97
    %v99 = vrot.slane %v98, 2
    %v100 = vadd.f32 %v98, %v99
    %v101 = vrot.slane %v100, 1
    %v102 = vadd.f32 %v100, %v101
    %v103 = vsel %vm81, %v76, 0.0
    %v104 = vrot.slane %v103, 4
    %v105 = vadd.f32 %v103, %v104
    %v106 = vrot.slane %v105, 2
    %v107 = vadd.f32 %v105, %v106
    %v108 = vrot.slane %v107, 1
    %v109 = vadd.f32 %v107, %v108
    %v110 = vsel %vm81, %v77, 0.0
    %v111 = vrot.slane %v110, 4
    %v112 = vadd.f32 %v110, %v111
    %v113 = vrot.slane %v112, 2
    %v114 = vadd.f32 %v112, %v113
    %v115 = vrot.slane %v114, 1
    %v116 = vadd.f32 %v114, %v115
    %v117 = vsel %vm81, %v78, 0.0
    %v118 = vrot.slane %v117, 4
    %v119 = vadd.f32 %v117, %v118
    %v120 = vrot.slane %v119, 2
    %v121 = vadd.f32 %v119, %v120
    %v122 = vrot.slane %v121, 1
    %v123 = vadd.f32 %v121, %v122
    %v124 = vsel %vm81, %v79, 0.0
    %v125 = vrot.slane %v124, 4
    %v126 = vadd.f32 %v124, %v125
    %v127 = vrot.slane %v126, 2
    %v128 = vadd.f32 %v126, %v127
    %v129 = vrot.slane %v128, 1
    %v130 = vadd.f32 %v128, %v129
    %v131 = vsel %vm81, %v80, 0.0
    %v132 = vrot.slane %v131, 4
    %v133 = vadd.f32 %v131, %v132
    %v134 = vrot.slane %v133, 2
    %v135 = vadd.f32 %v133, %v134
    %v136 = vrot.slane %v135, 1
    %v137 = vadd.f32 %v135, %v136
    %139 = vset.pattern.permute.xlu0 0
    %140 = vperm.xlu0 %139, %v24
    %v141 = vpop.permute.xlu0 %140
    %144 = vset.pattern.permute.xlu0 0
    %145 = vperm.xlu0 %144, %v25
    %v146 = vpop.permute.xlu0 %145
    %149 = vset.pattern.permute.xlu0 0
    %150 = vperm.xlu0 %149, %v26
    %v151 = vpop.permute.xlu0 %150
    %154 = vset.pattern.permute.xlu0 0
    %155 = vperm.xlu0 %154, %v27
    %v156 = vpop.permute.xlu0 %155
    %159 = vset.pattern.permute.xlu0 0
    %160 = vperm.xlu0 %159, %v28
    %v161 = vpop.permute.xlu0 %160
    %164 = vset.pattern.permute.xlu0 0
    %165 = vperm.xlu0 %164, %v29
    %v166 = vpop.permute.xlu0 %165
    %169 = vset.pattern.permute.xlu0 0
    %170 = vperm.xlu0 %169, %v30
    %v171 = vpop.permute.xlu0 %170
    %174 = vset.pattern.permute.xlu0 0
    %175 = vperm.xlu0 %174, %v31
    %v176 = vpop.permute.xlu0 %175
    %v178 = vlaneseq
    %v179 = vshrl.u32 %v178, 7
    %v180 = vsub.s32 0, %v179
    %v181 = vrot.slane %v32, %v180
    %v182 = vlaneseq
    %v183 = vshrl.u32 %v182, 7
    %v184 = vsub.s32 0, %v183
    %v185 = vrot.slane %v33, %v184
    %v186 = vlaneseq
    %v187 = vshrl.u32 %v186, 7
    %v188 = vsub.s32 0, %v187
    %v189 = vrot.slane %v34, %v188
    %v190 = vlaneseq
    %v191 = vshrl.u32 %v190, 7
    %v192 = vsub.s32 0, %v191
    %v193 = vrot.slane %v35, %v192
    %v194 = vlaneseq
    %v195 = vshrl.u32 %v194, 7
    %v196 = vsub.s32 0, %v195
    %v197 = vrot.slane %v36, %v196
    %v198 = vlaneseq
    %v199 = vshrl.u32 %v198, 7
    %v200 = vsub.s32 0, %v199
    %v201 = vrot.slane %v37, %v200
    %v202 = vlaneseq
    %v203 = vshrl.u32 %v202, 7
    %v204 = vsub.s32 0, %v203
    %v205 = vrot.slane %v38, %v204
    %v206 = vlaneseq
    %v207 = vshrl.u32 %v206, 7
    %v208 = vsub.s32 0, %v207
    %v209 = vrot.slane %v39, %v208
    %v210 = vmul.f32 %v141, %v181
    %v211 = vmul.f32 %v146, %v185
    %v212 = vmul.f32 %v151, %v189
    %v213 = vmul.f32 %v156, %v193
    %v214 = vmul.f32 %v161, %v197
    %v215 = vmul.f32 %v166, %v201
    %v216 = vmul.f32 %v171, %v205
    %v217 = vmul.f32 %v176, %v209
    %218 = vset.pattern.permute.xlu0 1
    %219 = vperm.xlu0 %218, %v24
    %v220 = vpop.permute.xlu0 %219
    %222 = vset.pattern.permute.xlu0 1
    %223 = vperm.xlu0 %222, %v25
    %v224 = vpop.permute.xlu0 %223
    %226 = vset.pattern.permute.xlu0 1
    %227 = vperm.xlu0 %226, %v26
    %v228 = vpop.permute.xlu0 %227
    %230 = vset.pattern.permute.xlu0 1
    %231 = vperm.xlu0 %230, %v27
    %v232 = vpop.permute.xlu0 %231
    %234 = vset.pattern.permute.xlu0 1
    %235 = vperm.xlu0 %234, %v28
    %v236 = vpop.permute.xlu0 %235
    %238 = vset.pattern.permute.xlu0 1
    %239 = vperm.xlu0 %238, %v29
    %v240 = vpop.permute.xlu0 %239
    %242 = vset.pattern.permute.xlu0 1
    %243 = vperm.xlu0 %242, %v30
    %v244 = vpop.permute.xlu0 %243
    %246 = vset.pattern.permute.xlu0 1
    %247 = vperm.xlu0 %246, %v31
    %v248 = vpop.permute.xlu0 %247
    %v250 = vlaneseq
    %v251 = vshrl.u32 %v250, 7
    %v252 = vsub.s32 1, %v251
    %v253 = vrot.slane %v32, %v252
    %v254 = vlaneseq
    %v255 = vshrl.u32 %v254, 7
    %v256 = vsub.s32 1, %v255
    %v257 = vrot.slane %v33, %v256
    %v258 = vlaneseq
    %v259 = vshrl.u32 %v258, 7
    %v260 = vsub.s32 1, %v259
    %v261 = vrot.slane %v34, %v260
    %v262 = vlaneseq
    %v263 = vshrl.u32 %v262, 7
    %v264 = vsub.s32 1, %v263
    %v265 = vrot.slane %v35, %v264
    %v266 = vlaneseq
    %v267 = vshrl.u32 %v266, 7
    %v268 = vsub.s32 1, %v267
    %v269 = vrot.slane %v36, %v268
    %v270 = vlaneseq
    %v271 = vshrl.u32 %v270, 7
    %v272 = vsub.s32 1, %v271
    %v273 = vrot.slane %v37, %v272
    %v274 = vlaneseq
    %v275 = vshrl.u32 %v274, 7
    %v276 = vsub.s32 1, %v275
    %v277 = vrot.slane %v38, %v276
    %v278 = vlaneseq
    %v279 = vshrl.u32 %v278, 7
    %v280 = vsub.s32 1, %v279
    %v281 = vrot.slane %v39, %v280
    %v282 = vmul.f32 %v220, %v253
    %v283 = vmul.f32 %v224, %v257
    %v284 = vmul.f32 %v228, %v261
    %v285 = vmul.f32 %v232, %v265
    %v286 = vmul.f32 %v236, %v269
    %v287 = vmul.f32 %v240, %v273
    %v288 = vmul.f32 %v244, %v277
    %v289 = vmul.f32 %v248, %v281
    %v290 = vadd.f32 %v210, %v282
    %v291 = vadd.f32 %v211, %v283
    %v292 = vadd.f32 %v212, %v284
    %v293 = vadd.f32 %v213, %v285
    %v294 = vadd.f32 %v214, %v286
    %v295 = vadd.f32 %v215, %v287
    %v296 = vadd.f32 %v216, %v288
    %v297 = vadd.f32 %v217, %v289
    %298 = vset.pattern.permute.xlu0 2
    %299 = vperm.xlu0 %298, %v24
    %v300 = vpop.permute.xlu0 %299
    %302 = vset.pattern.permute.xlu0 2
    %303 = vperm.xlu0 %302, %v25
    %v304 = vpop.permute.xlu0 %303
    %306 = vset.pattern.permute.xlu0 2
    %307 = vperm.xlu0 %306, %v26
    %v308 = vpop.permute.xlu0 %307
    %310 = vset.pattern.permute.xlu0 2
    %311 = vperm.xlu0 %310, %v27
    %v312 = vpop.permute.xlu0 %311
    %314 = vset.pattern.permute.xlu0 2
    %315 = vperm.xlu0 %314, %v28
    %v316 = vpop.permute.xlu0 %315
    %318 = vset.pattern.permute.xlu0 2
    %319 = vperm.xlu0 %318, %v29
    %v320 = vpop.permute.xlu0 %319
    %322 = vset.pattern.permute.xlu0 2
    %323 = vperm.xlu0 %322, %v30
    %v324 = vpop.permute.xlu0 %323
    %326 = vset.pattern.permute.xlu0 2
    %327 = vperm.xlu0 %326, %v31
    %v328 = vpop.permute.xlu0 %327
    %v330 = vlaneseq
    %v331 = vshrl.u32 %v330, 7
    %v332 = vsub.s32 2, %v331
    %v333 = vrot.slane %v32, %v332
    %v334 = vlaneseq
    %v335 = vshrl.u32 %v334, 7
    %v336 = vsub.s32 2, %v335
    %v337 = vrot.slane %v33, %v336
    %v338 = vlaneseq
    %v339 = vshrl.u32 %v338, 7
    %v340 = vsub.s32 2, %v339
    %v341 = vrot.slane %v34, %v340
    %v342 = vlaneseq
    %v343 = vshrl.u32 %v342, 7
    %v344 = vsub.s32 2, %v343
    %v345 = vrot.slane %v35, %v344
    %v346 = vlaneseq
    %v347 = vshrl.u32 %v346, 7
    %v348 = vsub.s32 2, %v347
    %v349 = vrot.slane %v36, %v348
    %v350 = vlaneseq
    %v351 = vshrl.u32 %v350, 7
    %v352 = vsub.s32 2, %v351
    %v353 = vrot.slane %v37, %v352
    %v354 = vlaneseq
    %v355 = vshrl.u32 %v354, 7
    %v356 = vsub.s32 2, %v355
    %v357 = vrot.slane %v38, %v356
    %v358 = vlaneseq
    %v359 = vshrl.u32 %v358, 7
    %v360 = vsub.s32 2, %v359
    %v361 = vrot.slane %v39, %v360
    %v362 = vmul.f32 %v300, %v333
    %v363 = vmul.f32 %v304, %v337
    %v364 = vmul.f32 %v308, %v341
    %v365 = vmul.f32 %v312, %v345
    %v366 = vmul.f32 %v316, %v349
    %v367 = vmul.f32 %v320, %v353
    %v368 = vmul.f32 %v324, %v357
    %v369 = vmul.f32 %v328, %v361
    %v370 = vadd.f32 %v290, %v362
    %v371 = vadd.f32 %v291, %v363
    %v372 = vadd.f32 %v292, %v364
    %v373 = vadd.f32 %v293, %v365
    %v374 = vadd.f32 %v294, %v366
    %v375 = vadd.f32 %v295, %v367
    %v376 = vadd.f32 %v296, %v368
    %v377 = vadd.f32 %v297, %v369
    %v378 = vadd.f32 %v51, %v88
    %v379 = vadd.f32 %v54, %v95
    %v380 = vadd.f32 %v57, %v102
    %v381 = vadd.f32 %v60, %v109
    %v382 = vadd.f32 %v63, %v116
    %v383 = vadd.f32 %v66, %v123
    %v384 = vadd.f32 %v69, %v130
    %v385 = vadd.f32 %v72, %v137
    %v386 = vmul.f32 %v370, 2.0
    %v387 = vmul.f32 %v371, 2.0
    %v388 = vmul.f32 %v372, 2.0
    %v389 = vmul.f32 %v373, 2.0
    %v390 = vmul.f32 %v374, 2.0
    %v391 = vmul.f32 %v375, 2.0
    %v392 = vmul.f32 %v376, 2.0
    %v393 = vmul.f32 %v377, 2.0
    %v394 = vsub.f32 %v378, %v386
    %v395 = vsub.f32 %v379, %v387
    %v396 = vsub.f32 %v380, %v388
    %v397 = vsub.f32 %v381, %v389
    %v398 = vsub.f32 %v382, %v390
    %v399 = vsub.f32 %v383, %v391
    %v400 = vsub.f32 %v384, %v392
    %v401 = vsub.f32 %v385, %v393
    %v402 = vlaneseq
    %v403 = vand.u32 %v402, 127
    %vm404 = vcmask 64512
    %v405 = vsel %vm404, %v394, inf
    %406 = vmin.xlane.f32.xlu0 %v405
    %v407 = vpop.xlane.xlu0 %406
    %v408 = vsel %vm404, %v395, inf
    %409 = vmin.xlane.f32.xlu0 %v408
    %v410 = vpop.xlane.xlu0 %409
    %v411 = vsel %vm404, %v396, inf
    %412 = vmin.xlane.f32.xlu0 %v411
    %v413 = vpop.xlane.xlu0 %412
    %v414 = vsel %vm404, %v397, inf
    %415 = vmin.xlane.f32.xlu0 %v414
    %v416 = vpop.xlane.xlu0 %415
    %v417 = vsel %vm404, %v398, inf
    %418 = vmin.xlane.f32.xlu0 %v417
    %v419 = vpop.xlane.xlu0 %418
    %v420 = vsel %vm404, %v399, inf
    %421 = vmin.xlane.f32.xlu0 %v420
    %v422 = vpop.xlane.xlu0 %421
    %v423 = vsel %vm404, %v400, inf
    %424 = vmin.xlane.f32.xlu0 %v423
    %v425 = vpop.xlane.xlu0 %424
    %v426 = vsel %vm404, %v401, inf
    %427 = vmin.xlane.f32.xlu0 %v426
    %v428 = vpop.xlane.xlu0 %427
    %vm429 = vcmp.le.f32.partialorder %v394, %v407
    %vm430 = vcmp.le.f32.partialorder %v395, %v410
    %vm431 = vcmp.le.f32.partialorder %v396, %v413
    %vm432 = vcmp.le.f32.partialorder %v397, %v416
    %vm433 = vcmp.le.f32.partialorder %v398, %v419
    %vm434 = vcmp.le.f32.partialorder %v399, %v422
    %vm435 = vcmp.le.f32.partialorder %v400, %v425
    %vm436 = vcmp.le.f32.partialorder %v401, %v428
    %v437 = vsel %vm429, %v403, 8
    %v438 = vsel %vm430, %v403, 8
    %v439 = vsel %vm431, %v403, 8
    %v440 = vsel %vm432, %v403, 8
    %v441 = vsel %vm433, %v403, 8
    %v442 = vsel %vm434, %v403, 8
    %v443 = vsel %vm435, %v403, 8
    %v444 = vsel %vm436, %v403, 8
    %v445 = vsel %vm404, %v437, 2147483647
    %v446 = vand.u32 %v445, 65535
    %v447 = vshra.s32 %v445, 16
    %v448 = vcvt.s32.f32 %v446
    %v449 = vcvt.s32.f32 %v447
    %450 = vmin.xlane.f32.xlu0 %v449
    %v451 = vpop.xlane.xlu0 %450
    %vm452 = vcmp.eq.f32.partialorder %v449, %v451
    %v453 = vsel %vm452, %v448, inf
    %454 = vmin.xlane.f32.xlu0 %v453
    %v455 = vpop.xlane.xlu0 %454
    %v456 = vcvt.f32.s32 %v455
    %v457 = vcvt.f32.s32 %v451
    %v458 = vshll.u32 %v457, 16
    %v459 = vadd.s32 %v458, %v456
    %v460 = vsel %vm404, %v438, 2147483647
    %v461 = vand.u32 %v460, 65535
    %v462 = vshra.s32 %v460, 16
    %v463 = vcvt.s32.f32 %v461
    %v464 = vcvt.s32.f32 %v462
    %465 = vmin.xlane.f32.xlu0 %v464
    %v466 = vpop.xlane.xlu0 %465
    %vm467 = vcmp.eq.f32.partialorder %v464, %v466
    %v468 = vsel %vm467, %v463, inf
    %469 = vmin.xlane.f32.xlu0 %v468
    %v470 = vpop.xlane.xlu0 %469
    %v471 = vcvt.f32.s32 %v470
    %v472 = vcvt.f32.s32 %v466
    %v473 = vshll.u32 %v472, 16
    %v474 = vadd.s32 %v473, %v471
    %v475 = vsel %vm404, %v439, 2147483647
    %v476 = vand.u32 %v475, 65535
    %v477 = vshra.s32 %v475, 16
    %v478 = vcvt.s32.f32 %v476
    %v479 = vcvt.s32.f32 %v477
    %480 = vmin.xlane.f32.xlu0 %v479
    %v481 = vpop.xlane.xlu0 %480
    %vm482 = vcmp.eq.f32.partialorder %v479, %v481
    %v483 = vsel %vm482, %v478, inf
    %484 = vmin.xlane.f32.xlu0 %v483
    %v485 = vpop.xlane.xlu0 %484
    %v486 = vcvt.f32.s32 %v485
    %v487 = vcvt.f32.s32 %v481
    %v488 = vshll.u32 %v487, 16
    %v489 = vadd.s32 %v488, %v486
    %v490 = vsel %vm404, %v440, 2147483647
    %v491 = vand.u32 %v490, 65535
    %v492 = vshra.s32 %v490, 16
    %v493 = vcvt.s32.f32 %v491
    %v494 = vcvt.s32.f32 %v492
    %495 = vmin.xlane.f32.xlu0 %v494
    %v496 = vpop.xlane.xlu0 %495
    %vm497 = vcmp.eq.f32.partialorder %v494, %v496
    %v498 = vsel %vm497, %v493, inf
    %499 = vmin.xlane.f32.xlu0 %v498
    %v500 = vpop.xlane.xlu0 %499
    %v501 = vcvt.f32.s32 %v500
    %v502 = vcvt.f32.s32 %v496
    %v503 = vshll.u32 %v502, 16
    %v504 = vadd.s32 %v503, %v501
    %v505 = vsel %vm404, %v441, 2147483647
    %v506 = vand.u32 %v505, 65535
    %v507 = vshra.s32 %v505, 16
    %v508 = vcvt.s32.f32 %v506
    %v509 = vcvt.s32.f32 %v507
    %510 = vmin.xlane.f32.xlu0 %v509
    %v511 = vpop.xlane.xlu0 %510
    %vm512 = vcmp.eq.f32.partialorder %v509, %v511
    %v513 = vsel %vm512, %v508, inf
    %514 = vmin.xlane.f32.xlu0 %v513
    %v515 = vpop.xlane.xlu0 %514
    %v516 = vcvt.f32.s32 %v515
    %v517 = vcvt.f32.s32 %v511
    %v518 = vshll.u32 %v517, 16
    %v519 = vadd.s32 %v518, %v516
    %v520 = vsel %vm404, %v442, 2147483647
    %v521 = vand.u32 %v520, 65535
    %v522 = vshra.s32 %v520, 16
    %v523 = vcvt.s32.f32 %v521
    %v524 = vcvt.s32.f32 %v522
    %525 = vmin.xlane.f32.xlu0 %v524
    %v526 = vpop.xlane.xlu0 %525
    %vm527 = vcmp.eq.f32.partialorder %v524, %v526
    %v528 = vsel %vm527, %v523, inf
    %529 = vmin.xlane.f32.xlu0 %v528
    %v530 = vpop.xlane.xlu0 %529
    %v531 = vcvt.f32.s32 %v530
    %v532 = vcvt.f32.s32 %v526
    %v533 = vshll.u32 %v532, 16
    %v534 = vadd.s32 %v533, %v531
    %v535 = vsel %vm404, %v443, 2147483647
    %v536 = vand.u32 %v535, 65535
    %v537 = vshra.s32 %v535, 16
    %v538 = vcvt.s32.f32 %v536
    %v539 = vcvt.s32.f32 %v537
    %540 = vmin.xlane.f32.xlu0 %v539
    %v541 = vpop.xlane.xlu0 %540
    %vm542 = vcmp.eq.f32.partialorder %v539, %v541
    %v543 = vsel %vm542, %v538, inf
    %544 = vmin.xlane.f32.xlu0 %v543
    %v545 = vpop.xlane.xlu0 %544
    %v546 = vcvt.f32.s32 %v545
    %v547 = vcvt.f32.s32 %v541
    %v548 = vshll.u32 %v547, 16
    %v549 = vadd.s32 %v548, %v546
    %v550 = vsel %vm404, %v444, 2147483647
    %v551 = vand.u32 %v550, 65535
    %v552 = vshra.s32 %v550, 16
    %v553 = vcvt.s32.f32 %v551
    %v554 = vcvt.s32.f32 %v552
    %555 = vmin.xlane.f32.xlu0 %v554
    %v556 = vpop.xlane.xlu0 %555
    %vm557 = vcmp.eq.f32.partialorder %v554, %v556
    %v558 = vsel %vm557, %v553, inf
    %559 = vmin.xlane.f32.xlu0 %v558
    %v560 = vpop.xlane.xlu0 %559
    %v561 = vcvt.f32.s32 %v560
    %v562 = vcvt.f32.s32 %v556
    %v563 = vshll.u32 %v562, 16
    %v564 = vadd.s32 %v563, %v561
    %vm565 = vcmp.eq.s32.totalorder %v403, %v459
    %vm566 = vcmp.eq.s32.totalorder %v403, %v474
    %vm567 = vcmp.eq.s32.totalorder %v403, %v489
    %vm568 = vcmp.eq.s32.totalorder %v403, %v504
    %vm569 = vcmp.eq.s32.totalorder %v403, %v519
    %vm570 = vcmp.eq.s32.totalorder %v403, %v534
    %vm571 = vcmp.eq.s32.totalorder %v403, %v549
    %vm572 = vcmp.eq.s32.totalorder %v403, %v564
    %v573 = vsel %vm565, 1, 0
    %v574 = vsel %vm566, 1, 0
    %v575 = vsel %vm567, 1, 0
    %v576 = vsel %vm568, 1, 0
    %v577 = vsel %vm569, 1, 0
    %v578 = vsel %vm570, 1, 0
    %v579 = vsel %vm571, 1, 0
    %v580 = vsel %vm572, 1, 0
    %v581 = vcvt.s32.f32 %v573
    %v582 = vcvt.s32.f32 %v574
    %v583 = vcvt.s32.f32 %v575
    %v584 = vcvt.s32.f32 %v576
    %v585 = vcvt.s32.f32 %v577
    %v586 = vcvt.s32.f32 %v578
    %v587 = vcvt.s32.f32 %v579
    %v588 = vcvt.s32.f32 %v580
    %v589 = vmul.f32 %v581, %v181
    %v590 = vmul.f32 %v582, %v185
    %v591 = vmul.f32 %v583, %v189
    %v592 = vmul.f32 %v584, %v193
    %v593 = vmul.f32 %v585, %v197
    %v594 = vmul.f32 %v586, %v201
    %v595 = vmul.f32 %v587, %v205
    %v596 = vmul.f32 %v588, %v209
    %v597 = vsel %vm404, %v589, 0.0
    %598 = vadd.xlane.f32.xlu0 %v597
    %v599 = vpop.xlane.xlu0 %598
    %v600 = vsel %vm404, %v590, 0.0
    %601 = vadd.xlane.f32.xlu0 %v600
    %v602 = vpop.xlane.xlu0 %601
    %v603 = vsel %vm404, %v591, 0.0
    %604 = vadd.xlane.f32.xlu0 %v603
    %v605 = vpop.xlane.xlu0 %604
    %v606 = vsel %vm404, %v592, 0.0
    %607 = vadd.xlane.f32.xlu0 %v606
    %v608 = vpop.xlane.xlu0 %607
    %v609 = vsel %vm404, %v593, 0.0
    %610 = vadd.xlane.f32.xlu0 %v609
    %v611 = vpop.xlane.xlu0 %610
    %v612 = vsel %vm404, %v594, 0.0
    %613 = vadd.xlane.f32.xlu0 %v612
    %v614 = vpop.xlane.xlu0 %613
    %v615 = vsel %vm404, %v595, 0.0
    %616 = vadd.xlane.f32.xlu0 %v615
    %v617 = vpop.xlane.xlu0 %616
    %v618 = vsel %vm404, %v596, 0.0
    %619 = vadd.xlane.f32.xlu0 %v618
    %v620 = vpop.xlane.xlu0 %619
    %v621 = vmul.f32 %v581, %v253
    %v622 = vmul.f32 %v582, %v257
    %v623 = vmul.f32 %v583, %v261
    %v624 = vmul.f32 %v584, %v265
    %v625 = vmul.f32 %v585, %v269
    %v626 = vmul.f32 %v586, %v273
    %v627 = vmul.f32 %v587, %v277
    %v628 = vmul.f32 %v588, %v281
    %v629 = vsel %vm404, %v621, 0.0
    %630 = vadd.xlane.f32.xlu0 %v629
    %v631 = vpop.xlane.xlu0 %630
    %v632 = vsel %vm404, %v622, 0.0
    %633 = vadd.xlane.f32.xlu0 %v632
    %v634 = vpop.xlane.xlu0 %633
    %v635 = vsel %vm404, %v623, 0.0
    %636 = vadd.xlane.f32.xlu0 %v635
    %v637 = vpop.xlane.xlu0 %636
    %v638 = vsel %vm404, %v624, 0.0
    %639 = vadd.xlane.f32.xlu0 %v638
    %v640 = vpop.xlane.xlu0 %639
    %v641 = vsel %vm404, %v625, 0.0
    %642 = vadd.xlane.f32.xlu0 %v641
    %v643 = vpop.xlane.xlu0 %642
    %v644 = vsel %vm404, %v626, 0.0
    %645 = vadd.xlane.f32.xlu0 %v644
    %v646 = vpop.xlane.xlu0 %645
    %v647 = vsel %vm404, %v627, 0.0
    %648 = vadd.xlane.f32.xlu0 %v647
    %v649 = vpop.xlane.xlu0 %648
    %v650 = vsel %vm404, %v628, 0.0
    %651 = vadd.xlane.f32.xlu0 %v650
    %v652 = vpop.xlane.xlu0 %651
    %v653 = vmul.f32 %v581, %v333
    %v654 = vmul.f32 %v582, %v337
    %v655 = vmul.f32 %v583, %v341
    %v656 = vmul.f32 %v584, %v345
    %v657 = vmul.f32 %v585, %v349
    %v658 = vmul.f32 %v586, %v353
    %v659 = vmul.f32 %v587, %v357
    %v660 = vmul.f32 %v588, %v361
    %v661 = vsel %vm404, %v653, 0.0
    %662 = vadd.xlane.f32.xlu0 %v661
    %v663 = vpop.xlane.xlu0 %662
    %v664 = vsel %vm404, %v654, 0.0
    %665 = vadd.xlane.f32.xlu0 %v664
    %v666 = vpop.xlane.xlu0 %665
    %v667 = vsel %vm404, %v655, 0.0
    %668 = vadd.xlane.f32.xlu0 %v667
    %v669 = vpop.xlane.xlu0 %668
    %v670 = vsel %vm404, %v656, 0.0
    %671 = vadd.xlane.f32.xlu0 %v670
    %v672 = vpop.xlane.xlu0 %671
    %v673 = vsel %vm404, %v657, 0.0
    %674 = vadd.xlane.f32.xlu0 %v673
    %v675 = vpop.xlane.xlu0 %674
    %v676 = vsel %vm404, %v658, 0.0
    %677 = vadd.xlane.f32.xlu0 %v676
    %v678 = vpop.xlane.xlu0 %677
    %v679 = vsel %vm404, %v659, 0.0
    %680 = vadd.xlane.f32.xlu0 %v679
    %v681 = vpop.xlane.xlu0 %680
    %v682 = vsel %vm404, %v660, 0.0
    %683 = vadd.xlane.f32.xlu0 %v682
    %v684 = vpop.xlane.xlu0 %683
    %vm685 = vcmask 7168
    %v686 = vsel %vm685, %v599, %v631
    %v687 = vsel %vm685, %v602, %v634
    %v688 = vsel %vm685, %v605, %v637
    %v689 = vsel %vm685, %v608, %v640
    %v690 = vsel %vm685, %v611, %v643
    %v691 = vsel %vm685, %v614, %v646
    %v692 = vsel %vm685, %v617, %v649
    %v693 = vsel %vm685, %v620, %v652
    %vm694 = vcmask 15360
    %v695 = vsel %vm694, %v686, %v663
    %v696 = vsel %vm694, %v687, %v666
    %v697 = vsel %vm694, %v688, %v669
    %v698 = vsel %vm694, %v689, %v672
    %v699 = vsel %vm694, %v690, %v675
    %v700 = vsel %vm694, %v691, %v678
    %v701 = vsel %vm694, %v692, %v681
    %v702 = vsel %vm694, %v693, %v684
    %v703 = vsub.f32 %v695, %v24
    %v704 = vsub.f32 %v696, %v25
    %v705 = vsub.f32 %v697, %v26
    %v706 = vsub.f32 %v698, %v27
    %v707 = vsub.f32 %v699, %v28
    %v708 = vsub.f32 %v700, %v29
    %v709 = vsub.f32 %v701, %v30
    %v710 = vsub.f32 %v702, %v31
    %vm711 = vcmp.gt.f32.partialorder %v581, 0.0
    %vm712 = vcmp.gt.f32.partialorder %v582, 0.0
    %vm713 = vcmp.gt.f32.partialorder %v583, 0.0
    %vm714 = vcmp.gt.f32.partialorder %v584, 0.0
    %vm715 = vcmp.gt.f32.partialorder %v585, 0.0
    %vm716 = vcmp.gt.f32.partialorder %v586, 0.0
    %vm717 = vcmp.gt.f32.partialorder %v587, 0.0
    %vm718 = vcmp.gt.f32.partialorder %v588, 0.0
    %v719 = vsel %vm711, 1e+30, %v394
    %v720 = vsel %vm712, 1e+30, %v395
    %v721 = vsel %vm713, 1e+30, %v396
    %v722 = vsel %vm714, 1e+30, %v397
    %v723 = vsel %vm715, 1e+30, %v398
    %v724 = vsel %vm716, 1e+30, %v399
    %v725 = vsel %vm717, 1e+30, %v400
    %v726 = vsel %vm718, 1e+30, %v401
    %v727 = vsel %vm404, %v719, inf
    %728 = vmin.xlane.f32.xlu0 %v727
    %v729 = vpop.xlane.xlu0 %728
    %v730 = vsel %vm404, %v720, inf
    %731 = vmin.xlane.f32.xlu0 %v730
    %v732 = vpop.xlane.xlu0 %731
    %v733 = vsel %vm404, %v721, inf
    %734 = vmin.xlane.f32.xlu0 %v733
    %v735 = vpop.xlane.xlu0 %734
    %v736 = vsel %vm404, %v722, inf
    %737 = vmin.xlane.f32.xlu0 %v736
    %v738 = vpop.xlane.xlu0 %737
    %v739 = vsel %vm404, %v723, inf
    %740 = vmin.xlane.f32.xlu0 %v739
    %v741 = vpop.xlane.xlu0 %740
    %v742 = vsel %vm404, %v724, inf
    %743 = vmin.xlane.f32.xlu0 %v742
    %v744 = vpop.xlane.xlu0 %743
    %v745 = vsel %vm404, %v725, inf
    %746 = vmin.xlane.f32.xlu0 %v745
    %v747 = vpop.xlane.xlu0 %746
    %v748 = vsel %vm404, %v726, inf
    %749 = vmin.xlane.f32.xlu0 %v748
    %v750 = vpop.xlane.xlu0 %749
    %vm751 = vcmp.le.f32.partialorder %v719, %v729
    %vm752 = vcmp.le.f32.partialorder %v720, %v732
    %vm753 = vcmp.le.f32.partialorder %v721, %v735
    %vm754 = vcmp.le.f32.partialorder %v722, %v738
    %vm755 = vcmp.le.f32.partialorder %v723, %v741
    %vm756 = vcmp.le.f32.partialorder %v724, %v744
    %vm757 = vcmp.le.f32.partialorder %v725, %v747
    %vm758 = vcmp.le.f32.partialorder %v726, %v750
    %v759 = vsel %vm751, %v403, 8
    %v760 = vsel %vm752, %v403, 8
    %v761 = vsel %vm753, %v403, 8
    %v762 = vsel %vm754, %v403, 8
    %v763 = vsel %vm755, %v403, 8
    %v764 = vsel %vm756, %v403, 8
    %v765 = vsel %vm757, %v403, 8
    %v766 = vsel %vm758, %v403, 8
    %v767 = vsel %vm404, %v759, 2147483647
    %v768 = vand.u32 %v767, 65535
    %v769 = vshra.s32 %v767, 16
    %v770 = vcvt.s32.f32 %v768
    %v771 = vcvt.s32.f32 %v769
    %772 = vmin.xlane.f32.xlu0 %v771
    %v773 = vpop.xlane.xlu0 %772
    %vm774 = vcmp.eq.f32.partialorder %v771, %v773
    %v775 = vsel %vm774, %v770, inf
    %776 = vmin.xlane.f32.xlu0 %v775
    %v777 = vpop.xlane.xlu0 %776
    %v778 = vcvt.f32.s32 %v777
    %v779 = vcvt.f32.s32 %v773
    %v780 = vshll.u32 %v779, 16
    %v781 = vadd.s32 %v780, %v778
    %v782 = vsel %vm404, %v760, 2147483647
    %v783 = vand.u32 %v782, 65535
    %v784 = vshra.s32 %v782, 16
    %v785 = vcvt.s32.f32 %v783
    %v786 = vcvt.s32.f32 %v784
    %787 = vmin.xlane.f32.xlu0 %v786
    %v788 = vpop.xlane.xlu0 %787
    %vm789 = vcmp.eq.f32.partialorder %v786, %v788
    %v790 = vsel %vm789, %v785, inf
    %791 = vmin.xlane.f32.xlu0 %v790
    %v792 = vpop.xlane.xlu0 %791
    %v793 = vcvt.f32.s32 %v792
    %v794 = vcvt.f32.s32 %v788
    %v795 = vshll.u32 %v794, 16
    %v796 = vadd.s32 %v795, %v793
    %v797 = vsel %vm404, %v761, 2147483647
    %v798 = vand.u32 %v797, 65535
    %v799 = vshra.s32 %v797, 16
    %v800 = vcvt.s32.f32 %v798
    %v801 = vcvt.s32.f32 %v799
    %802 = vmin.xlane.f32.xlu0 %v801
    %v803 = vpop.xlane.xlu0 %802
    %vm804 = vcmp.eq.f32.partialorder %v801, %v803
    %v805 = vsel %vm804, %v800, inf
    %806 = vmin.xlane.f32.xlu0 %v805
    %v807 = vpop.xlane.xlu0 %806
    %v808 = vcvt.f32.s32 %v807
    %v809 = vcvt.f32.s32 %v803
    %v810 = vshll.u32 %v809, 16
    %v811 = vadd.s32 %v810, %v808
    %v812 = vsel %vm404, %v762, 2147483647
    %v813 = vand.u32 %v812, 65535
    %v814 = vshra.s32 %v812, 16
    %v815 = vcvt.s32.f32 %v813
    %v816 = vcvt.s32.f32 %v814
    %817 = vmin.xlane.f32.xlu0 %v816
    %v818 = vpop.xlane.xlu0 %817
    %vm819 = vcmp.eq.f32.partialorder %v816, %v818
    %v820 = vsel %vm819, %v815, inf
    %821 = vmin.xlane.f32.xlu0 %v820
    %v822 = vpop.xlane.xlu0 %821
    %v823 = vcvt.f32.s32 %v822
    %v824 = vcvt.f32.s32 %v818
    %v825 = vshll.u32 %v824, 16
    %v826 = vadd.s32 %v825, %v823
    %v827 = vsel %vm404, %v763, 2147483647
    %v828 = vand.u32 %v827, 65535
    %v829 = vshra.s32 %v827, 16
    %v830 = vcvt.s32.f32 %v828
    %v831 = vcvt.s32.f32 %v829
    %832 = vmin.xlane.f32.xlu0 %v831
    %v833 = vpop.xlane.xlu0 %832
    %vm834 = vcmp.eq.f32.partialorder %v831, %v833
    %v835 = vsel %vm834, %v830, inf
    %836 = vmin.xlane.f32.xlu0 %v835
    %v837 = vpop.xlane.xlu0 %836
    %v838 = vcvt.f32.s32 %v837
    %v839 = vcvt.f32.s32 %v833
    %v840 = vshll.u32 %v839, 16
    %v841 = vadd.s32 %v840, %v838
    %v842 = vsel %vm404, %v764, 2147483647
    %v843 = vand.u32 %v842, 65535
    %v844 = vshra.s32 %v842, 16
    %v845 = vcvt.s32.f32 %v843
    %v846 = vcvt.s32.f32 %v844
    %847 = vmin.xlane.f32.xlu0 %v846
    %v848 = vpop.xlane.xlu0 %847
    %vm849 = vcmp.eq.f32.partialorder %v846, %v848
    %v850 = vsel %vm849, %v845, inf
    %851 = vmin.xlane.f32.xlu0 %v850
    %v852 = vpop.xlane.xlu0 %851
    %v853 = vcvt.f32.s32 %v852
    %v854 = vcvt.f32.s32 %v848
    %v855 = vshll.u32 %v854, 16
    %v856 = vadd.s32 %v855, %v853
    %v857 = vsel %vm404, %v765, 2147483647
    %v858 = vand.u32 %v857, 65535
    %v859 = vshra.s32 %v857, 16
    %v860 = vcvt.s32.f32 %v858
    %v861 = vcvt.s32.f32 %v859
    %862 = vmin.xlane.f32.xlu0 %v861
    %v863 = vpop.xlane.xlu0 %862
    %vm864 = vcmp.eq.f32.partialorder %v861, %v863
    %v865 = vsel %vm864, %v860, inf
    %866 = vmin.xlane.f32.xlu0 %v865
    %v867 = vpop.xlane.xlu0 %866
    %v868 = vcvt.f32.s32 %v867
    %v869 = vcvt.f32.s32 %v863
    %v870 = vshll.u32 %v869, 16
    %v871 = vadd.s32 %v870, %v868
    %v872 = vsel %vm404, %v766, 2147483647
    %v873 = vand.u32 %v872, 65535
    %v874 = vshra.s32 %v872, 16
    %v875 = vcvt.s32.f32 %v873
    %v876 = vcvt.s32.f32 %v874
    %877 = vmin.xlane.f32.xlu0 %v876
    %v878 = vpop.xlane.xlu0 %877
    %vm879 = vcmp.eq.f32.partialorder %v876, %v878
    %v880 = vsel %vm879, %v875, inf
    %881 = vmin.xlane.f32.xlu0 %v880
    %v882 = vpop.xlane.xlu0 %881
    %v883 = vcvt.f32.s32 %v882
    %v884 = vcvt.f32.s32 %v878
    %v885 = vshll.u32 %v884, 16
    %v886 = vadd.s32 %v885, %v883
    %vm887 = vcmp.eq.s32.totalorder %v403, %v781
    %vm888 = vcmp.eq.s32.totalorder %v403, %v796
    %vm889 = vcmp.eq.s32.totalorder %v403, %v811
    %vm890 = vcmp.eq.s32.totalorder %v403, %v826
    %vm891 = vcmp.eq.s32.totalorder %v403, %v841
    %vm892 = vcmp.eq.s32.totalorder %v403, %v856
    %vm893 = vcmp.eq.s32.totalorder %v403, %v871
    %vm894 = vcmp.eq.s32.totalorder %v403, %v886
    %v895 = vsel %vm887, 1, 0
    %v896 = vsel %vm888, 1, 0
    %v897 = vsel %vm889, 1, 0
    %v898 = vsel %vm890, 1, 0
    %v899 = vsel %vm891, 1, 0
    %v900 = vsel %vm892, 1, 0
    %v901 = vsel %vm893, 1, 0
    %v902 = vsel %vm894, 1, 0
    %v903 = vcvt.s32.f32 %v895
    %v904 = vcvt.s32.f32 %v896
    %v905 = vcvt.s32.f32 %v897
    %v906 = vcvt.s32.f32 %v898
    %v907 = vcvt.s32.f32 %v899
    %v908 = vcvt.s32.f32 %v900
    %v909 = vcvt.s32.f32 %v901
    %v910 = vcvt.s32.f32 %v902
    %v911 = vmul.f32 %v903, %v181
    %v912 = vmul.f32 %v904, %v185
    %v913 = vmul.f32 %v905, %v189
    %v914 = vmul.f32 %v906, %v193
    %v915 = vmul.f32 %v907, %v197
    %v916 = vmul.f32 %v908, %v201
    %v917 = vmul.f32 %v909, %v205
    %v918 = vmul.f32 %v910, %v209
    %v919 = vsel %vm404, %v911, 0.0
    %920 = vadd.xlane.f32.xlu0 %v919
    %v921 = vpop.xlane.xlu0 %920
    %v922 = vsel %vm404, %v912, 0.0
    %923 = vadd.xlane.f32.xlu0 %v922
    %v924 = vpop.xlane.xlu0 %923
    %v925 = vsel %vm404, %v913, 0.0
    %926 = vadd.xlane.f32.xlu0 %v925
    %v927 = vpop.xlane.xlu0 %926
    %v928 = vsel %vm404, %v914, 0.0
    %929 = vadd.xlane.f32.xlu0 %v928
    %v930 = vpop.xlane.xlu0 %929
    %v931 = vsel %vm404, %v915, 0.0
    %932 = vadd.xlane.f32.xlu0 %v931
    %v933 = vpop.xlane.xlu0 %932
    %v934 = vsel %vm404, %v916, 0.0
    %935 = vadd.xlane.f32.xlu0 %v934
    %v936 = vpop.xlane.xlu0 %935
    %v937 = vsel %vm404, %v917, 0.0
    %938 = vadd.xlane.f32.xlu0 %v937
    %v939 = vpop.xlane.xlu0 %938
    %v940 = vsel %vm404, %v918, 0.0
    %941 = vadd.xlane.f32.xlu0 %v940
    %v942 = vpop.xlane.xlu0 %941
    %v943 = vmul.f32 %v903, %v253
    %v944 = vmul.f32 %v904, %v257
    %v945 = vmul.f32 %v905, %v261
    %v946 = vmul.f32 %v906, %v265
    %v947 = vmul.f32 %v907, %v269
    %v948 = vmul.f32 %v908, %v273
    %v949 = vmul.f32 %v909, %v277
    %v950 = vmul.f32 %v910, %v281
    %v951 = vsel %vm404, %v943, 0.0
    %952 = vadd.xlane.f32.xlu0 %v951
    %v953 = vpop.xlane.xlu0 %952
    %v954 = vsel %vm404, %v944, 0.0
    %955 = vadd.xlane.f32.xlu0 %v954
    %v956 = vpop.xlane.xlu0 %955
    %v957 = vsel %vm404, %v945, 0.0
    %958 = vadd.xlane.f32.xlu0 %v957
    %v959 = vpop.xlane.xlu0 %958
    %v960 = vsel %vm404, %v946, 0.0
    %961 = vadd.xlane.f32.xlu0 %v960
    %v962 = vpop.xlane.xlu0 %961
    %v963 = vsel %vm404, %v947, 0.0
    %964 = vadd.xlane.f32.xlu0 %v963
    %v965 = vpop.xlane.xlu0 %964
    %v966 = vsel %vm404, %v948, 0.0
    %967 = vadd.xlane.f32.xlu0 %v966
    %v968 = vpop.xlane.xlu0 %967
    %v969 = vsel %vm404, %v949, 0.0
    %970 = vadd.xlane.f32.xlu0 %v969
    %v971 = vpop.xlane.xlu0 %970
    %v972 = vsel %vm404, %v950, 0.0
    %973 = vadd.xlane.f32.xlu0 %v972
    %v974 = vpop.xlane.xlu0 %973
    %v975 = vmul.f32 %v903, %v333
    %v976 = vmul.f32 %v904, %v337
    %v977 = vmul.f32 %v905, %v341
    %v978 = vmul.f32 %v906, %v345
    %v979 = vmul.f32 %v907, %v349
    %v980 = vmul.f32 %v908, %v353
    %v981 = vmul.f32 %v909, %v357
    %v982 = vmul.f32 %v910, %v361
    %v983 = vsel %vm404, %v975, 0.0
    %984 = vadd.xlane.f32.xlu0 %v983
    %v985 = vpop.xlane.xlu0 %984
    %v986 = vsel %vm404, %v976, 0.0
    %987 = vadd.xlane.f32.xlu0 %v986
    %v988 = vpop.xlane.xlu0 %987
    %v989 = vsel %vm404, %v977, 0.0
    %990 = vadd.xlane.f32.xlu0 %v989
    %v991 = vpop.xlane.xlu0 %990
    %v992 = vsel %vm404, %v978, 0.0
    %993 = vadd.xlane.f32.xlu0 %v992
    %v994 = vpop.xlane.xlu0 %993
    %v995 = vsel %vm404, %v979, 0.0
    %996 = vadd.xlane.f32.xlu0 %v995
    %v997 = vpop.xlane.xlu0 %996
    %v998 = vsel %vm404, %v980, 0.0
    %999 = vadd.xlane.f32.xlu0 %v998
    %v1000 = vpop.xlane.xlu0 %999
    %v1001 = vsel %vm404, %v981, 0.0
    %1002 = vadd.xlane.f32.xlu0 %v1001
    %v1003 = vpop.xlane.xlu0 %1002
    %v1004 = vsel %vm404, %v982, 0.0
    %1005 = vadd.xlane.f32.xlu0 %v1004
    %v1006 = vpop.xlane.xlu0 %1005
    %v1007 = vsel %vm685, %v921, %v953
    %v1008 = vsel %vm685, %v924, %v956
    %v1009 = vsel %vm685, %v927, %v959
    %v1010 = vsel %vm685, %v930, %v962
    %v1011 = vsel %vm685, %v933, %v965
    %v1012 = vsel %vm685, %v936, %v968
    %v1013 = vsel %vm685, %v939, %v971
    %v1014 = vsel %vm685, %v942, %v974
    %v1015 = vsel %vm694, %v1007, %v985
    %v1016 = vsel %vm694, %v1008, %v988
    %v1017 = vsel %vm694, %v1009, %v991
    %v1018 = vsel %vm694, %v1010, %v994
    %v1019 = vsel %vm694, %v1011, %v997
    %v1020 = vsel %vm694, %v1012, %v1000
    %v1021 = vsel %vm694, %v1013, %v1003
    %v1022 = vsel %vm694, %v1014, %v1006
    %v1023 = vsub.f32 %v1015, %v24
    %v1024 = vsub.f32 %v1016, %v25
    %v1025 = vsub.f32 %v1017, %v26
    %v1026 = vsub.f32 %v1018, %v27
    %v1027 = vsub.f32 %v1019, %v28
    %v1028 = vsub.f32 %v1020, %v29
    %v1029 = vsub.f32 %v1021, %v30
    %v1030 = vsub.f32 %v1022, %v31
    %vm1031 = vcmp.gt.f32.partialorder %v903, 0.0
    %vm1032 = vcmp.gt.f32.partialorder %v904, 0.0
    %vm1033 = vcmp.gt.f32.partialorder %v905, 0.0
    %vm1034 = vcmp.gt.f32.partialorder %v906, 0.0
    %vm1035 = vcmp.gt.f32.partialorder %v907, 0.0
    %vm1036 = vcmp.gt.f32.partialorder %v908, 0.0
    %vm1037 = vcmp.gt.f32.partialorder %v909, 0.0
    %vm1038 = vcmp.gt.f32.partialorder %v910, 0.0
    %v1039 = vsel %vm1031, 1e+30, %v719
    %v1040 = vsel %vm1032, 1e+30, %v720
    %v1041 = vsel %vm1033, 1e+30, %v721
    %v1042 = vsel %vm1034, 1e+30, %v722
    %v1043 = vsel %vm1035, 1e+30, %v723
    %v1044 = vsel %vm1036, 1e+30, %v724
    %v1045 = vsel %vm1037, 1e+30, %v725
    %v1046 = vsel %vm1038, 1e+30, %v726
    %v1047 = vsel %vm404, %v1039, inf
    %1048 = vmin.xlane.f32.xlu0 %v1047
    %v1049 = vpop.xlane.xlu0 %1048
    %v1050 = vsel %vm404, %v1040, inf
    %1051 = vmin.xlane.f32.xlu0 %v1050
    %v1052 = vpop.xlane.xlu0 %1051
    %v1053 = vsel %vm404, %v1041, inf
    %1054 = vmin.xlane.f32.xlu0 %v1053
    %v1055 = vpop.xlane.xlu0 %1054
    %v1056 = vsel %vm404, %v1042, inf
    %1057 = vmin.xlane.f32.xlu0 %v1056
    %v1058 = vpop.xlane.xlu0 %1057
    %v1059 = vsel %vm404, %v1043, inf
    %1060 = vmin.xlane.f32.xlu0 %v1059
    %v1061 = vpop.xlane.xlu0 %1060
    %v1062 = vsel %vm404, %v1044, inf
    %1063 = vmin.xlane.f32.xlu0 %v1062
    %v1064 = vpop.xlane.xlu0 %1063
    %v1065 = vsel %vm404, %v1045, inf
    %1066 = vmin.xlane.f32.xlu0 %v1065
    %v1067 = vpop.xlane.xlu0 %1066
    %v1068 = vsel %vm404, %v1046, inf
    %1069 = vmin.xlane.f32.xlu0 %v1068
    %v1070 = vpop.xlane.xlu0 %1069
    %vm1071 = vcmp.le.f32.partialorder %v1039, %v1049
    %vm1072 = vcmp.le.f32.partialorder %v1040, %v1052
    %vm1073 = vcmp.le.f32.partialorder %v1041, %v1055
    %vm1074 = vcmp.le.f32.partialorder %v1042, %v1058
    %vm1075 = vcmp.le.f32.partialorder %v1043, %v1061
    %vm1076 = vcmp.le.f32.partialorder %v1044, %v1064
    %vm1077 = vcmp.le.f32.partialorder %v1045, %v1067
    %vm1078 = vcmp.le.f32.partialorder %v1046, %v1070
    %v1079 = vsel %vm1071, %v403, 8
    %v1080 = vsel %vm1072, %v403, 8
    %v1081 = vsel %vm1073, %v403, 8
    %v1082 = vsel %vm1074, %v403, 8
    %v1083 = vsel %vm1075, %v403, 8
    %v1084 = vsel %vm1076, %v403, 8
    %v1085 = vsel %vm1077, %v403, 8
    %v1086 = vsel %vm1078, %v403, 8
    %v1087 = vsel %vm404, %v1079, 2147483647
    %v1088 = vand.u32 %v1087, 65535
    %v1089 = vshra.s32 %v1087, 16
    %v1090 = vcvt.s32.f32 %v1088
    %v1091 = vcvt.s32.f32 %v1089
    %1092 = vmin.xlane.f32.xlu0 %v1091
    %v1093 = vpop.xlane.xlu0 %1092
    %vm1094 = vcmp.eq.f32.partialorder %v1091, %v1093
    %v1095 = vsel %vm1094, %v1090, inf
    %1096 = vmin.xlane.f32.xlu0 %v1095
    %v1097 = vpop.xlane.xlu0 %1096
    %v1098 = vcvt.f32.s32 %v1097
    %v1099 = vcvt.f32.s32 %v1093
    %v1100 = vshll.u32 %v1099, 16
    %v1101 = vadd.s32 %v1100, %v1098
    %v1102 = vsel %vm404, %v1080, 2147483647
    %v1103 = vand.u32 %v1102, 65535
    %v1104 = vshra.s32 %v1102, 16
    %v1105 = vcvt.s32.f32 %v1103
    %v1106 = vcvt.s32.f32 %v1104
    %1107 = vmin.xlane.f32.xlu0 %v1106
    %v1108 = vpop.xlane.xlu0 %1107
    %vm1109 = vcmp.eq.f32.partialorder %v1106, %v1108
    %v1110 = vsel %vm1109, %v1105, inf
    %1111 = vmin.xlane.f32.xlu0 %v1110
    %v1112 = vpop.xlane.xlu0 %1111
    %v1113 = vcvt.f32.s32 %v1112
    %v1114 = vcvt.f32.s32 %v1108
    %v1115 = vshll.u32 %v1114, 16
    %v1116 = vadd.s32 %v1115, %v1113
    %v1117 = vsel %vm404, %v1081, 2147483647
    %v1118 = vand.u32 %v1117, 65535
    %v1119 = vshra.s32 %v1117, 16
    %v1120 = vcvt.s32.f32 %v1118
    %v1121 = vcvt.s32.f32 %v1119
    %1122 = vmin.xlane.f32.xlu0 %v1121
    %v1123 = vpop.xlane.xlu0 %1122
    %vm1124 = vcmp.eq.f32.partialorder %v1121, %v1123
    %v1125 = vsel %vm1124, %v1120, inf
    %1126 = vmin.xlane.f32.xlu0 %v1125
    %v1127 = vpop.xlane.xlu0 %1126
    %v1128 = vcvt.f32.s32 %v1127
    %v1129 = vcvt.f32.s32 %v1123
    %v1130 = vshll.u32 %v1129, 16
    %v1131 = vadd.s32 %v1130, %v1128
    %v1132 = vsel %vm404, %v1082, 2147483647
    %v1133 = vand.u32 %v1132, 65535
    %v1134 = vshra.s32 %v1132, 16
    %v1135 = vcvt.s32.f32 %v1133
    %v1136 = vcvt.s32.f32 %v1134
    %1137 = vmin.xlane.f32.xlu0 %v1136
    %v1138 = vpop.xlane.xlu0 %1137
    %vm1139 = vcmp.eq.f32.partialorder %v1136, %v1138
    %v1140 = vsel %vm1139, %v1135, inf
    %1141 = vmin.xlane.f32.xlu0 %v1140
    %v1142 = vpop.xlane.xlu0 %1141
    %v1143 = vcvt.f32.s32 %v1142
    %v1144 = vcvt.f32.s32 %v1138
    %v1145 = vshll.u32 %v1144, 16
    %v1146 = vadd.s32 %v1145, %v1143
    %v1147 = vsel %vm404, %v1083, 2147483647
    %v1148 = vand.u32 %v1147, 65535
    %v1149 = vshra.s32 %v1147, 16
    %v1150 = vcvt.s32.f32 %v1148
    %v1151 = vcvt.s32.f32 %v1149
    %1152 = vmin.xlane.f32.xlu0 %v1151
    %v1153 = vpop.xlane.xlu0 %1152
    %vm1154 = vcmp.eq.f32.partialorder %v1151, %v1153
    %v1155 = vsel %vm1154, %v1150, inf
    %1156 = vmin.xlane.f32.xlu0 %v1155
    %v1157 = vpop.xlane.xlu0 %1156
    %v1158 = vcvt.f32.s32 %v1157
    %v1159 = vcvt.f32.s32 %v1153
    %v1160 = vshll.u32 %v1159, 16
    %v1161 = vadd.s32 %v1160, %v1158
    %v1162 = vsel %vm404, %v1084, 2147483647
    %v1163 = vand.u32 %v1162, 65535
    %v1164 = vshra.s32 %v1162, 16
    %v1165 = vcvt.s32.f32 %v1163
    %v1166 = vcvt.s32.f32 %v1164
    %1167 = vmin.xlane.f32.xlu0 %v1166
    %v1168 = vpop.xlane.xlu0 %1167
    %vm1169 = vcmp.eq.f32.partialorder %v1166, %v1168
    %v1170 = vsel %vm1169, %v1165, inf
    %1171 = vmin.xlane.f32.xlu0 %v1170
    %v1172 = vpop.xlane.xlu0 %1171
    %v1173 = vcvt.f32.s32 %v1172
    %v1174 = vcvt.f32.s32 %v1168
    %v1175 = vshll.u32 %v1174, 16
    %v1176 = vadd.s32 %v1175, %v1173
    %v1177 = vsel %vm404, %v1085, 2147483647
    %v1178 = vand.u32 %v1177, 65535
    %v1179 = vshra.s32 %v1177, 16
    %v1180 = vcvt.s32.f32 %v1178
    %v1181 = vcvt.s32.f32 %v1179
    %1182 = vmin.xlane.f32.xlu0 %v1181
    %v1183 = vpop.xlane.xlu0 %1182
    %vm1184 = vcmp.eq.f32.partialorder %v1181, %v1183
    %v1185 = vsel %vm1184, %v1180, inf
    %1186 = vmin.xlane.f32.xlu0 %v1185
    %v1187 = vpop.xlane.xlu0 %1186
    %v1188 = vcvt.f32.s32 %v1187
    %v1189 = vcvt.f32.s32 %v1183
    %v1190 = vshll.u32 %v1189, 16
    %v1191 = vadd.s32 %v1190, %v1188
    %v1192 = vsel %vm404, %v1086, 2147483647
    %v1193 = vand.u32 %v1192, 65535
    %v1194 = vshra.s32 %v1192, 16
    %v1195 = vcvt.s32.f32 %v1193
    %v1196 = vcvt.s32.f32 %v1194
    %1197 = vmin.xlane.f32.xlu0 %v1196
    %v1198 = vpop.xlane.xlu0 %1197
    %vm1199 = vcmp.eq.f32.partialorder %v1196, %v1198
    %v1200 = vsel %vm1199, %v1195, inf
    %1201 = vmin.xlane.f32.xlu0 %v1200
    %v1202 = vpop.xlane.xlu0 %1201
    %v1203 = vcvt.f32.s32 %v1202
    %v1204 = vcvt.f32.s32 %v1198
    %v1205 = vshll.u32 %v1204, 16
    %v1206 = vadd.s32 %v1205, %v1203
    %vm1207 = vcmp.eq.s32.totalorder %v403, %v1101
    %vm1208 = vcmp.eq.s32.totalorder %v403, %v1116
    %vm1209 = vcmp.eq.s32.totalorder %v403, %v1131
    %vm1210 = vcmp.eq.s32.totalorder %v403, %v1146
    %vm1211 = vcmp.eq.s32.totalorder %v403, %v1161
    %vm1212 = vcmp.eq.s32.totalorder %v403, %v1176
    %vm1213 = vcmp.eq.s32.totalorder %v403, %v1191
    %vm1214 = vcmp.eq.s32.totalorder %v403, %v1206
    %v1215 = vsel %vm1207, 1, 0
    %v1216 = vsel %vm1208, 1, 0
    %v1217 = vsel %vm1209, 1, 0
    %v1218 = vsel %vm1210, 1, 0
    %v1219 = vsel %vm1211, 1, 0
    %v1220 = vsel %vm1212, 1, 0
    %v1221 = vsel %vm1213, 1, 0
    %v1222 = vsel %vm1214, 1, 0
    %v1223 = vcvt.s32.f32 %v1215
    %v1224 = vcvt.s32.f32 %v1216
    %v1225 = vcvt.s32.f32 %v1217
    %v1226 = vcvt.s32.f32 %v1218
    %v1227 = vcvt.s32.f32 %v1219
    %v1228 = vcvt.s32.f32 %v1220
    %v1229 = vcvt.s32.f32 %v1221
    %v1230 = vcvt.s32.f32 %v1222
    %v1231 = vmul.f32 %v1223, %v181
    %v1232 = vmul.f32 %v1224, %v185
    %v1233 = vmul.f32 %v1225, %v189
    %v1234 = vmul.f32 %v1226, %v193
    %v1235 = vmul.f32 %v1227, %v197
    %v1236 = vmul.f32 %v1228, %v201
    %v1237 = vmul.f32 %v1229, %v205
    %v1238 = vmul.f32 %v1230, %v209
    %v1239 = vsel %vm404, %v1231, 0.0
    %1240 = vadd.xlane.f32.xlu0 %v1239
    %v1241 = vpop.xlane.xlu0 %1240
    %v1242 = vsel %vm404, %v1232, 0.0
    %1243 = vadd.xlane.f32.xlu0 %v1242
    %v1244 = vpop.xlane.xlu0 %1243
    %v1245 = vsel %vm404, %v1233, 0.0
    %1246 = vadd.xlane.f32.xlu0 %v1245
    %v1247 = vpop.xlane.xlu0 %1246
    %v1248 = vsel %vm404, %v1234, 0.0
    %1249 = vadd.xlane.f32.xlu0 %v1248
    %v1250 = vpop.xlane.xlu0 %1249
    %v1251 = vsel %vm404, %v1235, 0.0
    %1252 = vadd.xlane.f32.xlu0 %v1251
    %v1253 = vpop.xlane.xlu0 %1252
    %v1254 = vsel %vm404, %v1236, 0.0
    %1255 = vadd.xlane.f32.xlu0 %v1254
    %v1256 = vpop.xlane.xlu0 %1255
    %v1257 = vsel %vm404, %v1237, 0.0
    %1258 = vadd.xlane.f32.xlu0 %v1257
    %v1259 = vpop.xlane.xlu0 %1258
    %v1260 = vsel %vm404, %v1238, 0.0
    %1261 = vadd.xlane.f32.xlu0 %v1260
    %v1262 = vpop.xlane.xlu0 %1261
    %v1263 = vmul.f32 %v1223, %v253
    %v1264 = vmul.f32 %v1224, %v257
    %v1265 = vmul.f32 %v1225, %v261
    %v1266 = vmul.f32 %v1226, %v265
    %v1267 = vmul.f32 %v1227, %v269
    %v1268 = vmul.f32 %v1228, %v273
    %v1269 = vmul.f32 %v1229, %v277
    %v1270 = vmul.f32 %v1230, %v281
    %v1271 = vsel %vm404, %v1263, 0.0
    %1272 = vadd.xlane.f32.xlu0 %v1271
    %v1273 = vpop.xlane.xlu0 %1272
    %v1274 = vsel %vm404, %v1264, 0.0
    %1275 = vadd.xlane.f32.xlu0 %v1274
    %v1276 = vpop.xlane.xlu0 %1275
    %v1277 = vsel %vm404, %v1265, 0.0
    %1278 = vadd.xlane.f32.xlu0 %v1277
    %v1279 = vpop.xlane.xlu0 %1278
    %v1280 = vsel %vm404, %v1266, 0.0
    %1281 = vadd.xlane.f32.xlu0 %v1280
    %v1282 = vpop.xlane.xlu0 %1281
    %v1283 = vsel %vm404, %v1267, 0.0
    %1284 = vadd.xlane.f32.xlu0 %v1283
    %v1285 = vpop.xlane.xlu0 %1284
    %v1286 = vsel %vm404, %v1268, 0.0
    %1287 = vadd.xlane.f32.xlu0 %v1286
    %v1288 = vpop.xlane.xlu0 %1287
    %v1289 = vsel %vm404, %v1269, 0.0
    %1290 = vadd.xlane.f32.xlu0 %v1289
    %v1291 = vpop.xlane.xlu0 %1290
    %v1292 = vsel %vm404, %v1270, 0.0
    %1293 = vadd.xlane.f32.xlu0 %v1292
    %v1294 = vpop.xlane.xlu0 %1293
    %v1295 = vmul.f32 %v1223, %v333
    %v1296 = vmul.f32 %v1224, %v337
    %v1297 = vmul.f32 %v1225, %v341
    %v1298 = vmul.f32 %v1226, %v345
    %v1299 = vmul.f32 %v1227, %v349
    %v1300 = vmul.f32 %v1228, %v353
    %v1301 = vmul.f32 %v1229, %v357
    %v1302 = vmul.f32 %v1230, %v361
    %v1303 = vsel %vm404, %v1295, 0.0
    %1304 = vadd.xlane.f32.xlu0 %v1303
    %v1305 = vpop.xlane.xlu0 %1304
    %v1306 = vsel %vm404, %v1296, 0.0
    %1307 = vadd.xlane.f32.xlu0 %v1306
    %v1308 = vpop.xlane.xlu0 %1307
    %v1309 = vsel %vm404, %v1297, 0.0
    %1310 = vadd.xlane.f32.xlu0 %v1309
    %v1311 = vpop.xlane.xlu0 %1310
    %v1312 = vsel %vm404, %v1298, 0.0
    %1313 = vadd.xlane.f32.xlu0 %v1312
    %v1314 = vpop.xlane.xlu0 %1313
    %v1315 = vsel %vm404, %v1299, 0.0
    %1316 = vadd.xlane.f32.xlu0 %v1315
    %v1317 = vpop.xlane.xlu0 %1316
    %v1318 = vsel %vm404, %v1300, 0.0
    %1319 = vadd.xlane.f32.xlu0 %v1318
    %v1320 = vpop.xlane.xlu0 %1319
    %v1321 = vsel %vm404, %v1301, 0.0
    %1322 = vadd.xlane.f32.xlu0 %v1321
    %v1323 = vpop.xlane.xlu0 %1322
    %v1324 = vsel %vm404, %v1302, 0.0
    %1325 = vadd.xlane.f32.xlu0 %v1324
    %v1326 = vpop.xlane.xlu0 %1325
    %v1327 = vsel %vm685, %v1241, %v1273
    %v1328 = vsel %vm685, %v1244, %v1276
    %v1329 = vsel %vm685, %v1247, %v1279
    %v1330 = vsel %vm685, %v1250, %v1282
    %v1331 = vsel %vm685, %v1253, %v1285
    %v1332 = vsel %vm685, %v1256, %v1288
    %v1333 = vsel %vm685, %v1259, %v1291
    %v1334 = vsel %vm685, %v1262, %v1294
    %v1335 = vsel %vm694, %v1327, %v1305
    %v1336 = vsel %vm694, %v1328, %v1308
    %v1337 = vsel %vm694, %v1329, %v1311
    %v1338 = vsel %vm694, %v1330, %v1314
    %v1339 = vsel %vm694, %v1331, %v1317
    %v1340 = vsel %vm694, %v1332, %v1320
    %v1341 = vsel %vm694, %v1333, %v1323
    %v1342 = vsel %vm694, %v1334, %v1326
    %v1343 = vsub.f32 %v1335, %v24
    %v1344 = vsub.f32 %v1336, %v25
    %v1345 = vsub.f32 %v1337, %v26
    %v1346 = vsub.f32 %v1338, %v27
    %v1347 = vsub.f32 %v1339, %v28
    %v1348 = vsub.f32 %v1340, %v29
    %v1349 = vsub.f32 %v1341, %v30
    %v1350 = vsub.f32 %v1342, %v31
    %vm1351 = vcmp.gt.f32.partialorder %v1223, 0.0
    %vm1352 = vcmp.gt.f32.partialorder %v1224, 0.0
    %vm1353 = vcmp.gt.f32.partialorder %v1225, 0.0
    %vm1354 = vcmp.gt.f32.partialorder %v1226, 0.0
    %vm1355 = vcmp.gt.f32.partialorder %v1227, 0.0
    %vm1356 = vcmp.gt.f32.partialorder %v1228, 0.0
    %vm1357 = vcmp.gt.f32.partialorder %v1229, 0.0
    %vm1358 = vcmp.gt.f32.partialorder %v1230, 0.0
    %v1359 = vsel %vm1351, 1e+30, %v1039
    %v1360 = vsel %vm1352, 1e+30, %v1040
    %v1361 = vsel %vm1353, 1e+30, %v1041
    %v1362 = vsel %vm1354, 1e+30, %v1042
    %v1363 = vsel %vm1355, 1e+30, %v1043
    %v1364 = vsel %vm1356, 1e+30, %v1044
    %v1365 = vsel %vm1357, 1e+30, %v1045
    %v1366 = vsel %vm1358, 1e+30, %v1046
    %v1367 = vsel %vm404, %v1359, inf
    %1368 = vmin.xlane.f32.xlu0 %v1367
    %v1369 = vpop.xlane.xlu0 %1368
    %v1370 = vsel %vm404, %v1360, inf
    %1371 = vmin.xlane.f32.xlu0 %v1370
    %v1372 = vpop.xlane.xlu0 %1371
    %v1373 = vsel %vm404, %v1361, inf
    %1374 = vmin.xlane.f32.xlu0 %v1373
    %v1375 = vpop.xlane.xlu0 %1374
    %v1376 = vsel %vm404, %v1362, inf
    %1377 = vmin.xlane.f32.xlu0 %v1376
    %v1378 = vpop.xlane.xlu0 %1377
    %v1379 = vsel %vm404, %v1363, inf
    %1380 = vmin.xlane.f32.xlu0 %v1379
    %v1381 = vpop.xlane.xlu0 %1380
    %v1382 = vsel %vm404, %v1364, inf
    %1383 = vmin.xlane.f32.xlu0 %v1382
    %v1384 = vpop.xlane.xlu0 %1383
    %v1385 = vsel %vm404, %v1365, inf
    %1386 = vmin.xlane.f32.xlu0 %v1385
    %v1387 = vpop.xlane.xlu0 %1386
    %v1388 = vsel %vm404, %v1366, inf
    %1389 = vmin.xlane.f32.xlu0 %v1388
    %v1390 = vpop.xlane.xlu0 %1389
    %vm1391 = vcmp.le.f32.partialorder %v1359, %v1369
    %vm1392 = vcmp.le.f32.partialorder %v1360, %v1372
    %vm1393 = vcmp.le.f32.partialorder %v1361, %v1375
    %vm1394 = vcmp.le.f32.partialorder %v1362, %v1378
    %vm1395 = vcmp.le.f32.partialorder %v1363, %v1381
    %vm1396 = vcmp.le.f32.partialorder %v1364, %v1384
    %vm1397 = vcmp.le.f32.partialorder %v1365, %v1387
    %vm1398 = vcmp.le.f32.partialorder %v1366, %v1390
    %v1399 = vsel %vm1391, %v403, 8
    %v1400 = vsel %vm1392, %v403, 8
    %v1401 = vsel %vm1393, %v403, 8
    %v1402 = vsel %vm1394, %v403, 8
    %v1403 = vsel %vm1395, %v403, 8
    %v1404 = vsel %vm1396, %v403, 8
    %v1405 = vsel %vm1397, %v403, 8
    %v1406 = vsel %vm1398, %v403, 8
    %v1407 = vsel %vm404, %v1399, 2147483647
    %v1408 = vand.u32 %v1407, 65535
    %v1409 = vshra.s32 %v1407, 16
    %v1410 = vcvt.s32.f32 %v1408
    %v1411 = vcvt.s32.f32 %v1409
    %1412 = vmin.xlane.f32.xlu0 %v1411
    %v1413 = vpop.xlane.xlu0 %1412
    %vm1414 = vcmp.eq.f32.partialorder %v1411, %v1413
    %v1415 = vsel %vm1414, %v1410, inf
    %1416 = vmin.xlane.f32.xlu0 %v1415
    %v1417 = vpop.xlane.xlu0 %1416
    %v1418 = vcvt.f32.s32 %v1417
    %v1419 = vcvt.f32.s32 %v1413
    %v1420 = vshll.u32 %v1419, 16
    %v1421 = vadd.s32 %v1420, %v1418
    %v1422 = vsel %vm404, %v1400, 2147483647
    %v1423 = vand.u32 %v1422, 65535
    %v1424 = vshra.s32 %v1422, 16
    %v1425 = vcvt.s32.f32 %v1423
    %v1426 = vcvt.s32.f32 %v1424
    %1427 = vmin.xlane.f32.xlu0 %v1426
    %v1428 = vpop.xlane.xlu0 %1427
    %vm1429 = vcmp.eq.f32.partialorder %v1426, %v1428
    %v1430 = vsel %vm1429, %v1425, inf
    %1431 = vmin.xlane.f32.xlu0 %v1430
    %v1432 = vpop.xlane.xlu0 %1431
    %v1433 = vcvt.f32.s32 %v1432
    %v1434 = vcvt.f32.s32 %v1428
    %v1435 = vshll.u32 %v1434, 16
    %v1436 = vadd.s32 %v1435, %v1433
    %v1437 = vsel %vm404, %v1401, 2147483647
    %v1438 = vand.u32 %v1437, 65535
    %v1439 = vshra.s32 %v1437, 16
    %v1440 = vcvt.s32.f32 %v1438
    %v1441 = vcvt.s32.f32 %v1439
    %1442 = vmin.xlane.f32.xlu0 %v1441
    %v1443 = vpop.xlane.xlu0 %1442
    %vm1444 = vcmp.eq.f32.partialorder %v1441, %v1443
    %v1445 = vsel %vm1444, %v1440, inf
    %1446 = vmin.xlane.f32.xlu0 %v1445
    %v1447 = vpop.xlane.xlu0 %1446
    %v1448 = vcvt.f32.s32 %v1447
    %v1449 = vcvt.f32.s32 %v1443
    %v1450 = vshll.u32 %v1449, 16
    %v1451 = vadd.s32 %v1450, %v1448
    %v1452 = vsel %vm404, %v1402, 2147483647
    %v1453 = vand.u32 %v1452, 65535
    %v1454 = vshra.s32 %v1452, 16
    %v1455 = vcvt.s32.f32 %v1453
    %v1456 = vcvt.s32.f32 %v1454
    %1457 = vmin.xlane.f32.xlu0 %v1456
    %v1458 = vpop.xlane.xlu0 %1457
    %vm1459 = vcmp.eq.f32.partialorder %v1456, %v1458
    %v1460 = vsel %vm1459, %v1455, inf
    %1461 = vmin.xlane.f32.xlu0 %v1460
    %v1462 = vpop.xlane.xlu0 %1461
    %v1463 = vcvt.f32.s32 %v1462
    %v1464 = vcvt.f32.s32 %v1458
    %v1465 = vshll.u32 %v1464, 16
    %v1466 = vadd.s32 %v1465, %v1463
    %v1467 = vsel %vm404, %v1403, 2147483647
    %v1468 = vand.u32 %v1467, 65535
    %v1469 = vshra.s32 %v1467, 16
    %v1470 = vcvt.s32.f32 %v1468
    %v1471 = vcvt.s32.f32 %v1469
    %1472 = vmin.xlane.f32.xlu0 %v1471
    %v1473 = vpop.xlane.xlu0 %1472
    %vm1474 = vcmp.eq.f32.partialorder %v1471, %v1473
    %v1475 = vsel %vm1474, %v1470, inf
    %1476 = vmin.xlane.f32.xlu0 %v1475
    %v1477 = vpop.xlane.xlu0 %1476
    %v1478 = vcvt.f32.s32 %v1477
    %v1479 = vcvt.f32.s32 %v1473
    %v1480 = vshll.u32 %v1479, 16
    %v1481 = vadd.s32 %v1480, %v1478
    %v1482 = vsel %vm404, %v1404, 2147483647
    %v1483 = vand.u32 %v1482, 65535
    %v1484 = vshra.s32 %v1482, 16
    %v1485 = vcvt.s32.f32 %v1483
    %v1486 = vcvt.s32.f32 %v1484
    %1487 = vmin.xlane.f32.xlu0 %v1486
    %v1488 = vpop.xlane.xlu0 %1487
    %vm1489 = vcmp.eq.f32.partialorder %v1486, %v1488
    %v1490 = vsel %vm1489, %v1485, inf
    %1491 = vmin.xlane.f32.xlu0 %v1490
    %v1492 = vpop.xlane.xlu0 %1491
    %v1493 = vcvt.f32.s32 %v1492
    %v1494 = vcvt.f32.s32 %v1488
    %v1495 = vshll.u32 %v1494, 16
    %v1496 = vadd.s32 %v1495, %v1493
    %v1497 = vsel %vm404, %v1405, 2147483647
    %v1498 = vand.u32 %v1497, 65535
    %v1499 = vshra.s32 %v1497, 16
    %v1500 = vcvt.s32.f32 %v1498
    %v1501 = vcvt.s32.f32 %v1499
    %1502 = vmin.xlane.f32.xlu0 %v1501
    %v1503 = vpop.xlane.xlu0 %1502
    %vm1504 = vcmp.eq.f32.partialorder %v1501, %v1503
    %v1505 = vsel %vm1504, %v1500, inf
    %1506 = vmin.xlane.f32.xlu0 %v1505
    %v1507 = vpop.xlane.xlu0 %1506
    %v1508 = vcvt.f32.s32 %v1507
    %v1509 = vcvt.f32.s32 %v1503
    %v1510 = vshll.u32 %v1509, 16
    %v1511 = vadd.s32 %v1510, %v1508
    %v1512 = vsel %vm404, %v1406, 2147483647
    %v1513 = vand.u32 %v1512, 65535
    %v1514 = vshra.s32 %v1512, 16
    %v1515 = vcvt.s32.f32 %v1513
    %v1516 = vcvt.s32.f32 %v1514
    %1517 = vmin.xlane.f32.xlu0 %v1516
    %v1518 = vpop.xlane.xlu0 %1517
    %vm1519 = vcmp.eq.f32.partialorder %v1516, %v1518
    %v1520 = vsel %vm1519, %v1515, inf
    %1521 = vmin.xlane.f32.xlu0 %v1520
    %v1522 = vpop.xlane.xlu0 %1521
    %v1523 = vcvt.f32.s32 %v1522
    %v1524 = vcvt.f32.s32 %v1518
    %v1525 = vshll.u32 %v1524, 16
    %v1526 = vadd.s32 %v1525, %v1523
    %vm1527 = vcmp.eq.s32.totalorder %v403, %v1421
    %vm1528 = vcmp.eq.s32.totalorder %v403, %v1436
    %vm1529 = vcmp.eq.s32.totalorder %v403, %v1451
    %vm1530 = vcmp.eq.s32.totalorder %v403, %v1466
    %vm1531 = vcmp.eq.s32.totalorder %v403, %v1481
    %vm1532 = vcmp.eq.s32.totalorder %v403, %v1496
    %vm1533 = vcmp.eq.s32.totalorder %v403, %v1511
    %vm1534 = vcmp.eq.s32.totalorder %v403, %v1526
    %v1535 = vsel %vm1527, 1, 0
    %v1536 = vsel %vm1528, 1, 0
    %v1537 = vsel %vm1529, 1, 0
    %v1538 = vsel %vm1530, 1, 0
    %v1539 = vsel %vm1531, 1, 0
    %v1540 = vsel %vm1532, 1, 0
    %v1541 = vsel %vm1533, 1, 0
    %v1542 = vsel %vm1534, 1, 0
    %v1543 = vcvt.s32.f32 %v1535
    %v1544 = vcvt.s32.f32 %v1536
    %v1545 = vcvt.s32.f32 %v1537
    %v1546 = vcvt.s32.f32 %v1538
    %v1547 = vcvt.s32.f32 %v1539
    %v1548 = vcvt.s32.f32 %v1540
    %v1549 = vcvt.s32.f32 %v1541
    %v1550 = vcvt.s32.f32 %v1542
    %v1551 = vmul.f32 %v1543, %v181
    %v1552 = vmul.f32 %v1544, %v185
    %v1553 = vmul.f32 %v1545, %v189
    %v1554 = vmul.f32 %v1546, %v193
    %v1555 = vmul.f32 %v1547, %v197
    %v1556 = vmul.f32 %v1548, %v201
    %v1557 = vmul.f32 %v1549, %v205
    %v1558 = vmul.f32 %v1550, %v209
    %v1559 = vsel %vm404, %v1551, 0.0
    %1560 = vadd.xlane.f32.xlu0 %v1559
    %v1561 = vpop.xlane.xlu0 %1560
    %v1562 = vsel %vm404, %v1552, 0.0
    %1563 = vadd.xlane.f32.xlu0 %v1562
    %v1564 = vpop.xlane.xlu0 %1563
    %v1565 = vsel %vm404, %v1553, 0.0
    %1566 = vadd.xlane.f32.xlu0 %v1565
    %v1567 = vpop.xlane.xlu0 %1566
    %v1568 = vsel %vm404, %v1554, 0.0
    %1569 = vadd.xlane.f32.xlu0 %v1568
    %v1570 = vpop.xlane.xlu0 %1569
    %v1571 = vsel %vm404, %v1555, 0.0
    %1572 = vadd.xlane.f32.xlu0 %v1571
    %v1573 = vpop.xlane.xlu0 %1572
    %v1574 = vsel %vm404, %v1556, 0.0
    %1575 = vadd.xlane.f32.xlu0 %v1574
    %v1576 = vpop.xlane.xlu0 %1575
    %v1577 = vsel %vm404, %v1557, 0.0
    %1578 = vadd.xlane.f32.xlu0 %v1577
    %v1579 = vpop.xlane.xlu0 %1578
    %v1580 = vsel %vm404, %v1558, 0.0
    %1581 = vadd.xlane.f32.xlu0 %v1580
    %v1582 = vpop.xlane.xlu0 %1581
    %v1583 = vmul.f32 %v1543, %v253
    %v1584 = vmul.f32 %v1544, %v257
    %v1585 = vmul.f32 %v1545, %v261
    %v1586 = vmul.f32 %v1546, %v265
    %v1587 = vmul.f32 %v1547, %v269
    %v1588 = vmul.f32 %v1548, %v273
    %v1589 = vmul.f32 %v1549, %v277
    %v1590 = vmul.f32 %v1550, %v281
    %v1591 = vsel %vm404, %v1583, 0.0
    %1592 = vadd.xlane.f32.xlu0 %v1591
    %v1593 = vpop.xlane.xlu0 %1592
    %v1594 = vsel %vm404, %v1584, 0.0
    %1595 = vadd.xlane.f32.xlu0 %v1594
    %v1596 = vpop.xlane.xlu0 %1595
    %v1597 = vsel %vm404, %v1585, 0.0
    %1598 = vadd.xlane.f32.xlu0 %v1597
    %v1599 = vpop.xlane.xlu0 %1598
    %v1600 = vsel %vm404, %v1586, 0.0
    %1601 = vadd.xlane.f32.xlu0 %v1600
    %v1602 = vpop.xlane.xlu0 %1601
    %v1603 = vsel %vm404, %v1587, 0.0
    %1604 = vadd.xlane.f32.xlu0 %v1603
    %v1605 = vpop.xlane.xlu0 %1604
    %v1606 = vsel %vm404, %v1588, 0.0
    %1607 = vadd.xlane.f32.xlu0 %v1606
    %v1608 = vpop.xlane.xlu0 %1607
    %v1609 = vsel %vm404, %v1589, 0.0
    %1610 = vadd.xlane.f32.xlu0 %v1609
    %v1611 = vpop.xlane.xlu0 %1610
    %v1612 = vsel %vm404, %v1590, 0.0
    %1613 = vadd.xlane.f32.xlu0 %v1612
    %v1614 = vpop.xlane.xlu0 %1613
    %v1615 = vmul.f32 %v1543, %v333
    %v1616 = vmul.f32 %v1544, %v337
    %v1617 = vmul.f32 %v1545, %v341
    %v1618 = vmul.f32 %v1546, %v345
    %v1619 = vmul.f32 %v1547, %v349
    %v1620 = vmul.f32 %v1548, %v353
    %v1621 = vmul.f32 %v1549, %v357
    %v1622 = vmul.f32 %v1550, %v361
    %v1623 = vsel %vm404, %v1615, 0.0
    %1624 = vadd.xlane.f32.xlu0 %v1623
    %v1625 = vpop.xlane.xlu0 %1624
    %v1626 = vsel %vm404, %v1616, 0.0
    %1627 = vadd.xlane.f32.xlu0 %v1626
    %v1628 = vpop.xlane.xlu0 %1627
    %v1629 = vsel %vm404, %v1617, 0.0
    %1630 = vadd.xlane.f32.xlu0 %v1629
    %v1631 = vpop.xlane.xlu0 %1630
    %v1632 = vsel %vm404, %v1618, 0.0
    %1633 = vadd.xlane.f32.xlu0 %v1632
    %v1634 = vpop.xlane.xlu0 %1633
    %v1635 = vsel %vm404, %v1619, 0.0
    %1636 = vadd.xlane.f32.xlu0 %v1635
    %v1637 = vpop.xlane.xlu0 %1636
    %v1638 = vsel %vm404, %v1620, 0.0
    %1639 = vadd.xlane.f32.xlu0 %v1638
    %v1640 = vpop.xlane.xlu0 %1639
    %v1641 = vsel %vm404, %v1621, 0.0
    %1642 = vadd.xlane.f32.xlu0 %v1641
    %v1643 = vpop.xlane.xlu0 %1642
    %v1644 = vsel %vm404, %v1622, 0.0
    %1645 = vadd.xlane.f32.xlu0 %v1644
    %v1646 = vpop.xlane.xlu0 %1645
    %v1647 = vsel %vm685, %v1561, %v1593
    %v1648 = vsel %vm685, %v1564, %v1596
    %v1649 = vsel %vm685, %v1567, %v1599
    %v1650 = vsel %vm685, %v1570, %v1602
    %v1651 = vsel %vm685, %v1573, %v1605
    %v1652 = vsel %vm685, %v1576, %v1608
    %v1653 = vsel %vm685, %v1579, %v1611
    %v1654 = vsel %vm685, %v1582, %v1614
    %v1655 = vsel %vm694, %v1647, %v1625
    %v1656 = vsel %vm694, %v1648, %v1628
    %v1657 = vsel %vm694, %v1649, %v1631
    %v1658 = vsel %vm694, %v1650, %v1634
    %v1659 = vsel %vm694, %v1651, %v1637
    %v1660 = vsel %vm694, %v1652, %v1640
    %v1661 = vsel %vm694, %v1653, %v1643
    %v1662 = vsel %vm694, %v1654, %v1646
    %v1663 = vsub.f32 %v1655, %v24
    %v1664 = vsub.f32 %v1656, %v25
    %v1665 = vsub.f32 %v1657, %v26
    %v1666 = vsub.f32 %v1658, %v27
    %v1667 = vsub.f32 %v1659, %v28
    %v1668 = vsub.f32 %v1660, %v29
    %v1669 = vsub.f32 %v1661, %v30
    %v1670 = vsub.f32 %v1662, %v31
    %v1671 = vmul.f32 %v703, %v703
    %v1672 = vmul.f32 %v704, %v704
    %v1673 = vmul.f32 %v705, %v705
    %v1674 = vmul.f32 %v706, %v706
    %v1675 = vmul.f32 %v707, %v707
    %v1676 = vmul.f32 %v708, %v708
    %v1677 = vmul.f32 %v709, %v709
    %v1678 = vmul.f32 %v710, %v710
    %v1679 = vsel %vm48, %v1671, 0.0
    %1680 = vadd.xlane.f32.xlu0 %v1679
    %v1681 = vpop.xlane.xlu0 %1680
    %v1682 = vsel %vm48, %v1672, 0.0
    %1683 = vadd.xlane.f32.xlu0 %v1682
    %v1684 = vpop.xlane.xlu0 %1683
    %v1685 = vsel %vm48, %v1673, 0.0
    %1686 = vadd.xlane.f32.xlu0 %v1685
    %v1687 = vpop.xlane.xlu0 %1686
    %v1688 = vsel %vm48, %v1674, 0.0
    %1689 = vadd.xlane.f32.xlu0 %v1688
    %v1690 = vpop.xlane.xlu0 %1689
    %v1691 = vsel %vm48, %v1675, 0.0
    %1692 = vadd.xlane.f32.xlu0 %v1691
    %v1693 = vpop.xlane.xlu0 %1692
    %v1694 = vsel %vm48, %v1676, 0.0
    %1695 = vadd.xlane.f32.xlu0 %v1694
    %v1696 = vpop.xlane.xlu0 %1695
    %v1697 = vsel %vm48, %v1677, 0.0
    %1698 = vadd.xlane.f32.xlu0 %v1697
    %v1699 = vpop.xlane.xlu0 %1698
    %v1700 = vsel %vm48, %v1678, 0.0
    %1701 = vadd.xlane.f32.xlu0 %v1700
    %v1702 = vpop.xlane.xlu0 %1701
    %v1703 = vmul.f32 %v1023, %v1023
    %v1704 = vmul.f32 %v1024, %v1024
    %v1705 = vmul.f32 %v1025, %v1025
    %v1706 = vmul.f32 %v1026, %v1026
    %v1707 = vmul.f32 %v1027, %v1027
    %v1708 = vmul.f32 %v1028, %v1028
    %v1709 = vmul.f32 %v1029, %v1029
    %v1710 = vmul.f32 %v1030, %v1030
    %v1711 = vsel %vm48, %v1703, 0.0
    %1712 = vadd.xlane.f32.xlu0 %v1711
    %v1713 = vpop.xlane.xlu0 %1712
    %v1714 = vsel %vm48, %v1704, 0.0
    %1715 = vadd.xlane.f32.xlu0 %v1714
    %v1716 = vpop.xlane.xlu0 %1715
    %v1717 = vsel %vm48, %v1705, 0.0
    %1718 = vadd.xlane.f32.xlu0 %v1717
    %v1719 = vpop.xlane.xlu0 %1718
    %v1720 = vsel %vm48, %v1706, 0.0
    %1721 = vadd.xlane.f32.xlu0 %v1720
    %v1722 = vpop.xlane.xlu0 %1721
    %v1723 = vsel %vm48, %v1707, 0.0
    %1724 = vadd.xlane.f32.xlu0 %v1723
    %v1725 = vpop.xlane.xlu0 %1724
    %v1726 = vsel %vm48, %v1708, 0.0
    %1727 = vadd.xlane.f32.xlu0 %v1726
    %v1728 = vpop.xlane.xlu0 %1727
    %v1729 = vsel %vm48, %v1709, 0.0
    %1730 = vadd.xlane.f32.xlu0 %v1729
    %v1731 = vpop.xlane.xlu0 %1730
    %v1732 = vsel %vm48, %v1710, 0.0
    %1733 = vadd.xlane.f32.xlu0 %v1732
    %v1734 = vpop.xlane.xlu0 %1733
    %v1735 = vmul.f32 %v1343, %v1343
    %v1736 = vmul.f32 %v1344, %v1344
    %v1737 = vmul.f32 %v1345, %v1345
    %v1738 = vmul.f32 %v1346, %v1346
    %v1739 = vmul.f32 %v1347, %v1347
    %v1740 = vmul.f32 %v1348, %v1348
    %v1741 = vmul.f32 %v1349, %v1349
    %v1742 = vmul.f32 %v1350, %v1350
    %v1743 = vsel %vm48, %v1735, 0.0
    %1744 = vadd.xlane.f32.xlu0 %v1743
    %v1745 = vpop.xlane.xlu0 %1744
    %v1746 = vsel %vm48, %v1736, 0.0
    %1747 = vadd.xlane.f32.xlu0 %v1746
    %v1748 = vpop.xlane.xlu0 %1747
    %v1749 = vsel %vm48, %v1737, 0.0
    %1750 = vadd.xlane.f32.xlu0 %v1749
    %v1751 = vpop.xlane.xlu0 %1750
    %v1752 = vsel %vm48, %v1738, 0.0
    %1753 = vadd.xlane.f32.xlu0 %v1752
    %v1754 = vpop.xlane.xlu0 %1753
    %v1755 = vsel %vm48, %v1739, 0.0
    %1756 = vadd.xlane.f32.xlu0 %v1755
    %v1757 = vpop.xlane.xlu0 %1756
    %v1758 = vsel %vm48, %v1740, 0.0
    %1759 = vadd.xlane.f32.xlu0 %v1758
    %v1760 = vpop.xlane.xlu0 %1759
    %v1761 = vsel %vm48, %v1741, 0.0
    %1762 = vadd.xlane.f32.xlu0 %v1761
    %v1763 = vpop.xlane.xlu0 %1762
    %v1764 = vsel %vm48, %v1742, 0.0
    %1765 = vadd.xlane.f32.xlu0 %v1764
    %v1766 = vpop.xlane.xlu0 %1765
    %v1767 = vmul.f32 %v1663, %v1663
    %v1768 = vmul.f32 %v1664, %v1664
    %v1769 = vmul.f32 %v1665, %v1665
    %v1770 = vmul.f32 %v1666, %v1666
    %v1771 = vmul.f32 %v1667, %v1667
    %v1772 = vmul.f32 %v1668, %v1668
    %v1773 = vmul.f32 %v1669, %v1669
    %v1774 = vmul.f32 %v1670, %v1670
    %v1775 = vsel %vm48, %v1767, 0.0
    %1776 = vadd.xlane.f32.xlu0 %v1775
    %v1777 = vpop.xlane.xlu0 %1776
    %v1778 = vsel %vm48, %v1768, 0.0
    %1779 = vadd.xlane.f32.xlu0 %v1778
    %v1780 = vpop.xlane.xlu0 %1779
    %v1781 = vsel %vm48, %v1769, 0.0
    %1782 = vadd.xlane.f32.xlu0 %v1781
    %v1783 = vpop.xlane.xlu0 %1782
    %v1784 = vsel %vm48, %v1770, 0.0
    %1785 = vadd.xlane.f32.xlu0 %v1784
    %v1786 = vpop.xlane.xlu0 %1785
    %v1787 = vsel %vm48, %v1771, 0.0
    %1788 = vadd.xlane.f32.xlu0 %v1787
    %v1789 = vpop.xlane.xlu0 %1788
    %v1790 = vsel %vm48, %v1772, 0.0
    %1791 = vadd.xlane.f32.xlu0 %v1790
    %v1792 = vpop.xlane.xlu0 %1791
    %v1793 = vsel %vm48, %v1773, 0.0
    %1794 = vadd.xlane.f32.xlu0 %v1793
    %v1795 = vpop.xlane.xlu0 %1794
    %v1796 = vsel %vm48, %v1774, 0.0
    %1797 = vadd.xlane.f32.xlu0 %v1796
    %v1798 = vpop.xlane.xlu0 %1797
    %v1799 = vmax.f32 %v1681, %v1713
    %v1800 = vmax.f32 %v1684, %v1716
    %v1801 = vmax.f32 %v1687, %v1719
    %v1802 = vmax.f32 %v1690, %v1722
    %v1803 = vmax.f32 %v1693, %v1725
    %v1804 = vmax.f32 %v1696, %v1728
    %v1805 = vmax.f32 %v1699, %v1731
    %v1806 = vmax.f32 %v1702, %v1734
    %v1807 = vmax.f32 %v1799, %v1745
    %v1808 = vmax.f32 %v1800, %v1748
    %v1809 = vmax.f32 %v1801, %v1751
    %v1810 = vmax.f32 %v1802, %v1754
    %v1811 = vmax.f32 %v1803, %v1757
    %v1812 = vmax.f32 %v1804, %v1760
    %v1813 = vmax.f32 %v1805, %v1763
    %v1814 = vmax.f32 %v1806, %v1766
    %v1815 = vmax.f32 %v1807, %v1777
    %v1816 = vmax.f32 %v1808, %v1780
    %v1817 = vmax.f32 %v1809, %v1783
    %v1818 = vmax.f32 %v1810, %v1786
    %v1819 = vmax.f32 %v1811, %v1789
    %v1820 = vmax.f32 %v1812, %v1792
    %v1821 = vmax.f32 %v1813, %v1795
    %v1822 = vmax.f32 %v1814, %v1798
    %v1823 = vmax.f32 %v1815, 1e-16
    %v1824 = vmax.f32 %v1816, 1e-16
    %v1825 = vmax.f32 %v1817, 1e-16
    %v1826 = vmax.f32 %v1818, 1e-16
    %v1827 = vmax.f32 %v1819, 1e-16
    %v1828 = vmax.f32 %v1820, 1e-16
    %v1829 = vmax.f32 %v1821, 1e-16
    %v1830 = vmax.f32 %v1822, 1e-16
    %v1831 = vrsqrt.pop %v1823
    %v1832 = vrsqrt.pop %v1824
    %v1833 = vrsqrt.pop %v1825
    %v1834 = vrsqrt.pop %v1826
    %v1835 = vrsqrt.pop %v1827
    %v1836 = vrsqrt.pop %v1828
    %v1837 = vrsqrt.pop %v1829
    %v1838 = vrsqrt.pop %v1830
    %v1839 = vmul.f32 %v703, %v1831
    %v1840 = vmul.f32 %v704, %v1832
    %v1841 = vmul.f32 %v705, %v1833
    %v1842 = vmul.f32 %v706, %v1834
    %v1843 = vmul.f32 %v707, %v1835
    %v1844 = vmul.f32 %v708, %v1836
    %v1845 = vmul.f32 %v709, %v1837
    %v1846 = vmul.f32 %v710, %v1838
    %v1847 = vld [vmem:[%s2] sm:$0x7]
    %v1848 = vld [vmem:[%s3] sm:$0x1]
    %v1850 = vlaneseq
    %v1851 = vshrl.u32 %v1850, 7
    %v1852 = vsub.s32 0, %v1851
    %v1853 = vrot.slane %v1848, %v1852
    %v1856 = vsel %vm48, %v1839, 0
    %v1859 = vsel %vm48, %v1840, 0
    %v1862 = vsel %vm48, %v1841, 0
    %v1865 = vsel %vm48, %v1842, 0
    %v1868 = vsel %vm48, %v1843, 0
    %v1871 = vsel %vm48, %v1844, 0
    %v1874 = vsel %vm48, %v1845, 0
    %v1877 = vsel %vm48, %v1846, 0
    %vm1879 = vcmask 1042432
    %v1881 = vsel %vm1879, %v1847, 0
    %1883 = vmatprep.subr.mxu0 0.0
    %1884 = vmatpush1.msra.mxu0 %v1881
    %1885 = vmatprep.subr.mxu0 0.0
    %1886 = vmatpush1.msra.mxu0 0.0
    %1887 = vmatprep.subr.mxu0 0.0
    %1888 = vmatpush1.msra.mxu0 0.0
    %1889 = vmatprep.subr.mxu0 0.0
    %1890 = vmatpush1.msra.mxu0 0.0
    %1891 = vmatprep.subr.mxu0 0.0
    %1892 = vmatpush1.msra.mxu0 0.0
    %1893 = vmatprep.subr.mxu0 0.0
    %1894 = vmatpush1.msra.mxu0 0.0
    %1895 = vmatprep.subr.mxu0 0.0
    %1896 = vmatpush1.msra.mxu0 0.0
    %1897 = vmatprep.subr.mxu0 0.0
    %1898 = vmatpush1.msra.mxu0 0.0
    %1899 = vmatprep.subr.mxu0 0.0
    %1900 = vmatpush1.msra.mxu0 0.0
    %1901 = vmatprep.subr.mxu0 0.0
    %1902 = vmatpush1.msra.mxu0 0.0
    %1903 = vmatprep.subr.mxu0 0.0
    %1904 = vmatpush1.msra.mxu0 0.0
    %1905 = vmatprep.subr.mxu0 0.0
    %1906 = vmatpush1.msra.mxu0 0.0
    %1907 = vmatprep.subr.mxu0 0.0
    %1908 = vmatpush1.msra.mxu0 0.0
    %1909 = vmatprep.subr.mxu0 0.0
    %1910 = vmatpush1.msra.mxu0 0.0
    %1911 = vmatprep.subr.mxu0 0.0
    %1912 = vmatpush1.msra.mxu0 0.0
    %1913 = vmatprep.subr.mxu0 0.0
    %1914 = vmatpush1.msra.mxu0 0.0
    %1915 = vmatprep.subr.mxu0 0.0
    %1916 = vmatpush1.msra.mxu0 0.0
    %1917 = vmatprep.subr.mxu0 0.0
    %1918 = vmatpush1.msra.mxu0 0.0
    %1919 = vmatprep.subr.mxu0 0.0
    %1920 = vmatpush1.msra.mxu0 0.0
    %1921 = vmatprep.subr.mxu0 0.0
    %1922 = vmatpush1.msra.mxu0 0.0
    %1923 = vmatprep.subr.mxu0 0.0
    %1924 = vmatpush1.msra.mxu0 0.0
    %1925 = vmatprep.subr.mxu0 0.0
    %1926 = vmatpush1.msra.mxu0 0.0
    %1927 = vmatprep.subr.mxu0 0.0
    %1928 = vmatpush1.msra.mxu0 0.0
    %1929 = vmatprep.subr.mxu0 0.0
    %1930 = vmatpush1.msra.mxu0 0.0
    %1931 = vmatprep.subr.mxu0 0.0
    %1932 = vmatpush1.msra.mxu0 0.0
    %1933 = vmatprep.subr.mxu0 0.0
    %1934 = vmatpush1.msra.mxu0 0.0
    %1935 = vmatprep.subr.mxu0 0.0
    %1936 = vmatpush1.msra.mxu0 0.0
    %1937 = vmatprep.subr.mxu0 0.0
    %1938 = vmatpush1.msra.mxu0 0.0
    %1939 = vmatprep.subr.mxu0 0.0
    %1940 = vmatpush1.msra.mxu0 0.0
    %1941 = vmatprep.subr.mxu0 0.0
    %1942 = vmatpush1.msra.mxu0 0.0
    %1943 = vmatprep.subr.mxu0 0.0
    %1944 = vmatpush1.msra.mxu0 0.0
    %1945 = vmatprep.subr.mxu0 0.0
    %1946 = vmatpush1.msra.mxu0 0.0
    %1947 = vmatprep.mubr.f32.mxu0 0.0
    %1948 = vmatmul.mubr.f32.gmra.mrb[0].mxu0 %v1856
    %v1949 = vpop.f32.mrb[0].mxu0
    %v1950 = vadd.f32 %v1853, %v1949
    %v1951 = vpop.f32.mrb[0].mxu0
    %1952 = vmatprep.mubr.f32.mxu0 0.0
    %1953 = vmatmul.mubr.f32.gmra.mrb[0].mxu0 %v1859
    %v1954 = vpop.f32.mrb[0].mxu0
    %v1955 = vadd.f32 %v1853, %v1954
    %v1956 = vpop.f32.mrb[0].mxu0
    %1957 = vmatprep.mubr.f32.mxu0 0.0
    %1958 = vmatmul.mubr.f32.gmra.mrb[0].mxu0 %v1862
    %v1959 = vpop.f32.mrb[0].mxu0
    %v1960 = vadd.f32 %v1853, %v1959
    %v1961 = vpop.f32.mrb[0].mxu0
    %1962 = vmatprep.mubr.f32.mxu0 0.0
    %1963 = vmatmul.mubr.f32.gmra.mrb[0].mxu0 %v1865
    %v1964 = vpop.f32.mrb[0].mxu0
    %v1965 = vadd.f32 %v1853, %v1964
    %v1966 = vpop.f32.mrb[0].mxu0
    %1967 = vmatprep.mubr.f32.mxu0 0.0
    %1968 = vmatmul.mubr.f32.gmra.mrb[0].mxu0 %v1868
    %v1969 = vpop.f32.mrb[0].mxu0
    %v1970 = vadd.f32 %v1853, %v1969
    %v1971 = vpop.f32.mrb[0].mxu0
    %1972 = vmatprep.mubr.f32.mxu0 0.0
    %1973 = vmatmul.mubr.f32.gmra.mrb[0].mxu0 %v1871
    %v1974 = vpop.f32.mrb[0].mxu0
    %v1975 = vadd.f32 %v1853, %v1974
    %v1976 = vpop.f32.mrb[0].mxu0
    %1977 = vmatprep.mubr.f32.mxu0 0.0
    %1978 = vmatmul.mubr.f32.gmra.mrb[0].mxu0 %v1874
    %v1979 = vpop.f32.mrb[0].mxu0
    %v1980 = vadd.f32 %v1853, %v1979
    %v1981 = vpop.f32.mrb[0].mxu0
    %1982 = vmatprep.mubr.f32.mxu0 0.0
    %1983 = vmatmul.mubr.f32.gmra.mrb[0].mxu0 %v1877
    %v1984 = vpop.f32.mrb[0].mxu0
    %v1985 = vadd.f32 %v1853, %v1984
    %v1986 = vpop.f32.mrb[0].mxu0
    %1987 = vdwg.mxu0
    %v1988 = vmax.f32 %v1950, 0.0
    %v1989 = vmax.f32 %v1955, 0.0
    %v1990 = vmax.f32 %v1960, 0.0
    %v1991 = vmax.f32 %v1965, 0.0
    %v1992 = vmax.f32 %v1970, 0.0
    %v1993 = vmax.f32 %v1975, 0.0
    %v1994 = vmax.f32 %v1980, 0.0
    %v1995 = vmax.f32 %v1985, 0.0
    %v1996 = vld [vmem:[%s4] sm:$0xff]
    %v1997 = vld [vmem:[%s4 + $0x8] sm:$0xff]
    %v1998 = vld [vmem:[%s5] sm:$0x1]
    %v2000 = vlaneseq
    %v2001 = vshrl.u32 %v2000, 7
    %v2002 = vsub.s32 0, %v2001
    %v2003 = vrot.slane %v1998, %v2002
    %vm2005 = vcmask 130048
    %v2007 = vsel %vm2005, %v1988, 0
    %v2010 = vsel %vm2005, %v1989, 0
    %v2013 = vsel %vm2005, %v1990, 0
    %v2016 = vsel %vm2005, %v1991, 0
    %v2019 = vsel %vm2005, %v1992, 0
    %v2022 = vsel %vm2005, %v1993, 0
    %v2025 = vsel %vm2005, %v1994, 0
    %v2028 = vsel %vm2005, %v1995, 0
    %2030 = vmatprep.subr.mxu0 0.0
    %2031 = vmatpush1.msra.mxu0 %v1996
    %2032 = vmatprep.subr.mxu0 0.0
    %2033 = vmatpush1.msra.mxu0 %v1997
    %2034 = vmatprep.subr.mxu0 0.0
    %2035 = vmatpush1.msra.mxu0 0.0
    %2036 = vmatprep.subr.mxu0 0.0
    %2037 = vmatpush1.msra.mxu0 0.0
    %2038 = vmatprep.subr.mxu0 0.0
    %2039 = vmatpush1.msra.mxu0 0.0
    %2040 = vmatprep.subr.mxu0 0.0
    %2041 = vmatpush1.msra.mxu0 0.0
    %2042 = vmatprep.subr.mxu0 0.0
    %2043 = vmatpush1.msra.mxu0 0.0
    %2044 = vmatprep.subr.mxu0 0.0
    %2045 = vmatpush1.msra.mxu0 0.0
    %2046 = vmatprep.subr.mxu0 0.0
    %2047 = vmatpush1.msra.mxu0 0.0
    %2048 = vmatprep.subr.mxu0 0.0
    %2049 = vmatpush1.msra.mxu0 0.0
    %2050 = vmatprep.subr.mxu0 0.0
    %2051 = vmatpush1.msra.mxu0 0.0
    %2052 = vmatprep.subr.mxu0 0.0
    %2053 = vmatpush1.msra.mxu0 0.0
    %2054 = vmatprep.subr.mxu0 0.0
    %2055 = vmatpush1.msra.mxu0 0.0
    %2056 = vmatprep.subr.mxu0 0.0
    %2057 = vmatpush1.msra.mxu0 0.0
    %2058 = vmatprep.subr.mxu0 0.0
    %2059 = vmatpush1.msra.mxu0 0.0
    %2060 = vmatprep.subr.mxu0 0.0
    %2061 = vmatpush1.msra.mxu0 0.0
    %2062 = vmatprep.subr.mxu0 0.0
    %2063 = vmatpush1.msra.mxu0 0.0
    %2064 = vmatprep.subr.mxu0 0.0
    %2065 = vmatpush1.msra.mxu0 0.0
    %2066 = vmatprep.subr.mxu0 0.0
    %2067 = vmatpush1.msra.mxu0 0.0
    %2068 = vmatprep.subr.mxu0 0.0
    %2069 = vmatpush1.msra.mxu0 0.0
    %2070 = vmatprep.subr.mxu0 0.0
    %2071 = vmatpush1.msra.mxu0 0.0
    %2072 = vmatprep.subr.mxu0 0.0
    %2073 = vmatpush1.msra.mxu0 0.0
    %2074 = vmatprep.subr.mxu0 0.0
    %2075 = vmatpush1.msra.mxu0 0.0
    %2076 = vmatprep.subr.mxu0 0.0
    %2077 = vmatpush1.msra.mxu0 0.0
    %2078 = vmatprep.subr.mxu0 0.0
    %2079 = vmatpush1.msra.mxu0 0.0
    %2080 = vmatprep.subr.mxu0 0.0
    %2081 = vmatpush1.msra.mxu0 0.0
    %2082 = vmatprep.subr.mxu0 0.0
    %2083 = vmatpush1.msra.mxu0 0.0
    %2084 = vmatprep.subr.mxu0 0.0
    %2085 = vmatpush1.msra.mxu0 0.0
    %2086 = vmatprep.subr.mxu0 0.0
    %2087 = vmatpush1.msra.mxu0 0.0
    %2088 = vmatprep.subr.mxu0 0.0
    %2089 = vmatpush1.msra.mxu0 0.0
    %2090 = vmatprep.subr.mxu0 0.0
    %2091 = vmatpush1.msra.mxu0 0.0
    %2092 = vmatprep.subr.mxu0 0.0
    %2093 = vmatpush1.msra.mxu0 0.0
    %2094 = vmatprep.mubr.f32.mxu0 0.0
    %2095 = vmatmul.mubr.f32.gmra.mrb[0].mxu0 %v2007
    %v2096 = vpop.f32.mrb[0].mxu0
    %v2097 = vadd.f32 %v2003, %v2096
    %v2098 = vpop.f32.mrb[0].mxu0
    %2099 = vmatprep.mubr.f32.mxu0 0.0
    %2100 = vmatmul.mubr.f32.gmra.mrb[0].mxu0 %v2010
    %v2101 = vpop.f32.mrb[0].mxu0
    %v2102 = vadd.f32 %v2003, %v2101
    %v2103 = vpop.f32.mrb[0].mxu0
    %2104 = vmatprep.mubr.f32.mxu0 0.0
    %2105 = vmatmul.mubr.f32.gmra.mrb[0].mxu0 %v2013
    %v2106 = vpop.f32.mrb[0].mxu0
    %v2107 = vadd.f32 %v2003, %v2106
    %v2108 = vpop.f32.mrb[0].mxu0
    %2109 = vmatprep.mubr.f32.mxu0 0.0
    %2110 = vmatmul.mubr.f32.gmra.mrb[0].mxu0 %v2016
    %v2111 = vpop.f32.mrb[0].mxu0
    %v2112 = vadd.f32 %v2003, %v2111
    %v2113 = vpop.f32.mrb[0].mxu0
    %2114 = vmatprep.mubr.f32.mxu0 0.0
    %2115 = vmatmul.mubr.f32.gmra.mrb[0].mxu0 %v2019
    %v2116 = vpop.f32.mrb[0].mxu0
    %v2117 = vadd.f32 %v2003, %v2116
    %v2118 = vpop.f32.mrb[0].mxu0
    %2119 = vmatprep.mubr.f32.mxu0 0.0
    %2120 = vmatmul.mubr.f32.gmra.mrb[0].mxu0 %v2022
    %v2121 = vpop.f32.mrb[0].mxu0
    %v2122 = vadd.f32 %v2003, %v2121
    %v2123 = vpop.f32.mrb[0].mxu0
    %2124 = vmatprep.mubr.f32.mxu0 0.0
    %2125 = vmatmul.mubr.f32.gmra.mrb[0].mxu0 %v2025
    %v2126 = vpop.f32.mrb[0].mxu0
    %v2127 = vadd.f32 %v2003, %v2126
    %v2128 = vpop.f32.mrb[0].mxu0
    %2129 = vmatprep.mubr.f32.mxu0 0.0
    %2130 = vmatmul.mubr.f32.gmra.mrb[0].mxu0 %v2028
    %v2131 = vpop.f32.mrb[0].mxu0
    %v2132 = vadd.f32 %v2003, %v2131
    %v2133 = vpop.f32.mrb[0].mxu0
    %2134 = vdwg.mxu0
    %v2135 = vmul.f32 %v1023, %v1831
    %v2136 = vmul.f32 %v1024, %v1832
    %v2137 = vmul.f32 %v1025, %v1833
    %v2138 = vmul.f32 %v1026, %v1834
    %v2139 = vmul.f32 %v1027, %v1835
    %v2140 = vmul.f32 %v1028, %v1836
    %v2141 = vmul.f32 %v1029, %v1837
    %v2142 = vmul.f32 %v1030, %v1838
    %v2144 = vsel %vm48, %v2135, 0
    %v2147 = vsel %vm48, %v2136, 0
    %v2150 = vsel %vm48, %v2137, 0
    %v2153 = vsel %vm48, %v2138, 0
    %v2156 = vsel %vm48, %v2139, 0
    %v2159 = vsel %vm48, %v2140, 0
    %v2162 = vsel %vm48, %v2141, 0
    %v2165 = vsel %vm48, %v2142, 0
    %2167 = vmatprep.subr.mxu0 0.0
    %2168 = vmatpush1.msra.mxu0 %v1881
    %2169 = vmatprep.subr.mxu0 0.0
    %2170 = vmatpush1.msra.mxu0 0.0
    %2171 = vmatprep.subr.mxu0 0.0
    %2172 = vmatpush1.msra.mxu0 0.0
    %2173 = vmatprep.subr.mxu0 0.0
    %2174 = vmatpush1.msra.mxu0 0.0
    %2175 = vmatprep.subr.mxu0 0.0
    %2176 = vmatpush1.msra.mxu0 0.0
    %2177 = vmatprep.subr.mxu0 0.0
    %2178 = vmatpush1.msra.mxu0 0.0
    %2179 = vmatprep.subr.mxu0 0.0
    %2180 = vmatpush1.msra.mxu0 0.0
    %2181 = vmatprep.subr.mxu0 0.0
    %2182 = vmatpush1.msra.mxu0 0.0
    %2183 = vmatprep.subr.mxu0 0.0
    %2184 = vmatpush1.msra.mxu0 0.0
    %2185 = vmatprep.subr.mxu0 0.0
    %2186 = vmatpush1.msra.mxu0 0.0
    %2187 = vmatprep.subr.mxu0 0.0
    %2188 = vmatpush1.msra.mxu0 0.0
    %2189 = vmatprep.subr.mxu0 0.0
    %2190 = vmatpush1.msra.mxu0 0.0
    %2191 = vmatprep.subr.mxu0 0.0
    %2192 = vmatpush1.msra.mxu0 0.0
    %2193 = vmatprep.subr.mxu0 0.0
    %2194 = vmatpush1.msra.mxu0 0.0
    %2195 = vmatprep.subr.mxu0 0.0
    %2196 = vmatpush1.msra.mxu0 0.0
    %2197 = vmatprep.subr.mxu0 0.0
    %2198 = vmatpush1.msra.mxu0 0.0
    %2199 = vmatprep.subr.mxu0 0.0
    %2200 = vmatpush1.msra.mxu0 0.0
    %2201 = vmatprep.subr.mxu0 0.0
    %2202 = vmatpush1.msra.mxu0 0.0
    %2203 = vmatprep.subr.mxu0 0.0
    %2204 = vmatpush1.msra.mxu0 0.0
    %2205 = vmatprep.subr.mxu0 0.0
    %2206 = vmatpush1.msra.mxu0 0.0
    %2207 = vmatprep.subr.mxu0 0.0
    %2208 = vmatpush1.msra.mxu0 0.0
    %2209 = vmatprep.subr.mxu0 0.0
    %2210 = vmatpush1.msra.mxu0 0.0
    %2211 = vmatprep.subr.mxu0 0.0
    %2212 = vmatpush1.msra.mxu0 0.0
    %2213 = vmatprep.subr.mxu0 0.0
    %2214 = vmatpush1.msra.mxu0 0.0
    %2215 = vmatprep.subr.mxu0 0.0
    %2216 = vmatpush1.msra.mxu0 0.0
    %2217 = vmatprep.subr.mxu0 0.0
    %2218 = vmatpush1.msra.mxu0 0.0
    %2219 = vmatprep.subr.mxu0 0.0
    %2220 = vmatpush1.msra.mxu0 0.0
    %2221 = vmatprep.subr.mxu0 0.0
    %2222 = vmatpush1.msra.mxu0 0.0
    %2223 = vmatprep.subr.mxu0 0.0
    %2224 = vmatpush1.msra.mxu0 0.0
    %2225 = vmatprep.subr.mxu0 0.0
    %2226 = vmatpush1.msra.mxu0 0.0
    %2227 = vmatprep.subr.mxu0 0.0
    %2228 = vmatpush1.msra.mxu0 0.0
    %2229 = vmatprep.subr.mxu0 0.0
    %2230 = vmatpush1.msra.mxu0 0.0
    %2231 = vmatprep.mubr.f32.mxu0 0.0
    %2232 = vmatmul.mubr.f32.gmra.mrb[0].mxu0 %v2144
    %v2233 = vpop.f32.mrb[0].mxu0
    %v2234 = vadd.f32 %v1853, %v2233
    %v2235 = vpop.f32.mrb[0].mxu0
    %2236 = vmatprep.mubr.f32.mxu0 0.0
    %2237 = vmatmul.mubr.f32.gmra.mrb[0].mxu0 %v2147
    %v2238 = vpop.f32.mrb[0].mxu0
    %v2239 = vadd.f32 %v1853, %v2238
    %v2240 = vpop.f32.mrb[0].mxu0
    %2241 = vmatprep.mubr.f32.mxu0 0.0
    %2242 = vmatmul.mubr.f32.gmra.mrb[0].mxu0 %v2150
    %v2243 = vpop.f32.mrb[0].mxu0
    %v2244 = vadd.f32 %v1853, %v2243
    %v2245 = vpop.f32.mrb[0].mxu0
    %2246 = vmatprep.mubr.f32.mxu0 0.0
    %2247 = vmatmul.mubr.f32.gmra.mrb[0].mxu0 %v2153
    %v2248 = vpop.f32.mrb[0].mxu0
    %v2249 = vadd.f32 %v1853, %v2248
    %v2250 = vpop.f32.mrb[0].mxu0
    %2251 = vmatprep.mubr.f32.mxu0 0.0
    %2252 = vmatmul.mubr.f32.gmra.mrb[0].mxu0 %v2156
    %v2253 = vpop.f32.mrb[0].mxu0
    %v2254 = vadd.f32 %v1853, %v2253
    %v2255 = vpop.f32.mrb[0].mxu0
    %2256 = vmatprep.mubr.f32.mxu0 0.0
    %2257 = vmatmul.mubr.f32.gmra.mrb[0].mxu0 %v2159
    %v2258 = vpop.f32.mrb[0].mxu0
    %v2259 = vadd.f32 %v1853, %v2258
    %v2260 = vpop.f32.mrb[0].mxu0
    %2261 = vmatprep.mubr.f32.mxu0 0.0
    %2262 = vmatmul.mubr.f32.gmra.mrb[0].mxu0 %v2162
    %v2263 = vpop.f32.mrb[0].mxu0
    %v2264 = vadd.f32 %v1853, %v2263
    %v2265 = vpop.f32.mrb[0].mxu0
    %2266 = vmatprep.mubr.f32.mxu0 0.0
    %2267 = vmatmul.mubr.f32.gmra.mrb[0].mxu0 %v2165
    %v2268 = vpop.f32.mrb[0].mxu0
    %v2269 = vadd.f32 %v1853, %v2268
    %v2270 = vpop.f32.mrb[0].mxu0
    %2271 = vdwg.mxu0
    %v2272 = vmax.f32 %v2234, 0.0
    %v2273 = vmax.f32 %v2239, 0.0
    %v2274 = vmax.f32 %v2244, 0.0
    %v2275 = vmax.f32 %v2249, 0.0
    %v2276 = vmax.f32 %v2254, 0.0
    %v2277 = vmax.f32 %v2259, 0.0
    %v2278 = vmax.f32 %v2264, 0.0
    %v2279 = vmax.f32 %v2269, 0.0
    %v2281 = vsel %vm2005, %v2272, 0
    %v2284 = vsel %vm2005, %v2273, 0
    %v2287 = vsel %vm2005, %v2274, 0
    %v2290 = vsel %vm2005, %v2275, 0
    %v2293 = vsel %vm2005, %v2276, 0
    %v2296 = vsel %vm2005, %v2277, 0
    %v2299 = vsel %vm2005, %v2278, 0
    %v2302 = vsel %vm2005, %v2279, 0
    %2304 = vmatprep.subr.mxu0 0.0
    %2305 = vmatpush1.msra.mxu0 %v1996
    %2306 = vmatprep.subr.mxu0 0.0
    %2307 = vmatpush1.msra.mxu0 %v1997
    %2308 = vmatprep.subr.mxu0 0.0
    %2309 = vmatpush1.msra.mxu0 0.0
    %2310 = vmatprep.subr.mxu0 0.0
    %2311 = vmatpush1.msra.mxu0 0.0
    %2312 = vmatprep.subr.mxu0 0.0
    %2313 = vmatpush1.msra.mxu0 0.0
    %2314 = vmatprep.subr.mxu0 0.0
    %2315 = vmatpush1.msra.mxu0 0.0
    %2316 = vmatprep.subr.mxu0 0.0
    %2317 = vmatpush1.msra.mxu0 0.0
    %2318 = vmatprep.subr.mxu0 0.0
    %2319 = vmatpush1.msra.mxu0 0.0
    %2320 = vmatprep.subr.mxu0 0.0
    %2321 = vmatpush1.msra.mxu0 0.0
    %2322 = vmatprep.subr.mxu0 0.0
    %2323 = vmatpush1.msra.mxu0 0.0
    %2324 = vmatprep.subr.mxu0 0.0
    %2325 = vmatpush1.msra.mxu0 0.0
    %2326 = vmatprep.subr.mxu0 0.0
    %2327 = vmatpush1.msra.mxu0 0.0
    %2328 = vmatprep.subr.mxu0 0.0
    %2329 = vmatpush1.msra.mxu0 0.0
    %2330 = vmatprep.subr.mxu0 0.0
    %2331 = vmatpush1.msra.mxu0 0.0
    %2332 = vmatprep.subr.mxu0 0.0
    %2333 = vmatpush1.msra.mxu0 0.0
    %2334 = vmatprep.subr.mxu0 0.0
    %2335 = vmatpush1.msra.mxu0 0.0
    %2336 = vmatprep.subr.mxu0 0.0
    %2337 = vmatpush1.msra.mxu0 0.0
    %2338 = vmatprep.subr.mxu0 0.0
    %2339 = vmatpush1.msra.mxu0 0.0
    %2340 = vmatprep.subr.mxu0 0.0
    %2341 = vmatpush1.msra.mxu0 0.0
    %2342 = vmatprep.subr.mxu0 0.0
    %2343 = vmatpush1.msra.mxu0 0.0
    %2344 = vmatprep.subr.mxu0 0.0
    %2345 = vmatpush1.msra.mxu0 0.0
    %2346 = vmatprep.subr.mxu0 0.0
    %2347 = vmatpush1.msra.mxu0 0.0
    %2348 = vmatprep.subr.mxu0 0.0
    %2349 = vmatpush1.msra.mxu0 0.0
    %2350 = vmatprep.subr.mxu0 0.0
    %2351 = vmatpush1.msra.mxu0 0.0
    %2352 = vmatprep.subr.mxu0 0.0
    %2353 = vmatpush1.msra.mxu0 0.0
    %2354 = vmatprep.subr.mxu0 0.0
    %2355 = vmatpush1.msra.mxu0 0.0
    %2356 = vmatprep.subr.mxu0 0.0
    %2357 = vmatpush1.msra.mxu0 0.0
    %2358 = vmatprep.subr.mxu0 0.0
    %2359 = vmatpush1.msra.mxu0 0.0
    %2360 = vmatprep.subr.mxu0 0.0
    %2361 = vmatpush1.msra.mxu0 0.0
    %2362 = vmatprep.subr.mxu0 0.0
    %2363 = vmatpush1.msra.mxu0 0.0
    %2364 = vmatprep.subr.mxu0 0.0
    %2365 = vmatpush1.msra.mxu0 0.0
    %2366 = vmatprep.subr.mxu0 0.0
    %2367 = vmatpush1.msra.mxu0 0.0
    %2368 = vmatprep.mubr.f32.mxu0 0.0
    %2369 = vmatmul.mubr.f32.gmra.mrb[0].mxu0 %v2281
    %v2370 = vpop.f32.mrb[0].mxu0
    %v2371 = vadd.f32 %v2003, %v2370
    %v2372 = vpop.f32.mrb[0].mxu0
    %2373 = vmatprep.mubr.f32.mxu0 0.0
    %2374 = vmatmul.mubr.f32.gmra.mrb[0].mxu0 %v2284
    %v2375 = vpop.f32.mrb[0].mxu0
    %v2376 = vadd.f32 %v2003, %v2375
    %v2377 = vpop.f32.mrb[0].mxu0
    %2378 = vmatprep.mubr.f32.mxu0 0.0
    %2379 = vmatmul.mubr.f32.gmra.mrb[0].mxu0 %v2287
    %v2380 = vpop.f32.mrb[0].mxu0
    %v2381 = vadd.f32 %v2003, %v2380
    %v2382 = vpop.f32.mrb[0].mxu0
    %2383 = vmatprep.mubr.f32.mxu0 0.0
    %2384 = vmatmul.mubr.f32.gmra.mrb[0].mxu0 %v2290
    %v2385 = vpop.f32.mrb[0].mxu0
    %v2386 = vadd.f32 %v2003, %v2385
    %v2387 = vpop.f32.mrb[0].mxu0
    %2388 = vmatprep.mubr.f32.mxu0 0.0
    %2389 = vmatmul.mubr.f32.gmra.mrb[0].mxu0 %v2293
    %v2390 = vpop.f32.mrb[0].mxu0
    %v2391 = vadd.f32 %v2003, %v2390
    %v2392 = vpop.f32.mrb[0].mxu0
    %2393 = vmatprep.mubr.f32.mxu0 0.0
    %2394 = vmatmul.mubr.f32.gmra.mrb[0].mxu0 %v2296
    %v2395 = vpop.f32.mrb[0].mxu0
    %v2396 = vadd.f32 %v2003, %v2395
    %v2397 = vpop.f32.mrb[0].mxu0
    %2398 = vmatprep.mubr.f32.mxu0 0.0
    %2399 = vmatmul.mubr.f32.gmra.mrb[0].mxu0 %v2299
    %v2400 = vpop.f32.mrb[0].mxu0
    %v2401 = vadd.f32 %v2003, %v2400
    %v2402 = vpop.f32.mrb[0].mxu0
    %2403 = vmatprep.mubr.f32.mxu0 0.0
    %2404 = vmatmul.mubr.f32.gmra.mrb[0].mxu0 %v2302
    %v2405 = vpop.f32.mrb[0].mxu0
    %v2406 = vadd.f32 %v2003, %v2405
    %v2407 = vpop.f32.mrb[0].mxu0
    %2408 = vdwg.mxu0
    %v2409 = vmax.f32 %v2097, %v2371
    %v2410 = vmax.f32 %v2102, %v2376
    %v2411 = vmax.f32 %v2107, %v2381
    %v2412 = vmax.f32 %v2112, %v2386
    %v2413 = vmax.f32 %v2117, %v2391
    %v2414 = vmax.f32 %v2122, %v2396
    %v2415 = vmax.f32 %v2127, %v2401
    %v2416 = vmax.f32 %v2132, %v2406
    %v2417 = vmul.f32 %v1343, %v1831
    %v2418 = vmul.f32 %v1344, %v1832
    %v2419 = vmul.f32 %v1345, %v1833
    %v2420 = vmul.f32 %v1346, %v1834
    %v2421 = vmul.f32 %v1347, %v1835
    %v2422 = vmul.f32 %v1348, %v1836
    %v2423 = vmul.f32 %v1349, %v1837
    %v2424 = vmul.f32 %v1350, %v1838
    %v2426 = vsel %vm48, %v2417, 0
    %v2429 = vsel %vm48, %v2418, 0
    %v2432 = vsel %vm48, %v2419, 0
    %v2435 = vsel %vm48, %v2420, 0
    %v2438 = vsel %vm48, %v2421, 0
    %v2441 = vsel %vm48, %v2422, 0
    %v2444 = vsel %vm48, %v2423, 0
    %v2447 = vsel %vm48, %v2424, 0
    %2449 = vmatprep.subr.mxu0 0.0
    %2450 = vmatpush1.msra.mxu0 %v1881
    %2451 = vmatprep.subr.mxu0 0.0
    %2452 = vmatpush1.msra.mxu0 0.0
    %2453 = vmatprep.subr.mxu0 0.0
    %2454 = vmatpush1.msra.mxu0 0.0
    %2455 = vmatprep.subr.mxu0 0.0
    %2456 = vmatpush1.msra.mxu0 0.0
    %2457 = vmatprep.subr.mxu0 0.0
    %2458 = vmatpush1.msra.mxu0 0.0
    %2459 = vmatprep.subr.mxu0 0.0
    %2460 = vmatpush1.msra.mxu0 0.0
    %2461 = vmatprep.subr.mxu0 0.0
    %2462 = vmatpush1.msra.mxu0 0.0
    %2463 = vmatprep.subr.mxu0 0.0
    %2464 = vmatpush1.msra.mxu0 0.0
    %2465 = vmatprep.subr.mxu0 0.0
    %2466 = vmatpush1.msra.mxu0 0.0
    %2467 = vmatprep.subr.mxu0 0.0
    %2468 = vmatpush1.msra.mxu0 0.0
    %2469 = vmatprep.subr.mxu0 0.0
    %2470 = vmatpush1.msra.mxu0 0.0
    %2471 = vmatprep.subr.mxu0 0.0
    %2472 = vmatpush1.msra.mxu0 0.0
    %2473 = vmatprep.subr.mxu0 0.0
    %2474 = vmatpush1.msra.mxu0 0.0
    %2475 = vmatprep.subr.mxu0 0.0
    %2476 = vmatpush1.msra.mxu0 0.0
    %2477 = vmatprep.subr.mxu0 0.0
    %2478 = vmatpush1.msra.mxu0 0.0
    %2479 = vmatprep.subr.mxu0 0.0
    %2480 = vmatpush1.msra.mxu0 0.0
    %2481 = vmatprep.subr.mxu0 0.0
    %2482 = vmatpush1.msra.mxu0 0.0
    %2483 = vmatprep.subr.mxu0 0.0
    %2484 = vmatpush1.msra.mxu0 0.0
    %2485 = vmatprep.subr.mxu0 0.0
    %2486 = vmatpush1.msra.mxu0 0.0
    %2487 = vmatprep.subr.mxu0 0.0
    %2488 = vmatpush1.msra.mxu0 0.0
    %2489 = vmatprep.subr.mxu0 0.0
    %2490 = vmatpush1.msra.mxu0 0.0
    %2491 = vmatprep.subr.mxu0 0.0
    %2492 = vmatpush1.msra.mxu0 0.0
    %2493 = vmatprep.subr.mxu0 0.0
    %2494 = vmatpush1.msra.mxu0 0.0
    %2495 = vmatprep.subr.mxu0 0.0
    %2496 = vmatpush1.msra.mxu0 0.0
    %2497 = vmatprep.subr.mxu0 0.0
    %2498 = vmatpush1.msra.mxu0 0.0
    %2499 = vmatprep.subr.mxu0 0.0
    %2500 = vmatpush1.msra.mxu0 0.0
    %2501 = vmatprep.subr.mxu0 0.0
    %2502 = vmatpush1.msra.mxu0 0.0
    %2503 = vmatprep.subr.mxu0 0.0
    %2504 = vmatpush1.msra.mxu0 0.0
    %2505 = vmatprep.subr.mxu0 0.0
    %2506 = vmatpush1.msra.mxu0 0.0
    %2507 = vmatprep.subr.mxu0 0.0
    %2508 = vmatpush1.msra.mxu0 0.0
    %2509 = vmatprep.subr.mxu0 0.0
    %2510 = vmatpush1.msra.mxu0 0.0
    %2511 = vmatprep.subr.mxu0 0.0
    %2512 = vmatpush1.msra.mxu0 0.0
    %2513 = vmatprep.mubr.f32.mxu0 0.0
    %2514 = vmatmul.mubr.f32.gmra.mrb[0].mxu0 %v2426
    %v2515 = vpop.f32.mrb[0].mxu0
    %v2516 = vadd.f32 %v1853, %v2515
    %v2517 = vpop.f32.mrb[0].mxu0
    %2518 = vmatprep.mubr.f32.mxu0 0.0
    %2519 = vmatmul.mubr.f32.gmra.mrb[0].mxu0 %v2429
    %v2520 = vpop.f32.mrb[0].mxu0
    %v2521 = vadd.f32 %v1853, %v2520
    %v2522 = vpop.f32.mrb[0].mxu0
    %2523 = vmatprep.mubr.f32.mxu0 0.0
    %2524 = vmatmul.mubr.f32.gmra.mrb[0].mxu0 %v2432
    %v2525 = vpop.f32.mrb[0].mxu0
    %v2526 = vadd.f32 %v1853, %v2525
    %v2527 = vpop.f32.mrb[0].mxu0
    %2528 = vmatprep.mubr.f32.mxu0 0.0
    %2529 = vmatmul.mubr.f32.gmra.mrb[0].mxu0 %v2435
    %v2530 = vpop.f32.mrb[0].mxu0
    %v2531 = vadd.f32 %v1853, %v2530
    %v2532 = vpop.f32.mrb[0].mxu0
    %2533 = vmatprep.mubr.f32.mxu0 0.0
    %2534 = vmatmul.mubr.f32.gmra.mrb[0].mxu0 %v2438
    %v2535 = vpop.f32.mrb[0].mxu0
    %v2536 = vadd.f32 %v1853, %v2535
    %v2537 = vpop.f32.mrb[0].mxu0
    %2538 = vmatprep.mubr.f32.mxu0 0.0
    %2539 = vmatmul.mubr.f32.gmra.mrb[0].mxu0 %v2441
    %v2540 = vpop.f32.mrb[0].mxu0
    %v2541 = vadd.f32 %v1853, %v2540
    %v2542 = vpop.f32.mrb[0].mxu0
    %2543 = vmatprep.mubr.f32.mxu0 0.0
    %2544 = vmatmul.mubr.f32.gmra.mrb[0].mxu0 %v2444
    %v2545 = vpop.f32.mrb[0].mxu0
    %v2546 = vadd.f32 %v1853, %v2545
    %v2547 = vpop.f32.mrb[0].mxu0
    %2548 = vmatprep.mubr.f32.mxu0 0.0
    %2549 = vmatmul.mubr.f32.gmra.mrb[0].mxu0 %v2447
    %v2550 = vpop.f32.mrb[0].mxu0
    %v2551 = vadd.f32 %v1853, %v2550
    %v2552 = vpop.f32.mrb[0].mxu0
    %2553 = vdwg.mxu0
    %v2554 = vmax.f32 %v2516, 0.0
    %v2555 = vmax.f32 %v2521, 0.0
    %v2556 = vmax.f32 %v2526, 0.0
    %v2557 = vmax.f32 %v2531, 0.0
    %v2558 = vmax.f32 %v2536, 0.0
    %v2559 = vmax.f32 %v2541, 0.0
    %v2560 = vmax.f32 %v2546, 0.0
    %v2561 = vmax.f32 %v2551, 0.0
    %v2563 = vsel %vm2005, %v2554, 0
    %v2566 = vsel %vm2005, %v2555, 0
    %v2569 = vsel %vm2005, %v2556, 0
    %v2572 = vsel %vm2005, %v2557, 0
    %v2575 = vsel %vm2005, %v2558, 0
    %v2578 = vsel %vm2005, %v2559, 0
    %v2581 = vsel %vm2005, %v2560, 0
    %v2584 = vsel %vm2005, %v2561, 0
    %2586 = vmatprep.subr.mxu0 0.0
    %2587 = vmatpush1.msra.mxu0 %v1996
    %2588 = vmatprep.subr.mxu0 0.0
    %2589 = vmatpush1.msra.mxu0 %v1997
    %2590 = vmatprep.subr.mxu0 0.0
    %2591 = vmatpush1.msra.mxu0 0.0
    %2592 = vmatprep.subr.mxu0 0.0
    %2593 = vmatpush1.msra.mxu0 0.0
    %2594 = vmatprep.subr.mxu0 0.0
    %2595 = vmatpush1.msra.mxu0 0.0
    %2596 = vmatprep.subr.mxu0 0.0
    %2597 = vmatpush1.msra.mxu0 0.0
    %2598 = vmatprep.subr.mxu0 0.0
    %2599 = vmatpush1.msra.mxu0 0.0
    %2600 = vmatprep.subr.mxu0 0.0
    %2601 = vmatpush1.msra.mxu0 0.0
    %2602 = vmatprep.subr.mxu0 0.0
    %2603 = vmatpush1.msra.mxu0 0.0
    %2604 = vmatprep.subr.mxu0 0.0
    %2605 = vmatpush1.msra.mxu0 0.0
    %2606 = vmatprep.subr.mxu0 0.0
    %2607 = vmatpush1.msra.mxu0 0.0
    %2608 = vmatprep.subr.mxu0 0.0
    %2609 = vmatpush1.msra.mxu0 0.0
    %2610 = vmatprep.subr.mxu0 0.0
    %2611 = vmatpush1.msra.mxu0 0.0
    %2612 = vmatprep.subr.mxu0 0.0
    %2613 = vmatpush1.msra.mxu0 0.0
    %2614 = vmatprep.subr.mxu0 0.0
    %2615 = vmatpush1.msra.mxu0 0.0
    %2616 = vmatprep.subr.mxu0 0.0
    %2617 = vmatpush1.msra.mxu0 0.0
    %2618 = vmatprep.subr.mxu0 0.0
    %2619 = vmatpush1.msra.mxu0 0.0
    %2620 = vmatprep.subr.mxu0 0.0
    %2621 = vmatpush1.msra.mxu0 0.0
    %2622 = vmatprep.subr.mxu0 0.0
    %2623 = vmatpush1.msra.mxu0 0.0
    %2624 = vmatprep.subr.mxu0 0.0
    %2625 = vmatpush1.msra.mxu0 0.0
    %2626 = vmatprep.subr.mxu0 0.0
    %2627 = vmatpush1.msra.mxu0 0.0
    %2628 = vmatprep.subr.mxu0 0.0
    %2629 = vmatpush1.msra.mxu0 0.0
    %2630 = vmatprep.subr.mxu0 0.0
    %2631 = vmatpush1.msra.mxu0 0.0
    %2632 = vmatprep.subr.mxu0 0.0
    %2633 = vmatpush1.msra.mxu0 0.0
    %2634 = vmatprep.subr.mxu0 0.0
    %2635 = vmatpush1.msra.mxu0 0.0
    %2636 = vmatprep.subr.mxu0 0.0
    %2637 = vmatpush1.msra.mxu0 0.0
    %2638 = vmatprep.subr.mxu0 0.0
    %2639 = vmatpush1.msra.mxu0 0.0
    %2640 = vmatprep.subr.mxu0 0.0
    %2641 = vmatpush1.msra.mxu0 0.0
    %2642 = vmatprep.subr.mxu0 0.0
    %2643 = vmatpush1.msra.mxu0 0.0
    %2644 = vmatprep.subr.mxu0 0.0
    %2645 = vmatpush1.msra.mxu0 0.0
    %2646 = vmatprep.subr.mxu0 0.0
    %2647 = vmatpush1.msra.mxu0 0.0
    %2648 = vmatprep.subr.mxu0 0.0
    %2649 = vmatpush1.msra.mxu0 0.0
    %2650 = vmatprep.mubr.f32.mxu0 0.0
    %2651 = vmatmul.mubr.f32.gmra.mrb[0].mxu0 %v2563
    %v2652 = vpop.f32.mrb[0].mxu0
    %v2653 = vadd.f32 %v2003, %v2652
    %v2654 = vpop.f32.mrb[0].mxu0
    %2655 = vmatprep.mubr.f32.mxu0 0.0
    %2656 = vmatmul.mubr.f32.gmra.mrb[0].mxu0 %v2566
    %v2657 = vpop.f32.mrb[0].mxu0
    %v2658 = vadd.f32 %v2003, %v2657
    %v2659 = vpop.f32.mrb[0].mxu0
    %2660 = vmatprep.mubr.f32.mxu0 0.0
    %2661 = vmatmul.mubr.f32.gmra.mrb[0].mxu0 %v2569
    %v2662 = vpop.f32.mrb[0].mxu0
    %v2663 = vadd.f32 %v2003, %v2662
    %v2664 = vpop.f32.mrb[0].mxu0
    %2665 = vmatprep.mubr.f32.mxu0 0.0
    %2666 = vmatmul.mubr.f32.gmra.mrb[0].mxu0 %v2572
    %v2667 = vpop.f32.mrb[0].mxu0
    %v2668 = vadd.f32 %v2003, %v2667
    %v2669 = vpop.f32.mrb[0].mxu0
    %2670 = vmatprep.mubr.f32.mxu0 0.0
    %2671 = vmatmul.mubr.f32.gmra.mrb[0].mxu0 %v2575
    %v2672 = vpop.f32.mrb[0].mxu0
    %v2673 = vadd.f32 %v2003, %v2672
    %v2674 = vpop.f32.mrb[0].mxu0
    %2675 = vmatprep.mubr.f32.mxu0 0.0
    %2676 = vmatmul.mubr.f32.gmra.mrb[0].mxu0 %v2578
    %v2677 = vpop.f32.mrb[0].mxu0
    %v2678 = vadd.f32 %v2003, %v2677
    %v2679 = vpop.f32.mrb[0].mxu0
    %2680 = vmatprep.mubr.f32.mxu0 0.0
    %2681 = vmatmul.mubr.f32.gmra.mrb[0].mxu0 %v2581
    %v2682 = vpop.f32.mrb[0].mxu0
    %v2683 = vadd.f32 %v2003, %v2682
    %v2684 = vpop.f32.mrb[0].mxu0
    %2685 = vmatprep.mubr.f32.mxu0 0.0
    %2686 = vmatmul.mubr.f32.gmra.mrb[0].mxu0 %v2584
    %v2687 = vpop.f32.mrb[0].mxu0
    %v2688 = vadd.f32 %v2003, %v2687
    %v2689 = vpop.f32.mrb[0].mxu0
    %2690 = vdwg.mxu0
    %v2691 = vmax.f32 %v2409, %v2653
    %v2692 = vmax.f32 %v2410, %v2658
    %v2693 = vmax.f32 %v2411, %v2663
    %v2694 = vmax.f32 %v2412, %v2668
    %v2695 = vmax.f32 %v2413, %v2673
    %v2696 = vmax.f32 %v2414, %v2678
    %v2697 = vmax.f32 %v2415, %v2683
    %v2698 = vmax.f32 %v2416, %v2688
    %v2699 = vmul.f32 %v1663, %v1831
    %v2700 = vmul.f32 %v1664, %v1832
    %v2701 = vmul.f32 %v1665, %v1833
    %v2702 = vmul.f32 %v1666, %v1834
    %v2703 = vmul.f32 %v1667, %v1835
    %v2704 = vmul.f32 %v1668, %v1836
    %v2705 = vmul.f32 %v1669, %v1837
    %v2706 = vmul.f32 %v1670, %v1838
    %v2708 = vsel %vm48, %v2699, 0
    %v2711 = vsel %vm48, %v2700, 0
    %v2714 = vsel %vm48, %v2701, 0
    %v2717 = vsel %vm48, %v2702, 0
    %v2720 = vsel %vm48, %v2703, 0
    %v2723 = vsel %vm48, %v2704, 0
    %v2726 = vsel %vm48, %v2705, 0
    %v2729 = vsel %vm48, %v2706, 0
    %2731 = vmatprep.subr.mxu0 0.0
    %2732 = vmatpush1.msra.mxu0 %v1881
    %2733 = vmatprep.subr.mxu0 0.0
    %2734 = vmatpush1.msra.mxu0 0.0
    %2735 = vmatprep.subr.mxu0 0.0
    %2736 = vmatpush1.msra.mxu0 0.0
    %2737 = vmatprep.subr.mxu0 0.0
    %2738 = vmatpush1.msra.mxu0 0.0
    %2739 = vmatprep.subr.mxu0 0.0
    %2740 = vmatpush1.msra.mxu0 0.0
    %2741 = vmatprep.subr.mxu0 0.0
    %2742 = vmatpush1.msra.mxu0 0.0
    %2743 = vmatprep.subr.mxu0 0.0
    %2744 = vmatpush1.msra.mxu0 0.0
    %2745 = vmatprep.subr.mxu0 0.0
    %2746 = vmatpush1.msra.mxu0 0.0
    %2747 = vmatprep.subr.mxu0 0.0
    %2748 = vmatpush1.msra.mxu0 0.0
    %2749 = vmatprep.subr.mxu0 0.0
    %2750 = vmatpush1.msra.mxu0 0.0
    %2751 = vmatprep.subr.mxu0 0.0
    %2752 = vmatpush1.msra.mxu0 0.0
    %2753 = vmatprep.subr.mxu0 0.0
    %2754 = vmatpush1.msra.mxu0 0.0
    %2755 = vmatprep.subr.mxu0 0.0
    %2756 = vmatpush1.msra.mxu0 0.0
    %2757 = vmatprep.subr.mxu0 0.0
    %2758 = vmatpush1.msra.mxu0 0.0
    %2759 = vmatprep.subr.mxu0 0.0
    %2760 = vmatpush1.msra.mxu0 0.0
    %2761 = vmatprep.subr.mxu0 0.0
    %2762 = vmatpush1.msra.mxu0 0.0
    %2763 = vmatprep.subr.mxu0 0.0
    %2764 = vmatpush1.msra.mxu0 0.0
    %2765 = vmatprep.subr.mxu0 0.0
    %2766 = vmatpush1.msra.mxu0 0.0
    %2767 = vmatprep.subr.mxu0 0.0
    %2768 = vmatpush1.msra.mxu0 0.0
    %2769 = vmatprep.subr.mxu0 0.0
    %2770 = vmatpush1.msra.mxu0 0.0
    %2771 = vmatprep.subr.mxu0 0.0
    %2772 = vmatpush1.msra.mxu0 0.0
    %2773 = vmatprep.subr.mxu0 0.0
    %2774 = vmatpush1.msra.mxu0 0.0
    %2775 = vmatprep.subr.mxu0 0.0
    %2776 = vmatpush1.msra.mxu0 0.0
    %2777 = vmatprep.subr.mxu0 0.0
    %2778 = vmatpush1.msra.mxu0 0.0
    %2779 = vmatprep.subr.mxu0 0.0
    %2780 = vmatpush1.msra.mxu0 0.0
    %2781 = vmatprep.subr.mxu0 0.0
    %2782 = vmatpush1.msra.mxu0 0.0
    %2783 = vmatprep.subr.mxu0 0.0
    %2784 = vmatpush1.msra.mxu0 0.0
    %2785 = vmatprep.subr.mxu0 0.0
    %2786 = vmatpush1.msra.mxu0 0.0
    %2787 = vmatprep.subr.mxu0 0.0
    %2788 = vmatpush1.msra.mxu0 0.0
    %2789 = vmatprep.subr.mxu0 0.0
    %2790 = vmatpush1.msra.mxu0 0.0
    %2791 = vmatprep.subr.mxu0 0.0
    %2792 = vmatpush1.msra.mxu0 0.0
    %2793 = vmatprep.subr.mxu0 0.0
    %2794 = vmatpush1.msra.mxu0 0.0
    %2795 = vmatprep.mubr.f32.mxu0 0.0
    %2796 = vmatmul.mubr.f32.gmra.mrb[0].mxu0 %v2708
    %v2797 = vpop.f32.mrb[0].mxu0
    %v2798 = vadd.f32 %v1853, %v2797
    %v2799 = vpop.f32.mrb[0].mxu0
    %2800 = vmatprep.mubr.f32.mxu0 0.0
    %2801 = vmatmul.mubr.f32.gmra.mrb[0].mxu0 %v2711
    %v2802 = vpop.f32.mrb[0].mxu0
    %v2803 = vadd.f32 %v1853, %v2802
    %v2804 = vpop.f32.mrb[0].mxu0
    %2805 = vmatprep.mubr.f32.mxu0 0.0
    %2806 = vmatmul.mubr.f32.gmra.mrb[0].mxu0 %v2714
    %v2807 = vpop.f32.mrb[0].mxu0
    %v2808 = vadd.f32 %v1853, %v2807
    %v2809 = vpop.f32.mrb[0].mxu0
    %2810 = vmatprep.mubr.f32.mxu0 0.0
    %2811 = vmatmul.mubr.f32.gmra.mrb[0].mxu0 %v2717
    %v2812 = vpop.f32.mrb[0].mxu0
    %v2813 = vadd.f32 %v1853, %v2812
    %v2814 = vpop.f32.mrb[0].mxu0
    %2815 = vmatprep.mubr.f32.mxu0 0.0
    %2816 = vmatmul.mubr.f32.gmra.mrb[0].mxu0 %v2720
    %v2817 = vpop.f32.mrb[0].mxu0
    %v2818 = vadd.f32 %v1853, %v2817
    %v2819 = vpop.f32.mrb[0].mxu0
    %2820 = vmatprep.mubr.f32.mxu0 0.0
    %2821 = vmatmul.mubr.f32.gmra.mrb[0].mxu0 %v2723
    %v2822 = vpop.f32.mrb[0].mxu0
    %v2823 = vadd.f32 %v1853, %v2822
    %v2824 = vpop.f32.mrb[0].mxu0
    %2825 = vmatprep.mubr.f32.mxu0 0.0
    %2826 = vmatmul.mubr.f32.gmra.mrb[0].mxu0 %v2726
    %v2827 = vpop.f32.mrb[0].mxu0
    %v2828 = vadd.f32 %v1853, %v2827
    %v2829 = vpop.f32.mrb[0].mxu0
    %2830 = vmatprep.mubr.f32.mxu0 0.0
    %2831 = vmatmul.mubr.f32.gmra.mrb[0].mxu0 %v2729
    %v2832 = vpop.f32.mrb[0].mxu0
    %v2833 = vadd.f32 %v1853, %v2832
    %v2834 = vpop.f32.mrb[0].mxu0
    %2835 = vdwg.mxu0
    %v2836 = vmax.f32 %v2798, 0.0
    %v2837 = vmax.f32 %v2803, 0.0
    %v2838 = vmax.f32 %v2808, 0.0
    %v2839 = vmax.f32 %v2813, 0.0
    %v2840 = vmax.f32 %v2818, 0.0
    %v2841 = vmax.f32 %v2823, 0.0
    %v2842 = vmax.f32 %v2828, 0.0
    %v2843 = vmax.f32 %v2833, 0.0
    %v2845 = vsel %vm2005, %v2836, 0
    %v2848 = vsel %vm2005, %v2837, 0
    %v2851 = vsel %vm2005, %v2838, 0
    %v2854 = vsel %vm2005, %v2839, 0
    %v2857 = vsel %vm2005, %v2840, 0
    %v2860 = vsel %vm2005, %v2841, 0
    %v2863 = vsel %vm2005, %v2842, 0
    %v2866 = vsel %vm2005, %v2843, 0
    %2868 = vmatprep.subr.mxu0 0.0
    %2869 = vmatpush1.msra.mxu0 %v1996
    %2870 = vmatprep.subr.mxu0 0.0
    %2871 = vmatpush1.msra.mxu0 %v1997
    %2872 = vmatprep.subr.mxu0 0.0
    %2873 = vmatpush1.msra.mxu0 0.0
    %2874 = vmatprep.subr.mxu0 0.0
    %2875 = vmatpush1.msra.mxu0 0.0
    %2876 = vmatprep.subr.mxu0 0.0
    %2877 = vmatpush1.msra.mxu0 0.0
    %2878 = vmatprep.subr.mxu0 0.0
    %2879 = vmatpush1.msra.mxu0 0.0
    %2880 = vmatprep.subr.mxu0 0.0
    %2881 = vmatpush1.msra.mxu0 0.0
    %2882 = vmatprep.subr.mxu0 0.0
    %2883 = vmatpush1.msra.mxu0 0.0
    %2884 = vmatprep.subr.mxu0 0.0
    %2885 = vmatpush1.msra.mxu0 0.0
    %2886 = vmatprep.subr.mxu0 0.0
    %2887 = vmatpush1.msra.mxu0 0.0
    %2888 = vmatprep.subr.mxu0 0.0
    %2889 = vmatpush1.msra.mxu0 0.0
    %2890 = vmatprep.subr.mxu0 0.0
    %2891 = vmatpush1.msra.mxu0 0.0
    %2892 = vmatprep.subr.mxu0 0.0
    %2893 = vmatpush1.msra.mxu0 0.0
    %2894 = vmatprep.subr.mxu0 0.0
    %2895 = vmatpush1.msra.mxu0 0.0
    %2896 = vmatprep.subr.mxu0 0.0
    %2897 = vmatpush1.msra.mxu0 0.0
    %2898 = vmatprep.subr.mxu0 0.0
    %2899 = vmatpush1.msra.mxu0 0.0
    %2900 = vmatprep.subr.mxu0 0.0
    %2901 = vmatpush1.msra.mxu0 0.0
    %2902 = vmatprep.subr.mxu0 0.0
    %2903 = vmatpush1.msra.mxu0 0.0
    %2904 = vmatprep.subr.mxu0 0.0
    %2905 = vmatpush1.msra.mxu0 0.0
    %2906 = vmatprep.subr.mxu0 0.0
    %2907 = vmatpush1.msra.mxu0 0.0
    %2908 = vmatprep.subr.mxu0 0.0
    %2909 = vmatpush1.msra.mxu0 0.0
    %2910 = vmatprep.subr.mxu0 0.0
    %2911 = vmatpush1.msra.mxu0 0.0
    %2912 = vmatprep.subr.mxu0 0.0
    %2913 = vmatpush1.msra.mxu0 0.0
    %2914 = vmatprep.subr.mxu0 0.0
    %2915 = vmatpush1.msra.mxu0 0.0
    %2916 = vmatprep.subr.mxu0 0.0
    %2917 = vmatpush1.msra.mxu0 0.0
    %2918 = vmatprep.subr.mxu0 0.0
    %2919 = vmatpush1.msra.mxu0 0.0
    %2920 = vmatprep.subr.mxu0 0.0
    %2921 = vmatpush1.msra.mxu0 0.0
    %2922 = vmatprep.subr.mxu0 0.0
    %2923 = vmatpush1.msra.mxu0 0.0
    %2924 = vmatprep.subr.mxu0 0.0
    %2925 = vmatpush1.msra.mxu0 0.0
    %2926 = vmatprep.subr.mxu0 0.0
    %2927 = vmatpush1.msra.mxu0 0.0
    %2928 = vmatprep.subr.mxu0 0.0
    %2929 = vmatpush1.msra.mxu0 0.0
    %2930 = vmatprep.subr.mxu0 0.0
    %2931 = vmatpush1.msra.mxu0 0.0
    %2932 = vmatprep.mubr.f32.mxu0 0.0
    %2933 = vmatmul.mubr.f32.gmra.mrb[0].mxu0 %v2845
    %v2934 = vpop.f32.mrb[0].mxu0
    %v2935 = vadd.f32 %v2003, %v2934
    %v2936 = vpop.f32.mrb[0].mxu0
    %2937 = vmatprep.mubr.f32.mxu0 0.0
    %2938 = vmatmul.mubr.f32.gmra.mrb[0].mxu0 %v2848
    %v2939 = vpop.f32.mrb[0].mxu0
    %v2940 = vadd.f32 %v2003, %v2939
    %v2941 = vpop.f32.mrb[0].mxu0
    %2942 = vmatprep.mubr.f32.mxu0 0.0
    %2943 = vmatmul.mubr.f32.gmra.mrb[0].mxu0 %v2851
    %v2944 = vpop.f32.mrb[0].mxu0
    %v2945 = vadd.f32 %v2003, %v2944
    %v2946 = vpop.f32.mrb[0].mxu0
    %2947 = vmatprep.mubr.f32.mxu0 0.0
    %2948 = vmatmul.mubr.f32.gmra.mrb[0].mxu0 %v2854
    %v2949 = vpop.f32.mrb[0].mxu0
    %v2950 = vadd.f32 %v2003, %v2949
    %v2951 = vpop.f32.mrb[0].mxu0
    %2952 = vmatprep.mubr.f32.mxu0 0.0
    %2953 = vmatmul.mubr.f32.gmra.mrb[0].mxu0 %v2857
    %v2954 = vpop.f32.mrb[0].mxu0
    %v2955 = vadd.f32 %v2003, %v2954
    %v2956 = vpop.f32.mrb[0].mxu0
    %2957 = vmatprep.mubr.f32.mxu0 0.0
    %2958 = vmatmul.mubr.f32.gmra.mrb[0].mxu0 %v2860
    %v2959 = vpop.f32.mrb[0].mxu0
    %v2960 = vadd.f32 %v2003, %v2959
    %v2961 = vpop.f32.mrb[0].mxu0
    %2962 = vmatprep.mubr.f32.mxu0 0.0
    %2963 = vmatmul.mubr.f32.gmra.mrb[0].mxu0 %v2863
    %v2964 = vpop.f32.mrb[0].mxu0
    %v2965 = vadd.f32 %v2003, %v2964
    %v2966 = vpop.f32.mrb[0].mxu0
    %2967 = vmatprep.mubr.f32.mxu0 0.0
    %2968 = vmatmul.mubr.f32.gmra.mrb[0].mxu0 %v2866
    %v2969 = vpop.f32.mrb[0].mxu0
    %v2970 = vadd.f32 %v2003, %v2969
    %v2971 = vpop.f32.mrb[0].mxu0
    %2972 = vdwg.mxu0
    %v2973 = vmax.f32 %v2691, %v2935
    %v2974 = vmax.f32 %v2692, %v2940
    %v2975 = vmax.f32 %v2693, %v2945
    %v2976 = vmax.f32 %v2694, %v2950
    %v2977 = vmax.f32 %v2695, %v2955
    %v2978 = vmax.f32 %v2696, %v2960
    %v2979 = vmax.f32 %v2697, %v2965
    %v2980 = vmax.f32 %v2698, %v2970
    %vm2981 = vcmask 261120
    %2982 = vst.msk [vmem:[#allocation2] sm:$0xff] %vm2981, %v2973
    %2983 = vst.msk [vmem:[#allocation2 + $0x8] sm:$0xff] %vm2981, %v2974
    %2984 = vst.msk [vmem:[#allocation2 + $0x10] sm:$0xff] %vm2981, %v2975
    %2985 = vst.msk [vmem:[#allocation2 + $0x18] sm:$0xff] %vm2981, %v2976
    %2986 = vst.msk [vmem:[#allocation2 + $0x20] sm:$0xff] %vm2981, %v2977
    %2987 = vst.msk [vmem:[#allocation2 + $0x28] sm:$0xff] %vm2981, %v2978
    %2988 = vst.msk [vmem:[#allocation2 + $0x30] sm:$0xff] %vm2981, %v2979
    %2989 = vst.msk [vmem:[#allocation2 + $0x38] sm:$0xff] %vm2981, %v2980
    // Predicated region
    $region26: #{tpu_custom_call.1} parent=1 // pred_check
      _
    $region27: #{tpu_custom_call.1} parent=1 // pred_check_branch
      %2991 = sbr.rel (0) target = $region29
    $region28: #{tpu_custom_call.1} parent=1 // pred_region
      %s2993 = ssub.s32 1024, 1024
      %2994 = vsyncadd [#allocation3], %s2993
      %s2995 = sshll.u32 [#allocation2], 4
      %s2996 = int_to_ptr.vmem [resolvable:$true] %s2995
      %3001 = dma.vmem_to_hbm [thread:$0]  %s2996, 1024, %s6, [#allocation3], 128, 128, 8
    $region29: #{tpu_custom_call.1} parent=1 // pred_fallthru
      _
    // Predicated region
    $region30: #{tpu_custom_call.1} parent=1 // pred_check
      _
    $region31: #{tpu_custom_call.1} parent=1 // pred_check_branch
      %3003 = sbr.rel (0) target = $region33
    $region32: #{tpu_custom_call.1} parent=1 // pred_region
      %3004 = dma.done [#allocation3], 1024
    $region33: #{tpu_custom_call.1} parent=1 // pred_fallthru
      _
    %3005 = vsyncpa [#allocation3], 1

</llo_original>
